<compile_context>
chip_gen: v5e
topology: v5e:2x2
jax: 0.10.0
libtpu: 0.0.40
codegen_flags: <defaults>
</compile_context>

<pallas_src>
import math

import jax
import jax.numpy as jnp
from jax import lax
from jax.experimental import pallas as pl
from jax.experimental.pallas import tpu as pltpu

LANE = 128          # pad node/hidden feature dims to 128 (lane-dense)
HEAD_PAD = 256      # pad head hidden dim 200 -> 256


def _leaky(h):
    # LeakyReLU(negative_slope=0.2)
    return jnp.where(h > 0, h, 0.2 * h)


def _pad2(a, rows, cols):
    return jnp.pad(a, ((0, rows - a.shape[0]), (0, cols - a.shape[1])))


def _round_up(v, m):
    return ((v + m - 1) // m) * m


# ---------------------------------------------------------------------------
# Single fused kernel: 3 x GINEConv + global_add_pool + MLP head.
# ---------------------------------------------------------------------------
def fused_graph_classifier_kernel(
        x0_ref, srci_ref, dsti_ref, gidx_ref, ea_ref,
        we_ref, be_ref, w1_ref, b1_ref, w2_ref, b2_ref,
        hw1_ref, hb1_ref, hw2_ref, hb2_ref, hw3_ref, hb3_ref, hw4_ref, hb4_ref,
        out_ref, xcat_ref):
    f32 = jnp.float32
    bf16 = jnp.bfloat16

    N, C = x0_ref.shape          # padded node count, padded feature width (128)
    E = srci_ref.shape[0]        # padded edge count (multiple of 128)
    G = out_ref.shape[0]         # number of graphs

    # ---- Incidence operators rebuilt in-kernel from int32 indices (no [E,N] HBM
    # traffic).  Built ONCE, outside the unrolled layer loop.  Padded edges have
    # dst == N (out of range -> all-zero scatter column); padded nodes have
    # graph-id == G (all-zero pooling column).  Equality one-hots are exact in bf16.
    src = srci_ref[...]                                                   # [E, 1] i32
    dst = dsti_ref[...]                                                   # [1, E] i32
    gid = gidx_ref[...]                                                   # [1, N] i32
    src_oh = (lax.broadcasted_iota(jnp.int32, (E, N), 1) == src).astype(bf16)   # [E, N]
    dstT_oh = (lax.broadcasted_iota(jnp.int32, (N, E), 0) == dst).astype(bf16)  # [N, E]
    pool_oh = (lax.broadcasted_iota(jnp.int32, (G, N), 0) == gid).astype(bf16)  # [G, N]

    # ---- Hoisted edge-attr column broadcasts (shared by all three layers).
    ea = ea_ref[...]                                                      # [E, 3] f32
    ea0 = jnp.broadcast_to(ea[:, 0:1], (E, C))
    ea1 = jnp.broadcast_to(ea[:, 1:2], (E, C))
    ea2 = jnp.broadcast_to(ea[:, 2:3], (E, C))

    x_prev = x0_ref[...]                                                  # [N, C] bf16

    # Three GINEConv layers, unrolled (padded shapes identical across layers).
    for l in range(3):
        # Edge-attr projection Linear(3 -> C) on the VPU as broadcast FMAs
        # (K=3 would waste >97% of an MXU pass).
        we = we_ref[l]                                                    # [3, C] f32
        e = ea0 * we[0:1, :] + ea1 * we[1:2, :] + ea2 * we[2:3, :] + be_ref[l]

        # Gather source-node features:  [E, N] @ [N, C]  (bf16 in, f32 acc).
        x_j = jnp.dot(src_oh, x_prev, preferred_element_type=f32)
        msg = jnp.maximum(x_j + e, 0.0).astype(bf16)                      # relu(x_j + e)

        # Scatter-add to destination nodes:  [N, E] @ [E, C]  (native orientation,
        # no transposed contraction / XLU vxpose).
        aggr = jnp.dot(dstT_oh, msg, preferred_element_type=f32)

        h = aggr + x_prev.astype(f32)                                     # (1+eps)*x_i + aggr, eps=0

        # nn: Linear (BatchNorm pre-folded into w1/b1) -> LeakyReLU -> Linear -> LeakyReLU
        h = jnp.dot(h.astype(bf16), w1_ref[l], preferred_element_type=f32) + b1_ref[l]
        h = _leaky(h)
        h = jnp.dot(h.astype(bf16), w2_ref[l], preferred_element_type=f32) + b2_ref[l]
        h = _leaky(h)

        x_prev = h.astype(bf16)                                           # input to next layer
        xcat_ref[:, l * C:(l + 1) * C] = x_prev                           # aligned 128-wide column write

    # global_add_pool for all three layers in ONE matmul: [G, N] @ [N, 3C] -> [G, 3C]
    pooled = jnp.dot(pool_oh, xcat_ref[...], preferred_element_type=f32)

    # MLP head. Each block is Linear -> LeakyReLU -> Dropout(identity @ eval) -> LeakyReLU,
    # so the double _leaky matches the PyTorch Sequential exactly.
    h = jnp.dot(pooled.astype(bf16), hw1_ref[...], preferred_element_type=f32) + hb1_ref[...]
    h = _leaky(_leaky(h))
    h = jnp.dot(h.astype(bf16), hw2_ref[...], preferred_element_type=f32) + hb2_ref[...]
    h = _leaky(_leaky(h))
    h = jnp.dot(h.astype(bf16), hw3_ref[...], preferred_element_type=f32) + hb3_ref[...]
    h = _leaky(_leaky(h))
    out_ref[...] = jnp.dot(h.astype(bf16), hw4_ref[...],
                           preferred_element_type=f32) + hb4_ref[...]


def graph_classifier_forward(x, edge_index, edge_attr, batch, num_graphs, params):
    C = params["C"]
    N = x.shape[0]
    E = edge_index.shape[1]

    N_pad = _round_up(N, 8)
    # MXU-aligned edge block (128 matches v5e natively; for real sizes on v6e/v7x use
    # 256-multiples once an E-tiled grid is introduced -- see TODO at top of file).
    E_pad = _round_up(E, 128)

    # int32 index vectors only -- no dense one-hots in HBM.  Out-of-range sentinels
    # (N_pad for padded edges, num_graphs for padded nodes) make padding contribute 0.
    src_idx = jnp.full((E_pad, 1), N_pad, jnp.int32).at[:E, 0].set(edge_index[0].astype(jnp.int32))
    dst_idx = jnp.full((1, E_pad), N_pad, jnp.int32).at[0, :E].set(edge_index[1].astype(jnp.int32))
    gid_idx = jnp.full((1, N_pad), num_graphs, jnp.int32).at[0, :N].set(batch.astype(jnp.int32))

    x0 = _pad2(x, N_pad, C).astype(jnp.bfloat16)                          # [N_pad, C]
    ea = _pad2(edge_attr.astype(jnp.float32), E_pad, 3)                   # [E_pad, 3]

    args = (x0, src_idx, dst_idx, gid_idx, ea,
            params["we"], params["be"], params["w1"], params["b1"],
            params["w2"], params["b2"],
            params["hw1"], params["hb1"], params["hw2"], params["hb2"],
            params["hw3"], params["hb3"], params["hw4"], params["hb4"])

    out_cols = params["hw4"].shape[1]
    out_shape = jax.ShapeDtypeStruct((num_graphs, out_cols), jnp.float32)

    # Per-review: size the VMEM budget from the real footprint instead of pinning the
    # full v7x physical VMEM (64 MiB).  48 MiB ceiling is safe on v5e/v6e/v7x.
    footprint = sum(int(a.size) * a.dtype.itemsize for a in args)
    footprint += num_graphs * out_cols * 4                                # output
    footprint += N_pad * 3 * C * 2                                        # xcat scratch (bf16)
    vmem_limit = int(min(max(4 * footprint, 16 << 20), 48 << 20))

    vmem = pl.BlockSpec(memory_space=pltpu.MemorySpace.VMEM)
    out_pad = pl.pallas_call(
        fused_graph_classifier_kernel,
        out_shape=out_shape,
        in_specs=[vmem] * len(args),
        out_specs=vmem,
        scratch_shapes=[pltpu.VMEM((N_pad, 3 * C), jnp.bfloat16)],        # x1|x2|x3 resident buffer
        compiler_params=pltpu.CompilerParams(vmem_limit_bytes=vmem_limit),
    )(*args)
    return out_pad[:, :params["output_dim"]]


# ---------------------------------------------------------------------------
# Deterministic parameter initialization (xavier-uniform weights, as in __init__),
# padded lane-dense, BatchNorm (eval) pre-folded into w1/b1, pre-packed for the kernel.
# ---------------------------------------------------------------------------
def xavier_uniform(key, fan_in, fan_out):
    bound = (6.0 / (fan_in + fan_out)) ** 0.5
    return jax.random.uniform(key, (fan_in, fan_out), jnp.float32, -bound, bound)


def make_params(key, input_dim, hidden_dim, output_dim, C=LANE, HP=HEAD_PAD, OP=LANE):
    ks = iter(jax.random.split(key, 32))

    we_l, be_l, w1_l, b1_l, w2_l, b2_l = ([] for _ in range(6))
    for l in range(3):
        in_dim = input_dim if l == 0 else hidden_dim
        we = xavier_uniform(next(ks), 3, in_dim)                           # edge lin: 3 -> in_dim
        be = 0.01 * jax.random.normal(next(ks), (1, in_dim), jnp.float32)
        w1 = xavier_uniform(next(ks), in_dim, hidden_dim)
        b1 = 0.01 * jax.random.normal(next(ks), (1, hidden_dim), jnp.float32)

        # BatchNorm1d eval-mode running stats, folded directly into w1/b1 (review item).
        g = jnp.ones((1, hidden_dim), jnp.float32)
        beta = jnp.zeros((1, hidden_dim), jnp.float32)
        mu = jnp.zeros((1, hidden_dim), jnp.float32)
        var = jnp.ones((1, hidden_dim), jnp.float32)
        scale = g * lax.rsqrt(var + 1e-5)
        shift = beta - mu * scale
        w1f = w1 * scale                                                   # column-wise fold
        b1f = b1 * scale + shift

        w2 = xavier_uniform(next(ks), hidden_dim, hidden_dim)
        b2 = 0.01 * jax.random.normal(next(ks), (1, hidden_dim), jnp.float32)

        we_l.append(_pad2(we, 3, C))
        be_l.append(_pad2(be, 1, C))
        w1_l.append(_pad2(w1f, C, C).astype(jnp.bfloat16))
        b1_l.append(_pad2(b1f, 1, C))
        w2_l.append(_pad2(w2, C, C).astype(jnp.bfloat16))
        b2_l.append(_pad2(b2, 1, C))

    # MLP head: Linear(3H, 200) -> ... -> Linear(200, output_dim), padded lane-dense,
    # with the 3H input rows re-laid-out to match the [x1|x2|x3] padded concatenation.
    hw1_raw = xavier_uniform(next(ks), 3 * hidden_dim, 200)
    hw1 = jnp.zeros((3 * C, HP), jnp.float32)
    for l in range(3):
        hw1 = hw1.at[l * C:l * C + hidden_dim, :200].set(
            hw1_raw[l * hidden_dim:(l + 1) * hidden_dim])
    hb1 = _pad2(0.01 * jax.random.normal(next(ks), (1, 200), jnp.float32), 1, HP)
    hw2 = _pad2(xavier_uniform(next(ks), 200, 200), HP, HP)
    hb2 = _pad2(0.01 * jax.random.normal(next(ks), (1, 200), jnp.float32), 1, HP)
    hw3 = _pad2(xavier_uniform(next(ks), 200, 200), HP, HP)
    hb3 = _pad2(0.01 * jax.random.normal(next(ks), (1, 200), jnp.float32), 1, HP)
    hw4 = _pad2(xavier_uniform(next(ks), 200, output_dim), HP, OP)
    hb4 = _pad2(0.01 * jax.random.normal(next(ks), (1, output_dim), jnp.float32), 1, OP)

    return {
        "C": C, "output_dim": output_dim,
        "we": jnp.stack(we_l), "be": jnp.stack(be_l),
        "w1": jnp.stack(w1_l), "b1": jnp.stack(b1_l),
        "w2": jnp.stack(w2_l), "b2": jnp.stack(b2_l),
        "hw1": hw1.astype(jnp.bfloat16), "hb1": hb1,
        "hw2": hw2.astype(jnp.bfloat16), "hb2": hb2,
        "hw3": hw3.astype(jnp.bfloat16), "hb3": hb3,
        "hw4": hw4.astype(jnp.bfloat16), "hb4": hb4,
    }


if __name__ == "__main__":
    key = jax.random.PRNGKey(0)
    ks = jax.random.split(key, 8)

    # Small synthetic graph batch: 2 graphs, 16 nodes total, 48 directed edges.
    # (For real workloads, batch many graphs per call -- per-call overhead dominates
    # at these sizes.)
    N, E, G = 16, 48, 2
    input_dim, hidden_dim, output_dim = 8, 32, 4

    x = jax.random.normal(ks[0], (N, input_dim), jnp.float32)
    edge_src = jax.random.randint(ks[1], (E,), 0, N)
    edge_dst = jax.random.randint(ks[2], (E,), 0, N)
    edge_index = jnp.stack([edge_src, edge_dst], axis=0)                   # [2, E]
    edge_attr = jax.random.normal(ks[3], (E, 3), jnp.float32)
    batch = jnp.concatenate([jnp.zeros(N // 2, jnp.int32),
                             jnp.ones(N - N // 2, jnp.int32)])             # node -> graph id

    params = make_params(ks[4], input_dim, hidden_dim, output_dim)

    out = graph_classifier_forward(x, edge_index, edge_attr, batch, G, params)
    jax.block_until_ready(out)
    assert out.shape == (G, output_dim)
    print("KERNEL_OK")
</pallas_src>

<mosaic_0001>
module attributes {stable_mosaic.version = 11 : i64} {
  func.func @fused_graph_classifier_kernel(%arg0: memref<16x128xbf16, #tpu.memory_space<vmem>>, %arg1: memref<128x1xi32, #tpu.memory_space<vmem>>, %arg2: memref<1x128xi32, #tpu.memory_space<vmem>>, %arg3: memref<1x16xi32, #tpu.memory_space<vmem>>, %arg4: memref<128x3xf32, #tpu.memory_space<vmem>>, %arg5: memref<3x3x128xf32, #tpu.memory_space<vmem>>, %arg6: memref<3x1x128xf32, #tpu.memory_space<vmem>>, %arg7: memref<3x128x128xbf16, #tpu.memory_space<vmem>>, %arg8: memref<3x1x128xf32, #tpu.memory_space<vmem>>, %arg9: memref<3x128x128xbf16, #tpu.memory_space<vmem>>, %arg10: memref<3x1x128xf32, #tpu.memory_space<vmem>>, %arg11: memref<384x256xbf16, #tpu.memory_space<vmem>>, %arg12: memref<1x256xf32, #tpu.memory_space<vmem>>, %arg13: memref<256x256xbf16, #tpu.memory_space<vmem>>, %arg14: memref<1x256xf32, #tpu.memory_space<vmem>>, %arg15: memref<256x256xbf16, #tpu.memory_space<vmem>>, %arg16: memref<1x256xf32, #tpu.memory_space<vmem>>, %arg17: memref<256x128xbf16, #tpu.memory_space<vmem>>, %arg18: memref<1x128xf32, #tpu.memory_space<vmem>>, %arg19: memref<2x128xf32, #tpu.memory_space<vmem>>, %arg20: memref<16x384xbf16, #tpu.memory_space<vmem>>) attributes {dimension_semantics = [], scalar_prefetch = 0 : i64, scratch_operands = 1 : i64, tpu.core_type = #tpu.core_type<tc>} {
    %c0 = arith.constant 0 : index
    %c0_0 = arith.constant 0 : index
    %0 = vector.load %arg1[%c0, %c0_0] : memref<128x1xi32, #tpu.memory_space<vmem>>, vector<128x1xi32>
    %c0_1 = arith.constant 0 : index
    %c0_2 = arith.constant 0 : index
    %1 = vector.load %arg2[%c0_1, %c0_2] : memref<1x128xi32, #tpu.memory_space<vmem>>, vector<1x128xi32>
    %c0_3 = arith.constant 0 : index
    %c0_4 = arith.constant 0 : index
    %2 = vector.load %arg3[%c0_3, %c0_4] : memref<1x16xi32, #tpu.memory_space<vmem>>, vector<1x16xi32>
    %3 = tpu.iota {dimensions = array<i32: 1>} : vector<128x16xi32>
    %4 = vector.broadcast %0 : vector<128x1xi32> to vector<128x16xi32>
    %5 = arith.cmpi eq, %3, %4 : vector<128x16xi32>
    %6 = arith.extui %5 : vector<128x16xi1> to vector<128x16xi32>
    %7 = arith.sitofp %6 : vector<128x16xi32> to vector<128x16xf32>
    %8 = arith.truncf %7 : vector<128x16xf32> to vector<128x16xbf16>
    %9 = tpu.iota {dimensions = array<i32: 0>} : vector<16x128xi32>
    %10 = vector.broadcast %1 : vector<1x128xi32> to vector<16x128xi32>
    %11 = arith.cmpi eq, %9, %10 : vector<16x128xi32>
    %12 = arith.extui %11 : vector<16x128xi1> to vector<16x128xi32>
    %13 = arith.sitofp %12 : vector<16x128xi32> to vector<16x128xf32>
    %14 = arith.truncf %13 : vector<16x128xf32> to vector<16x128xbf16>
    %15 = tpu.iota {dimensions = array<i32: 0>} : vector<2x16xi32>
    %16 = vector.broadcast %2 : vector<1x16xi32> to vector<2x16xi32>
    %17 = arith.cmpi eq, %15, %16 : vector<2x16xi32>
    %18 = arith.extui %17 : vector<2x16xi1> to vector<2x16xi32>
    %19 = arith.sitofp %18 : vector<2x16xi32> to vector<2x16xf32>
    %20 = arith.truncf %19 : vector<2x16xf32> to vector<2x16xbf16>
    %c0_5 = arith.constant 0 : index
    %c0_6 = arith.constant 0 : index
    %21 = vector.load %arg4[%c0_5, %c0_6] : memref<128x3xf32, #tpu.memory_space<vmem>>, vector<128x3xf32>
    %22 = vector.extract_strided_slice %21 {offsets = [0, 0], sizes = [128, 1], strides = [1, 1]} : vector<128x3xf32> to vector<128x1xf32>
    %23 = vector.shape_cast %22 : vector<128x1xf32> to vector<128x1xf32>
    %24 = vector.broadcast %23 : vector<128x1xf32> to vector<128x128xf32>
    %25 = vector.extract_strided_slice %21 {offsets = [0, 1], sizes = [128, 1], strides = [1, 1]} : vector<128x3xf32> to vector<128x1xf32>
    %26 = vector.shape_cast %25 : vector<128x1xf32> to vector<128x1xf32>
    %27 = vector.broadcast %26 : vector<128x1xf32> to vector<128x128xf32>
    %28 = vector.extract_strided_slice %21 {offsets = [0, 2], sizes = [128, 1], strides = [1, 1]} : vector<128x3xf32> to vector<128x1xf32>
    %29 = vector.shape_cast %28 : vector<128x1xf32> to vector<128x1xf32>
    %30 = vector.broadcast %29 : vector<128x1xf32> to vector<128x128xf32>
    %c0_7 = arith.constant 0 : index
    %c0_8 = arith.constant 0 : index
    %31 = vector.load %arg0[%c0_7, %c0_8] : memref<16x128xbf16, #tpu.memory_space<vmem>>, vector<16x128xbf16>
    %c0_9 = arith.constant 0 : index
    %c0_10 = arith.constant 0 : index
    %c0_11 = arith.constant 0 : index
    %32 = vector.load %arg5[%c0_9, %c0_10, %c0_11] : memref<3x3x128xf32, #tpu.memory_space<vmem>>, vector<1x3x128xf32>
    %33 = vector.shape_cast %32 : vector<1x3x128xf32> to vector<3x128xf32>
    %34 = vector.extract_strided_slice %33 {offsets = [0, 0], sizes = [1, 128], strides = [1, 1]} : vector<3x128xf32> to vector<1x128xf32>
    %35 = vector.broadcast %34 : vector<1x128xf32> to vector<128x128xf32>
    %36 = arith.mulf %24, %35 : vector<128x128xf32>
    %37 = vector.extract_strided_slice %33 {offsets = [1, 0], sizes = [1, 128], strides = [1, 1]} : vector<3x128xf32> to vector<1x128xf32>
    %38 = vector.broadcast %37 : vector<1x128xf32> to vector<128x128xf32>
    %39 = arith.mulf %27, %38 : vector<128x128xf32>
    %40 = arith.addf %36, %39 : vector<128x128xf32>
    %41 = vector.extract_strided_slice %33 {offsets = [2, 0], sizes = [1, 128], strides = [1, 1]} : vector<3x128xf32> to vector<1x128xf32>
    %42 = vector.broadcast %41 : vector<1x128xf32> to vector<128x128xf32>
    %43 = arith.mulf %30, %42 : vector<128x128xf32>
    %44 = arith.addf %40, %43 : vector<128x128xf32>
    %c0_12 = arith.constant 0 : index
    %c0_13 = arith.constant 0 : index
    %c0_14 = arith.constant 0 : index
    %45 = vector.load %arg6[%c0_12, %c0_13, %c0_14] : memref<3x1x128xf32, #tpu.memory_space<vmem>>, vector<1x1x128xf32>
    %46 = vector.shape_cast %45 : vector<1x1x128xf32> to vector<1x128xf32>
    %47 = vector.broadcast %46 : vector<1x128xf32> to vector<128x128xf32>
    %48 = arith.addf %44, %47 : vector<128x128xf32>
    %cst = arith.constant dense<0.000000e+00> : vector<128x128xf32>
    %49 = tpu.matmul %8, %31, %cst {dimension_numbers = #tpu.dot_dimension_numbers<[1], [0], [0], [1], [0, 0, 1, 1], [], []>} : vector<128x16xbf16>, vector<16x128xbf16>, vector<128x128xf32> -> vector<128x128xf32>
    %50 = arith.addf %49, %48 : vector<128x128xf32>
    %cst_15 = arith.constant 0.000000e+00 : f32
    %51 = vector.broadcast %cst_15 : f32 to vector<128x128xf32>
    %52 = arith.maximumf %50, %51 : vector<128x128xf32>
    %53 = arith.truncf %52 : vector<128x128xf32> to vector<128x128xbf16>
    %cst_16 = arith.constant dense<0.000000e+00> : vector<16x128xf32>
    %54 = tpu.matmul %14, %53, %cst_16 {dimension_numbers = #tpu.dot_dimension_numbers<[1], [0], [0], [1], [0, 0, 1, 1], [], []>} : vector<16x128xbf16>, vector<128x128xbf16>, vector<16x128xf32> -> vector<16x128xf32>
    %55 = arith.extf %31 : vector<16x128xbf16> to vector<16x128xf32>
    %56 = arith.addf %54, %55 : vector<16x128xf32>
    %57 = arith.truncf %56 : vector<16x128xf32> to vector<16x128xbf16>
    %c0_17 = arith.constant 0 : index
    %c0_18 = arith.constant 0 : index
    %c0_19 = arith.constant 0 : index
    %58 = vector.load %arg7[%c0_17, %c0_18, %c0_19] : memref<3x128x128xbf16, #tpu.memory_space<vmem>>, vector<1x128x128xbf16>
    %59 = vector.shape_cast %58 : vector<1x128x128xbf16> to vector<128x128xbf16>
    %cst_20 = arith.constant dense<0.000000e+00> : vector<16x128xf32>
    %60 = tpu.matmul %57, %59, %cst_20 {dimension_numbers = #tpu.dot_dimension_numbers<[1], [0], [0], [1], [0, 0, 1, 1], [], []>} : vector<16x128xbf16>, vector<128x128xbf16>, vector<16x128xf32> -> vector<16x128xf32>
    %c0_21 = arith.constant 0 : index
    %c0_22 = arith.constant 0 : index
    %c0_23 = arith.constant 0 : index
    %61 = vector.load %arg8[%c0_21, %c0_22, %c0_23] : memref<3x1x128xf32, #tpu.memory_space<vmem>>, vector<1x1x128xf32>
    %62 = vector.shape_cast %61 : vector<1x1x128xf32> to vector<1x128xf32>
    %63 = vector.broadcast %62 : vector<1x128xf32> to vector<16x128xf32>
    %64 = arith.addf %60, %63 : vector<16x128xf32>
    %cst_24 = arith.constant 0.000000e+00 : f32
    %65 = vector.broadcast %cst_24 : f32 to vector<16x128xf32>
    %66 = arith.cmpf ogt, %64, %65 : vector<16x128xf32>
    %cst_25 = arith.constant 2.000000e-01 : f32
    %67 = vector.broadcast %cst_25 : f32 to vector<16x128xf32>
    %68 = arith.mulf %67, %64 : vector<16x128xf32>
    %69 = arith.select %66, %64, %68 : vector<16x128xi1>, vector<16x128xf32>
    %70 = arith.truncf %69 : vector<16x128xf32> to vector<16x128xbf16>
    %c0_26 = arith.constant 0 : index
    %c0_27 = arith.constant 0 : index
    %c0_28 = arith.constant 0 : index
    %71 = vector.load %arg9[%c0_26, %c0_27, %c0_28] : memref<3x128x128xbf16, #tpu.memory_space<vmem>>, vector<1x128x128xbf16>
    %72 = vector.shape_cast %71 : vector<1x128x128xbf16> to vector<128x128xbf16>
    %cst_29 = arith.constant dense<0.000000e+00> : vector<16x128xf32>
    %73 = tpu.matmul %70, %72, %cst_29 {dimension_numbers = #tpu.dot_dimension_numbers<[1], [0], [0], [1], [0, 0, 1, 1], [], []>} : vector<16x128xbf16>, vector<128x128xbf16>, vector<16x128xf32> -> vector<16x128xf32>
    %c0_30 = arith.constant 0 : index
    %c0_31 = arith.constant 0 : index
    %c0_32 = arith.constant 0 : index
    %74 = vector.load %arg10[%c0_30, %c0_31, %c0_32] : memref<3x1x128xf32, #tpu.memory_space<vmem>>, vector<1x1x128xf32>
    %75 = vector.shape_cast %74 : vector<1x1x128xf32> to vector<1x128xf32>
    %76 = vector.broadcast %75 : vector<1x128xf32> to vector<16x128xf32>
    %77 = arith.addf %73, %76 : vector<16x128xf32>
    %cst_33 = arith.constant 0.000000e+00 : f32
    %78 = vector.broadcast %cst_33 : f32 to vector<16x128xf32>
    %79 = arith.cmpf ogt, %77, %78 : vector<16x128xf32>
    %cst_34 = arith.constant 2.000000e-01 : f32
    %80 = vector.broadcast %cst_34 : f32 to vector<16x128xf32>
    %81 = arith.mulf %80, %77 : vector<16x128xf32>
    %82 = arith.select %79, %77, %81 : vector<16x128xi1>, vector<16x128xf32>
    %83 = arith.truncf %82 : vector<16x128xf32> to vector<16x128xbf16>
    %c0_35 = arith.constant 0 : index
    %c0_36 = arith.constant 0 : index
    %84 = vector.load %arg20[%c0_35, %c0_36] : memref<16x384xbf16, #tpu.memory_space<vmem>>, vector<16x128xbf16>
    tpu.vector_store %arg20[%c0_35, %c0_36], %83 {strides = array<i32>} : memref<16x384xbf16, #tpu.memory_space<vmem>>, vector<16x128xbf16>,
    %c1 = arith.constant 1 : index
    %c0_37 = arith.constant 0 : index
    %c0_38 = arith.constant 0 : index
    %85 = vector.load %arg5[%c1, %c0_37, %c0_38] : memref<3x3x128xf32, #tpu.memory_space<vmem>>, vector<1x3x128xf32>
    %86 = vector.shape_cast %85 : vector<1x3x128xf32> to vector<3x128xf32>
    %87 = vector.extract_strided_slice %86 {offsets = [0, 0], sizes = [1, 128], strides = [1, 1]} : vector<3x128xf32> to vector<1x128xf32>
    %88 = vector.broadcast %87 : vector<1x128xf32> to vector<128x128xf32>
    %89 = arith.mulf %24, %88 : vector<128x128xf32>
    %90 = vector.extract_strided_slice %86 {offsets = [1, 0], sizes = [1, 128], strides = [1, 1]} : vector<3x128xf32> to vector<1x128xf32>
    %91 = vector.broadcast %90 : vector<1x128xf32> to vector<128x128xf32>
    %92 = arith.mulf %27, %91 : vector<128x128xf32>
    %93 = arith.addf %89, %92 : vector<128x128xf32>
    %94 = vector.extract_strided_slice %86 {offsets = [2, 0], sizes = [1, 128], strides = [1, 1]} : vector<3x128xf32> to vector<1x128xf32>
    %95 = vector.broadcast %94 : vector<1x128xf32> to vector<128x128xf32>
    %96 = arith.mulf %30, %95 : vector<128x128xf32>
    %97 = arith.addf %93, %96 : vector<128x128xf32>
    %c1_39 = arith.constant 1 : index
    %c0_40 = arith.constant 0 : index
    %c0_41 = arith.constant 0 : index
    %98 = vector.load %arg6[%c1_39, %c0_40, %c0_41] : memref<3x1x128xf32, #tpu.memory_space<vmem>>, vector<1x1x128xf32>
    %99 = vector.shape_cast %98 : vector<1x1x128xf32> to vector<1x128xf32>
    %100 = vector.broadcast %99 : vector<1x128xf32> to vector<128x128xf32>
    %101 = arith.addf %97, %100 : vector<128x128xf32>
    %cst_42 = arith.constant dense<0.000000e+00> : vector<128x128xf32>
    %102 = tpu.matmul %8, %83, %cst_42 {dimension_numbers = #tpu.dot_dimension_numbers<[1], [0], [0], [1], [0, 0, 1, 1], [], []>} : vector<128x16xbf16>, vector<16x128xbf16>, vector<128x128xf32> -> vector<128x128xf32>
    %103 = arith.addf %102, %101 : vector<128x128xf32>
    %cst_43 = arith.constant 0.000000e+00 : f32
    %104 = vector.broadcast %cst_43 : f32 to vector<128x128xf32>
    %105 = arith.maximumf %103, %104 : vector<128x128xf32>
    %106 = arith.truncf %105 : vector<128x128xf32> to vector<128x128xbf16>
    %cst_44 = arith.constant dense<0.000000e+00> : vector<16x128xf32>
    %107 = tpu.matmul %14, %106, %cst_44 {dimension_numbers = #tpu.dot_dimension_numbers<[1], [0], [0], [1], [0, 0, 1, 1], [], []>} : vector<16x128xbf16>, vector<128x128xbf16>, vector<16x128xf32> -> vector<16x128xf32>
    %108 = arith.extf %83 : vector<16x128xbf16> to vector<16x128xf32>
    %109 = arith.addf %107, %108 : vector<16x128xf32>
    %110 = arith.truncf %109 : vector<16x128xf32> to vector<16x128xbf16>
    %c1_45 = arith.constant 1 : index
    %c0_46 = arith.constant 0 : index
    %c0_47 = arith.constant 0 : index
    %111 = vector.load %arg7[%c1_45, %c0_46, %c0_47] : memref<3x128x128xbf16, #tpu.memory_space<vmem>>, vector<1x128x128xbf16>
    %112 = vector.shape_cast %111 : vector<1x128x128xbf16> to vector<128x128xbf16>
    %cst_48 = arith.constant dense<0.000000e+00> : vector<16x128xf32>
    %113 = tpu.matmul %110, %112, %cst_48 {dimension_numbers = #tpu.dot_dimension_numbers<[1], [0], [0], [1], [0, 0, 1, 1], [], []>} : vector<16x128xbf16>, vector<128x128xbf16>, vector<16x128xf32> -> vector<16x128xf32>
    %c1_49 = arith.constant 1 : index
    %c0_50 = arith.constant 0 : index
    %c0_51 = arith.constant 0 : index
    %114 = vector.load %arg8[%c1_49, %c0_50, %c0_51] : memref<3x1x128xf32, #tpu.memory_space<vmem>>, vector<1x1x128xf32>
    %115 = vector.shape_cast %114 : vector<1x1x128xf32> to vector<1x128xf32>
    %116 = vector.broadcast %115 : vector<1x128xf32> to vector<16x128xf32>
    %117 = arith.addf %113, %116 : vector<16x128xf32>
    %cst_52 = arith.constant 0.000000e+00 : f32
    %118 = vector.broadcast %cst_52 : f32 to vector<16x128xf32>
    %119 = arith.cmpf ogt, %117, %118 : vector<16x128xf32>
    %cst_53 = arith.constant 2.000000e-01 : f32
    %120 = vector.broadcast %cst_53 : f32 to vector<16x128xf32>
    %121 = arith.mulf %120, %117 : vector<16x128xf32>
    %122 = arith.select %119, %117, %121 : vector<16x128xi1>, vector<16x128xf32>
    %123 = arith.truncf %122 : vector<16x128xf32> to vector<16x128xbf16>
    %c1_54 = arith.constant 1 : index
    %c0_55 = arith.constant 0 : index
    %c0_56 = arith.constant 0 : index
    %124 = vector.load %arg9[%c1_54, %c0_55, %c0_56] : memref<3x128x128xbf16, #tpu.memory_space<vmem>>, vector<1x128x128xbf16>
    %125 = vector.shape_cast %124 : vector<1x128x128xbf16> to vector<128x128xbf16>
    %cst_57 = arith.constant dense<0.000000e+00> : vector<16x128xf32>
    %126 = tpu.matmul %123, %125, %cst_57 {dimension_numbers = #tpu.dot_dimension_numbers<[1], [0], [0], [1], [0, 0, 1, 1], [], []>} : vector<16x128xbf16>, vector<128x128xbf16>, vector<16x128xf32> -> vector<16x128xf32>
    %c1_58 = arith.constant 1 : index
    %c0_59 = arith.constant 0 : index
    %c0_60 = arith.constant 0 : index
    %127 = vector.load %arg10[%c1_58, %c0_59, %c0_60] : memref<3x1x128xf32, #tpu.memory_space<vmem>>, vector<1x1x128xf32>
    %128 = vector.shape_cast %127 : vector<1x1x128xf32> to vector<1x128xf32>
    %129 = vector.broadcast %128 : vector<1x128xf32> to vector<16x128xf32>
    %130 = arith.addf %126, %129 : vector<16x128xf32>
    %cst_61 = arith.constant 0.000000e+00 : f32
    %131 = vector.broadcast %cst_61 : f32 to vector<16x128xf32>
    %132 = arith.cmpf ogt, %130, %131 : vector<16x128xf32>
    %cst_62 = arith.constant 2.000000e-01 : f32
    %133 = vector.broadcast %cst_62 : f32 to vector<16x128xf32>
    %134 = arith.mulf %133, %130 : vector<16x128xf32>
    %135 = arith.select %132, %130, %134 : vector<16x128xi1>, vector<16x128xf32>
    %136 = arith.truncf %135 : vector<16x128xf32> to vector<16x128xbf16>
    %c0_63 = arith.constant 0 : index
    %c128 = arith.constant 128 : index
    %137 = vector.load %arg20[%c0_63, %c128] : memref<16x384xbf16, #tpu.memory_space<vmem>>, vector<16x128xbf16>
    tpu.vector_store %arg20[%c0_63, %c128], %136 {strides = array<i32>} : memref<16x384xbf16, #tpu.memory_space<vmem>>, vector<16x128xbf16>,
    %c2 = arith.constant 2 : index
    %c0_64 = arith.constant 0 : index
    %c0_65 = arith.constant 0 : index
    %138 = vector.load %arg5[%c2, %c0_64, %c0_65] : memref<3x3x128xf32, #tpu.memory_space<vmem>>, vector<1x3x128xf32>
    %139 = vector.shape_cast %138 : vector<1x3x128xf32> to vector<3x128xf32>
    %140 = vector.extract_strided_slice %139 {offsets = [0, 0], sizes = [1, 128], strides = [1, 1]} : vector<3x128xf32> to vector<1x128xf32>
    %141 = vector.broadcast %140 : vector<1x128xf32> to vector<128x128xf32>
    %142 = arith.mulf %24, %141 : vector<128x128xf32>
    %143 = vector.extract_strided_slice %139 {offsets = [1, 0], sizes = [1, 128], strides = [1, 1]} : vector<3x128xf32> to vector<1x128xf32>
    %144 = vector.broadcast %143 : vector<1x128xf32> to vector<128x128xf32>
    %145 = arith.mulf %27, %144 : vector<128x128xf32>
    %146 = arith.addf %142, %145 : vector<128x128xf32>
    %147 = vector.extract_strided_slice %139 {offsets = [2, 0], sizes = [1, 128], strides = [1, 1]} : vector<3x128xf32> to vector<1x128xf32>
    %148 = vector.broadcast %147 : vector<1x128xf32> to vector<128x128xf32>
    %149 = arith.mulf %30, %148 : vector<128x128xf32>
    %150 = arith.addf %146, %149 : vector<128x128xf32>
    %c2_66 = arith.constant 2 : index
    %c0_67 = arith.constant 0 : index
    %c0_68 = arith.constant 0 : index
    %151 = vector.load %arg6[%c2_66, %c0_67, %c0_68] : memref<3x1x128xf32, #tpu.memory_space<vmem>>, vector<1x1x128xf32>
    %152 = vector.shape_cast %151 : vector<1x1x128xf32> to vector<1x128xf32>
    %153 = vector.broadcast %152 : vector<1x128xf32> to vector<128x128xf32>
    %154 = arith.addf %150, %153 : vector<128x128xf32>
    %cst_69 = arith.constant dense<0.000000e+00> : vector<128x128xf32>
    %155 = tpu.matmul %8, %136, %cst_69 {dimension_numbers = #tpu.dot_dimension_numbers<[1], [0], [0], [1], [0, 0, 1, 1], [], []>} : vector<128x16xbf16>, vector<16x128xbf16>, vector<128x128xf32> -> vector<128x128xf32>
    %156 = arith.addf %155, %154 : vector<128x128xf32>
    %cst_70 = arith.constant 0.000000e+00 : f32
    %157 = vector.broadcast %cst_70 : f32 to vector<128x128xf32>
    %158 = arith.maximumf %156, %157 : vector<128x128xf32>
    %159 = arith.truncf %158 : vector<128x128xf32> to vector<128x128xbf16>
    %cst_71 = arith.constant dense<0.000000e+00> : vector<16x128xf32>
    %160 = tpu.matmul %14, %159, %cst_71 {dimension_numbers = #tpu.dot_dimension_numbers<[1], [0], [0], [1], [0, 0, 1, 1], [], []>} : vector<16x128xbf16>, vector<128x128xbf16>, vector<16x128xf32> -> vector<16x128xf32>
    %161 = arith.extf %136 : vector<16x128xbf16> to vector<16x128xf32>
    %162 = arith.addf %160, %161 : vector<16x128xf32>
    %163 = arith.truncf %162 : vector<16x128xf32> to vector<16x128xbf16>
    %c2_72 = arith.constant 2 : index
    %c0_73 = arith.constant 0 : index
    %c0_74 = arith.constant 0 : index
    %164 = vector.load %arg7[%c2_72, %c0_73, %c0_74] : memref<3x128x128xbf16, #tpu.memory_space<vmem>>, vector<1x128x128xbf16>
    %165 = vector.shape_cast %164 : vector<1x128x128xbf16> to vector<128x128xbf16>
    %cst_75 = arith.constant dense<0.000000e+00> : vector<16x128xf32>
    %166 = tpu.matmul %163, %165, %cst_75 {dimension_numbers = #tpu.dot_dimension_numbers<[1], [0], [0], [1], [0, 0, 1, 1], [], []>} : vector<16x128xbf16>, vector<128x128xbf16>, vector<16x128xf32> -> vector<16x128xf32>
    %c2_76 = arith.constant 2 : index
    %c0_77 = arith.constant 0 : index
    %c0_78 = arith.constant 0 : index
    %167 = vector.load %arg8[%c2_76, %c0_77, %c0_78] : memref<3x1x128xf32, #tpu.memory_space<vmem>>, vector<1x1x128xf32>
    %168 = vector.shape_cast %167 : vector<1x1x128xf32> to vector<1x128xf32>
    %169 = vector.broadcast %168 : vector<1x128xf32> to vector<16x128xf32>
    %170 = arith.addf %166, %169 : vector<16x128xf32>
    %cst_79 = arith.constant 0.000000e+00 : f32
    %171 = vector.broadcast %cst_79 : f32 to vector<16x128xf32>
    %172 = arith.cmpf ogt, %170, %171 : vector<16x128xf32>
    %cst_80 = arith.constant 2.000000e-01 : f32
    %173 = vector.broadcast %cst_80 : f32 to vector<16x128xf32>
    %174 = arith.mulf %173, %170 : vector<16x128xf32>
    %175 = arith.select %172, %170, %174 : vector<16x128xi1>, vector<16x128xf32>
    %176 = arith.truncf %175 : vector<16x128xf32> to vector<16x128xbf16>
    %c2_81 = arith.constant 2 : index
    %c0_82 = arith.constant 0 : index
    %c0_83 = arith.constant 0 : index
    %177 = vector.load %arg9[%c2_81, %c0_82, %c0_83] : memref<3x128x128xbf16, #tpu.memory_space<vmem>>, vector<1x128x128xbf16>
    %178 = vector.shape_cast %177 : vector<1x128x128xbf16> to vector<128x128xbf16>
    %cst_84 = arith.constant dense<0.000000e+00> : vector<16x128xf32>
    %179 = tpu.matmul %176, %178, %cst_84 {dimension_numbers = #tpu.dot_dimension_numbers<[1], [0], [0], [1], [0, 0, 1, 1], [], []>} : vector<16x128xbf16>, vector<128x128xbf16>, vector<16x128xf32> -> vector<16x128xf32>
    %c2_85 = arith.constant 2 : index
    %c0_86 = arith.constant 0 : index
    %c0_87 = arith.constant 0 : index
    %180 = vector.load %arg10[%c2_85, %c0_86, %c0_87] : memref<3x1x128xf32, #tpu.memory_space<vmem>>, vector<1x1x128xf32>
    %181 = vector.shape_cast %180 : vector<1x1x128xf32> to vector<1x128xf32>
    %182 = vector.broadcast %181 : vector<1x128xf32> to vector<16x128xf32>
    %183 = arith.addf %179, %182 : vector<16x128xf32>
    %cst_88 = arith.constant 0.000000e+00 : f32
    %184 = vector.broadcast %cst_88 : f32 to vector<16x128xf32>
    %185 = arith.cmpf ogt, %183, %184 : vector<16x128xf32>
    %cst_89 = arith.constant 2.000000e-01 : f32
    %186 = vector.broadcast %cst_89 : f32 to vector<16x128xf32>
    %187 = arith.mulf %186, %183 : vector<16x128xf32>
    %188 = arith.select %185, %183, %187 : vector<16x128xi1>, vector<16x128xf32>
    %189 = arith.truncf %188 : vector<16x128xf32> to vector<16x128xbf16>
    %c0_90 = arith.constant 0 : index
    %c256 = arith.constant 256 : index
    %190 = vector.load %arg20[%c0_90, %c256] : memref<16x384xbf16, #tpu.memory_space<vmem>>, vector<16x128xbf16>
    tpu.vector_store %arg20[%c0_90, %c256], %189 {strides = array<i32>} : memref<16x384xbf16, #tpu.memory_space<vmem>>, vector<16x128xbf16>,
    %c0_91 = arith.constant 0 : index
    %c0_92 = arith.constant 0 : index
    %191 = vector.load %arg20[%c0_91, %c0_92] : memref<16x384xbf16, #tpu.memory_space<vmem>>, vector<16x384xbf16>
    %cst_93 = arith.constant dense<0.000000e+00> : vector<2x384xf32>
    %192 = tpu.matmul %20, %191, %cst_93 {dimension_numbers = #tpu.dot_dimension_numbers<[1], [0], [0], [1], [0, 0, 1, 1], [], []>} : vector<2x16xbf16>, vector<16x384xbf16>, vector<2x384xf32> -> vector<2x384xf32>
    %193 = arith.truncf %192 : vector<2x384xf32> to vector<2x384xbf16>
    %c0_94 = arith.constant 0 : index
    %c0_95 = arith.constant 0 : index
    %194 = vector.load %arg11[%c0_94, %c0_95] : memref<384x256xbf16, #tpu.memory_space<vmem>>, vector<384x256xbf16>
    %cst_96 = arith.constant dense<0.000000e+00> : vector<2x256xf32>
    %195 = tpu.matmul %193, %194, %cst_96 {dimension_numbers = #tpu.dot_dimension_numbers<[1], [0], [0], [1], [0, 0, 1, 1], [], []>} : vector<2x384xbf16>, vector<384x256xbf16>, vector<2x256xf32> -> vector<2x256xf32>
    %c0_97 = arith.constant 0 : index
    %c0_98 = arith.constant 0 : index
    %196 = vector.load %arg12[%c0_97, %c0_98] : memref<1x256xf32, #tpu.memory_space<vmem>>, vector<1x256xf32>
    %197 = vector.broadcast %196 : vector<1x256xf32> to vector<2x256xf32>
    %198 = arith.addf %195, %197 : vector<2x256xf32>
    %cst_99 = arith.constant 0.000000e+00 : f32
    %199 = vector.broadcast %cst_99 : f32 to vector<2x256xf32>
    %200 = arith.cmpf ogt, %198, %199 : vector<2x256xf32>
    %cst_100 = arith.constant 2.000000e-01 : f32
    %201 = vector.broadcast %cst_100 : f32 to vector<2x256xf32>
    %202 = arith.mulf %201, %198 : vector<2x256xf32>
    %203 = arith.select %200, %198, %202 : vector<2x256xi1>, vector<2x256xf32>
    %cst_101 = arith.constant 0.000000e+00 : f32
    %204 = vector.broadcast %cst_101 : f32 to vector<2x256xf32>
    %205 = arith.cmpf ogt, %203, %204 : vector<2x256xf32>
    %cst_102 = arith.constant 2.000000e-01 : f32
    %206 = vector.broadcast %cst_102 : f32 to vector<2x256xf32>
    %207 = arith.mulf %206, %203 : vector<2x256xf32>
    %208 = arith.select %205, %203, %207 : vector<2x256xi1>, vector<2x256xf32>
    %209 = arith.truncf %208 : vector<2x256xf32> to vector<2x256xbf16>
    %c0_103 = arith.constant 0 : index
    %c0_104 = arith.constant 0 : index
    %210 = vector.load %arg13[%c0_103, %c0_104] : memref<256x256xbf16, #tpu.memory_space<vmem>>, vector<256x256xbf16>
    %cst_105 = arith.constant dense<0.000000e+00> : vector<2x256xf32>
    %211 = tpu.matmul %209, %210, %cst_105 {dimension_numbers = #tpu.dot_dimension_numbers<[1], [0], [0], [1], [0, 0, 1, 1], [], []>} : vector<2x256xbf16>, vector<256x256xbf16>, vector<2x256xf32> -> vector<2x256xf32>
    %c0_106 = arith.constant 0 : index
    %c0_107 = arith.constant 0 : index
    %212 = vector.load %arg14[%c0_106, %c0_107] : memref<1x256xf32, #tpu.memory_space<vmem>>, vector<1x256xf32>
    %213 = vector.broadcast %212 : vector<1x256xf32> to vector<2x256xf32>
    %214 = arith.addf %211, %213 : vector<2x256xf32>
    %cst_108 = arith.constant 0.000000e+00 : f32
    %215 = vector.broadcast %cst_108 : f32 to vector<2x256xf32>
    %216 = arith.cmpf ogt, %214, %215 : vector<2x256xf32>
    %cst_109 = arith.constant 2.000000e-01 : f32
    %217 = vector.broadcast %cst_109 : f32 to vector<2x256xf32>
    %218 = arith.mulf %217, %214 : vector<2x256xf32>
    %219 = arith.select %216, %214, %218 : vector<2x256xi1>, vector<2x256xf32>
    %cst_110 = arith.constant 0.000000e+00 : f32
    %220 = vector.broadcast %cst_110 : f32 to vector<2x256xf32>
    %221 = arith.cmpf ogt, %219, %220 : vector<2x256xf32>
    %cst_111 = arith.constant 2.000000e-01 : f32
    %222 = vector.broadcast %cst_111 : f32 to vector<2x256xf32>
    %223 = arith.mulf %222, %219 : vector<2x256xf32>
    %224 = arith.select %221, %219, %223 : vector<2x256xi1>, vector<2x256xf32>
    %225 = arith.truncf %224 : vector<2x256xf32> to vector<2x256xbf16>
    %c0_112 = arith.constant 0 : index
    %c0_113 = arith.constant 0 : index
    %226 = vector.load %arg15[%c0_112, %c0_113] : memref<256x256xbf16, #tpu.memory_space<vmem>>, vector<256x256xbf16>
    %cst_114 = arith.constant dense<0.000000e+00> : vector<2x256xf32>
    %227 = tpu.matmul %225, %226, %cst_114 {dimension_numbers = #tpu.dot_dimension_numbers<[1], [0], [0], [1], [0, 0, 1, 1], [], []>} : vector<2x256xbf16>, vector<256x256xbf16>, vector<2x256xf32> -> vector<2x256xf32>
    %c0_115 = arith.constant 0 : index
    %c0_116 = arith.constant 0 : index
    %228 = vector.load %arg16[%c0_115, %c0_116] : memref<1x256xf32, #tpu.memory_space<vmem>>, vector<1x256xf32>
    %229 = vector.broadcast %228 : vector<1x256xf32> to vector<2x256xf32>
    %230 = arith.addf %227, %229 : vector<2x256xf32>
    %cst_117 = arith.constant 0.000000e+00 : f32
    %231 = vector.broadcast %cst_117 : f32 to vector<2x256xf32>
    %232 = arith.cmpf ogt, %230, %231 : vector<2x256xf32>
    %cst_118 = arith.constant 2.000000e-01 : f32
    %233 = vector.broadcast %cst_118 : f32 to vector<2x256xf32>
    %234 = arith.mulf %233, %230 : vector<2x256xf32>
    %235 = arith.select %232, %230, %234 : vector<2x256xi1>, vector<2x256xf32>
    %cst_119 = arith.constant 0.000000e+00 : f32
    %236 = vector.broadcast %cst_119 : f32 to vector<2x256xf32>
    %237 = arith.cmpf ogt, %235, %236 : vector<2x256xf32>
    %cst_120 = arith.constant 2.000000e-01 : f32
    %238 = vector.broadcast %cst_120 : f32 to vector<2x256xf32>
    %239 = arith.mulf %238, %235 : vector<2x256xf32>
    %240 = arith.select %237, %235, %239 : vector<2x256xi1>, vector<2x256xf32>
    %241 = arith.truncf %240 : vector<2x256xf32> to vector<2x256xbf16>
    %c0_121 = arith.constant 0 : index
    %c0_122 = arith.constant 0 : index
    %242 = vector.load %arg17[%c0_121, %c0_122] : memref<256x128xbf16, #tpu.memory_space<vmem>>, vector<256x128xbf16>
    %cst_123 = arith.constant dense<0.000000e+00> : vector<2x128xf32>
    %243 = tpu.matmul %241, %242, %cst_123 {dimension_numbers = #tpu.dot_dimension_numbers<[1], [0], [0], [1], [0, 0, 1, 1], [], []>} : vector<2x256xbf16>, vector<256x128xbf16>, vector<2x128xf32> -> vector<2x128xf32>
    %c0_124 = arith.constant 0 : index
    %c0_125 = arith.constant 0 : index
    %244 = vector.load %arg18[%c0_124, %c0_125] : memref<1x128xf32, #tpu.memory_space<vmem>>, vector<1x128xf32>
    %245 = vector.broadcast %244 : vector<1x128xf32> to vector<2x128xf32>
    %246 = arith.addf %243, %245 : vector<2x128xf32>
    %c0_126 = arith.constant 0 : index
    %c0_127 = arith.constant 0 : index
    %247 = vector.load %arg19[%c0_126, %c0_127] : memref<2x128xf32, #tpu.memory_space<vmem>>, vector<2x128xf32>
    tpu.vector_store %arg19[%c0_126, %c0_127], %246 {strides = array<i32>} : memref<2x128xf32, #tpu.memory_space<vmem>>, vector<2x128xf32>,
    return
  }
}

</mosaic_0001>

<llo_original>
// kernel: tpu_custom_call.1
$region0: #{tpu_custom_call.1}
  #allocation0 [shape = 'u32[]', space=smem, size = 0x4, offset = 0x4, fixed_abs, tag = 'smem constant byte address 0x4 - core index']
  #allocation1 [shape = 'u32[72,128]{1,0:T(1,128)}', space=vmem, size = 0x9000, scoped, tag = 'internal scratch']
  #allocation2 [shape = 'bf16[16,384]{1,0:T(8,128)(2,1)}', space=vmem, size = 0x3000, scoped, tag = 'scratch operand']
  %s0 = inlined_call_operand.hbm [shape: bf16[16,128], index: 0, kind: input, shape index: {}]
  %s1 = inlined_call_operand.vmem [shape: s32[128,1], index: 1, kind: input, shape index: {}]
  %s2 = inlined_call_operand.hbm [shape: s32[1,128], index: 2, kind: input, shape index: {}]
  %s3 = inlined_call_operand.hbm [shape: s32[1,16], index: 3, kind: input, shape index: {}]
  %s4 = inlined_call_operand.vmem [shape: f32[128,3], index: 4, kind: input, shape index: {}]
  %s5 = inlined_call_operand.hbm [shape: f32[3,3,128], index: 5, kind: input, shape index: {}]
  %s6 = inlined_call_operand.vmem [shape: f32[3,1,128], index: 6, kind: input, shape index: {}]
  %s7 = inlined_call_operand.hbm [shape: bf16[3,128,128], index: 7, kind: input, shape index: {}]
  %s8 = inlined_call_operand.vmem [shape: f32[3,1,128], index: 8, kind: input, shape index: {}]
  %s9 = inlined_call_operand.hbm [shape: bf16[3,128,128], index: 9, kind: input, shape index: {}]
  %s10 = inlined_call_operand.vmem [shape: f32[3,1,128], index: 10, kind: input, shape index: {}]
  %s11 = inlined_call_operand.hbm [shape: bf16[384,256], index: 11, kind: input, shape index: {}]
  %s12 = inlined_call_operand.vmem [shape: f32[1,256], index: 12, kind: input, shape index: {}]
  %s13 = inlined_call_operand.vmem [shape: bf16[256,256], index: 13, kind: input, shape index: {}]
  %s14 = inlined_call_operand.hbm [shape: f32[1,256], index: 14, kind: input, shape index: {}]
  %s15 = inlined_call_operand.hbm [shape: bf16[256,256], index: 15, kind: input, shape index: {}]
  %s16 = inlined_call_operand.vmem [shape: f32[1,256], index: 16, kind: input, shape index: {}]
  %s17 = inlined_call_operand.hbm [shape: bf16[256,128], index: 17, kind: input, shape index: {}]
  %s18 = inlined_call_operand.vmem [shape: f32[1,128], index: 18, kind: input, shape index: {}]
  %s19 = inlined_call_operand.hbm [shape: f32[2,128], index: 19, kind: output, shape index: {}]
  %s20 = sld [smem:[#allocation0]]
  $region126: #{tpu_custom_call.1} parent=0
    _
  %s22 = ssub.s32 1, %s20
  %s23 = scalar_select 0, %s22, %s20
  $region1: #{tpu_custom_call.1} parent=0
    #allocation3 [shape = 'u8[4096]{0}', space=vmem, size = 0x1000, scoped, tag = 'input window, operand 0, single buffered']
    #allocation4 [shape = 's32[1]{0}', space=sflag, size = 0x4, scoped, tag = 'scoped memory for tpu_custom_call.1']
    #allocation5 [shape = 's32[1]{0}', space=sflag, size = 0x4, scoped, tag = 'scoped memory for tpu_custom_call.1']
    #allocation6 [shape = 'u8[512]{0}', space=vmem, size = 0x400, scoped, tag = 'input window, operand 2, single buffered']
    #allocation7 [shape = 's32[1]{0}', space=sflag, size = 0x4, scoped, tag = 'scoped memory for tpu_custom_call.1']
    #allocation8 [shape = 'u8[512]{0}', space=vmem, size = 0x400, scoped, tag = 'input window, operand 3, single buffered']
    #allocation9 [shape = 'u8[6144]{0}', space=vmem, size = 0x1800, scoped, tag = 'input window, operand 5, single buffered']
    #allocation10 [shape = 's32[1]{0}', space=sflag, size = 0x4, scoped, tag = 'scoped memory for tpu_custom_call.1']
    #allocation11 [shape = 'u8[98304]{0}', space=vmem, size = 0x18000, scoped, tag = 'input window, operand 7, single buffered']
    #allocation12 [shape = 'u8[98304]{0}', space=vmem, size = 0x18000, scoped, tag = 'input window, operand 9, single buffered']
    #allocation13 [shape = 's32[1]{0}', space=sflag, size = 0x4, scoped, tag = 'scoped memory for tpu_custom_call.1']
    #allocation14 [shape = 'u8[196608]{0}', space=vmem, size = 0x30000, scoped, tag = 'input window, operand 11, single buffered']
    #allocation15 [shape = 'u8[1024]{0}', space=vmem, size = 0x400, scoped, tag = 'input window, operand 14, single buffered']
    #allocation16 [shape = 's32[1]{0}', space=sflag, size = 0x4, scoped, tag = 'scoped memory for tpu_custom_call.1']
    #allocation17 [shape = 'u8[131072]{0}', space=vmem, size = 0x20000, scoped, tag = 'input window, operand 15, single buffered']
    #allocation18 [shape = 'u8[65536]{0}', space=vmem, size = 0x10000, scoped, tag = 'input window, operand 17, single buffered']
    #allocation19 [shape = 's32[1]{0}', space=sflag, size = 0x4, scoped, tag = 'scoped memory for tpu_custom_call.1']
    #allocation20 [shape = 'u8[1024]{0}', space=vmem, size = 0x400, scoped, tag = 'output window, operand 0, single buffered']
    %24 = vsyncpa [#allocation4], 0
    %25 = vsyncpa [#allocation7], 0
    %26 = vsyncpa [#allocation10], 0
    %27 = vsyncpa [#allocation13], 0
    %28 = vsyncpa [#allocation16], 0
    %29 = vsyncpa [#allocation19], 0
    %30 = vsyncpa [#allocation5], 0
    // Predicated region
    $region2: #{tpu_custom_call.1} parent=1 // pred_check
      _
    $region3: #{tpu_custom_call.1} parent=1 // pred_check_branch
      %32 = sbr.rel (0) target = $region5
    $region4: #{tpu_custom_call.1} parent=1 // pred_region
      %34 = vsyncadd [#allocation4], 0
      %s35 = sshll.u32 %s0, 4
      %s36 = int_to_ptr.hbm [resolvable:$true] %s35
      %s37 = sshll.u32 [#allocation3], 4
      %s38 = int_to_ptr.vmem [resolvable:$true] %s37
      %43 = dma.hbm_to_vmem [thread:$0]  %s36, 128, %s38, [#allocation4], 64, 64, 4
    $region5: #{tpu_custom_call.1} parent=1 // pred_fallthru
      _
    // Predicated region
    $region6: #{tpu_custom_call.1} parent=1 // pred_check
      _
    $region7: #{tpu_custom_call.1} parent=1 // pred_check_branch
      %45 = sbr.rel (0) target = $region9
    $region8: #{tpu_custom_call.1} parent=1 // pred_region
      _
    $region9: #{tpu_custom_call.1} parent=1 // pred_fallthru
      _
    // Predicated region
    $region10: #{tpu_custom_call.1} parent=1 // pred_check
      _
    $region11: #{tpu_custom_call.1} parent=1 // pred_check_branch
      %47 = sbr.rel (0) target = $region13
    $region12: #{tpu_custom_call.1} parent=1 // pred_region
      %49 = vsyncadd [#allocation7], 0
      %s51 = sshll.u32 %s2, 4
      %s52 = int_to_ptr.hbm [resolvable:$true] %s51
      %s53 = sshll.u32 [#allocation6], 4
      %s54 = int_to_ptr.vmem [resolvable:$true] %s53
      %56 = dma.hbm_to_vmem [thread:$0]  %s52, 16, %s54, [#allocation7]
    $region13: #{tpu_custom_call.1} parent=1 // pred_fallthru
      _
    // Predicated region
    $region14: #{tpu_custom_call.1} parent=1 // pred_check
      _
    $region15: #{tpu_custom_call.1} parent=1 // pred_check_branch
      %58 = sbr.rel (0) target = $region17
    $region16: #{tpu_custom_call.1} parent=1 // pred_region
      %60 = vsyncadd [#allocation7], 0
      %s62 = sshll.u32 %s3, 4
      %s63 = int_to_ptr.hbm [resolvable:$true] %s62
      %s64 = sshll.u32 [#allocation8], 4
      %s65 = int_to_ptr.vmem [resolvable:$true] %s64
      %67 = dma.hbm_to_vmem [thread:$0]  %s63, 16, %s65, [#allocation7]
    $region17: #{tpu_custom_call.1} parent=1 // pred_fallthru
      _
    // Predicated region
    $region18: #{tpu_custom_call.1} parent=1 // pred_check
      _
    $region19: #{tpu_custom_call.1} parent=1 // pred_check_branch
      %69 = sbr.rel (0) target = $region21
    $region20: #{tpu_custom_call.1} parent=1 // pred_region
      _
    $region21: #{tpu_custom_call.1} parent=1 // pred_fallthru
      _
    // Predicated region
    $region22: #{tpu_custom_call.1} parent=1 // pred_check
      _
    $region23: #{tpu_custom_call.1} parent=1 // pred_check_branch
      %71 = sbr.rel (0) target = $region25
    $region24: #{tpu_custom_call.1} parent=1 // pred_region
      %73 = vsyncadd [#allocation10], 0
      %s74 = sshll.u32 %s5, 4
      %s75 = int_to_ptr.hbm [resolvable:$true] %s74
      %s76 = sshll.u32 [#allocation9], 4
      %s77 = int_to_ptr.vmem [resolvable:$true] %s76
      %82 = dma.hbm_to_vmem [thread:$0]  %s75, 192, %s77, [#allocation10], 64, 64, 4
    $region25: #{tpu_custom_call.1} parent=1 // pred_fallthru
      _
    // Predicated region
    $region26: #{tpu_custom_call.1} parent=1 // pred_check
      _
    $region27: #{tpu_custom_call.1} parent=1 // pred_check_branch
      %84 = sbr.rel (0) target = $region29
    $region28: #{tpu_custom_call.1} parent=1 // pred_region
      _
    $region29: #{tpu_custom_call.1} parent=1 // pred_fallthru
      _
    // Predicated region
    $region30: #{tpu_custom_call.1} parent=1 // pred_check
      _
    $region31: #{tpu_custom_call.1} parent=1 // pred_check_branch
      %86 = sbr.rel (0) target = $region33
    $region32: #{tpu_custom_call.1} parent=1 // pred_region
      %88 = vsyncadd [#allocation10], 0
      %s89 = sshll.u32 %s7, 4
      %s90 = int_to_ptr.hbm [resolvable:$true] %s89
      %s91 = sshll.u32 [#allocation11], 4
      %s92 = int_to_ptr.vmem [resolvable:$true] %s91
      %97 = dma.hbm_to_vmem [thread:$0]  %s90, 3072, %s92, [#allocation10], 64, 64, 4
    $region33: #{tpu_custom_call.1} parent=1 // pred_fallthru
      _
    // Predicated region
    $region34: #{tpu_custom_call.1} parent=1 // pred_check
      _
    $region35: #{tpu_custom_call.1} parent=1 // pred_check_branch
      %99 = sbr.rel (0) target = $region37
    $region36: #{tpu_custom_call.1} parent=1 // pred_region
      _
    $region37: #{tpu_custom_call.1} parent=1 // pred_fallthru
      _
    // Predicated region
    $region38: #{tpu_custom_call.1} parent=1 // pred_check
      _
    $region39: #{tpu_custom_call.1} parent=1 // pred_check_branch
      %101 = sbr.rel (0) target = $region41
    $region40: #{tpu_custom_call.1} parent=1 // pred_region
      %103 = vsyncadd [#allocation13], 0
      %s104 = sshll.u32 %s9, 4
      %s105 = int_to_ptr.hbm [resolvable:$true] %s104
      %s106 = sshll.u32 [#allocation12], 4
      %s107 = int_to_ptr.vmem [resolvable:$true] %s106
      %112 = dma.hbm_to_vmem [thread:$0]  %s105, 3072, %s107, [#allocation13], 64, 64, 4
    $region41: #{tpu_custom_call.1} parent=1 // pred_fallthru
      _
    // Predicated region
    $region42: #{tpu_custom_call.1} parent=1 // pred_check
      _
    $region43: #{tpu_custom_call.1} parent=1 // pred_check_branch
      %114 = sbr.rel (0) target = $region45
    $region44: #{tpu_custom_call.1} parent=1 // pred_region
      _
    $region45: #{tpu_custom_call.1} parent=1 // pred_fallthru
      _
    // Predicated region
    $region46: #{tpu_custom_call.1} parent=1 // pred_check
      _
    $region47: #{tpu_custom_call.1} parent=1 // pred_check_branch
      %116 = sbr.rel (0) target = $region49
    $region48: #{tpu_custom_call.1} parent=1 // pred_region
      %118 = vsyncadd [#allocation13], 0
      %s119 = sshll.u32 %s11, 4
      %s120 = int_to_ptr.hbm [resolvable:$true] %s119
      %s121 = sshll.u32 [#allocation14], 4
      %s122 = int_to_ptr.vmem [resolvable:$true] %s121
      %127 = dma.hbm_to_vmem [thread:$0]  %s120, 6144, %s122, [#allocation13], 128, 128, 8
    $region49: #{tpu_custom_call.1} parent=1 // pred_fallthru
      _
    // Predicated region
    $region50: #{tpu_custom_call.1} parent=1 // pred_check
      _
    $region51: #{tpu_custom_call.1} parent=1 // pred_check_branch
      %129 = sbr.rel (0) target = $region53
    $region52: #{tpu_custom_call.1} parent=1 // pred_region
      _
    $region53: #{tpu_custom_call.1} parent=1 // pred_fallthru
      _
    // Predicated region
    $region54: #{tpu_custom_call.1} parent=1 // pred_check
      _
    $region55: #{tpu_custom_call.1} parent=1 // pred_check_branch
      %131 = sbr.rel (0) target = $region57
    $region56: #{tpu_custom_call.1} parent=1 // pred_region
      _
    $region57: #{tpu_custom_call.1} parent=1 // pred_fallthru
      _
    // Predicated region
    $region58: #{tpu_custom_call.1} parent=1 // pred_check
      _
    $region59: #{tpu_custom_call.1} parent=1 // pred_check_branch
      %133 = sbr.rel (0) target = $region61
    $region60: #{tpu_custom_call.1} parent=1 // pred_region
      %135 = vsyncadd [#allocation16], 0
      %s137 = sshll.u32 %s14, 4
      %s138 = int_to_ptr.hbm [resolvable:$true] %s137
      %s139 = sshll.u32 [#allocation15], 4
      %s140 = int_to_ptr.vmem [resolvable:$true] %s139
      %142 = dma.hbm_to_vmem [thread:$0]  %s138, 32, %s140, [#allocation16]
    $region61: #{tpu_custom_call.1} parent=1 // pred_fallthru
      _
    // Predicated region
    $region62: #{tpu_custom_call.1} parent=1 // pred_check
      _
    $region63: #{tpu_custom_call.1} parent=1 // pred_check_branch
      %144 = sbr.rel (0) target = $region65
    $region64: #{tpu_custom_call.1} parent=1 // pred_region
      %146 = vsyncadd [#allocation16], 0
      %s147 = sshll.u32 %s15, 4
      %s148 = int_to_ptr.hbm [resolvable:$true] %s147
      %s149 = sshll.u32 [#allocation17], 4
      %s150 = int_to_ptr.vmem [resolvable:$true] %s149
      %155 = dma.hbm_to_vmem [thread:$0]  %s148, 4096, %s150, [#allocation16], 128, 128, 8
    $region65: #{tpu_custom_call.1} parent=1 // pred_fallthru
      _
    // Predicated region
    $region66: #{tpu_custom_call.1} parent=1 // pred_check
      _
    $region67: #{tpu_custom_call.1} parent=1 // pred_check_branch
      %157 = sbr.rel (0) target = $region69
    $region68: #{tpu_custom_call.1} parent=1 // pred_region
      _
    $region69: #{tpu_custom_call.1} parent=1 // pred_fallthru
      _
    // Predicated region
    $region70: #{tpu_custom_call.1} parent=1 // pred_check
      _
    $region71: #{tpu_custom_call.1} parent=1 // pred_check_branch
      %159 = sbr.rel (0) target = $region73
    $region72: #{tpu_custom_call.1} parent=1 // pred_region
      %161 = vsyncadd [#allocation19], 0
      %s162 = sshll.u32 %s17, 4
      %s163 = int_to_ptr.hbm [resolvable:$true] %s162
      %s164 = sshll.u32 [#allocation18], 4
      %s165 = int_to_ptr.vmem [resolvable:$true] %s164
      %170 = dma.hbm_to_vmem [thread:$0]  %s163, 2048, %s165, [#allocation19], 64, 64, 4
    $region73: #{tpu_custom_call.1} parent=1 // pred_fallthru
      _
    // Predicated region
    $region74: #{tpu_custom_call.1} parent=1 // pred_check
      _
    $region75: #{tpu_custom_call.1} parent=1 // pred_check_branch
      %172 = sbr.rel (0) target = $region77
    $region76: #{tpu_custom_call.1} parent=1 // pred_region
      _
    $region77: #{tpu_custom_call.1} parent=1 // pred_fallthru
      _
    // Predicated region
    $region78: #{tpu_custom_call.1} parent=1 // pred_check
      _
    $region79: #{tpu_custom_call.1} parent=1 // pred_check_branch
      %174 = sbr.rel (0) target = $region81
    $region80: #{tpu_custom_call.1} parent=1 // pred_region
      %176 = dma.done [#allocation4], 128
    $region81: #{tpu_custom_call.1} parent=1 // pred_fallthru
      _
    // Predicated region
    $region82: #{tpu_custom_call.1} parent=1 // pred_check
      _
    $region83: #{tpu_custom_call.1} parent=1 // pred_check_branch
      %178 = sbr.rel (0) target = $region85
    $region84: #{tpu_custom_call.1} parent=1 // pred_region
      %180 = dma.done [#allocation7], 16
    $region85: #{tpu_custom_call.1} parent=1 // pred_fallthru
      _
    // Predicated region
    $region86: #{tpu_custom_call.1} parent=1 // pred_check
      _
    $region87: #{tpu_custom_call.1} parent=1 // pred_check_branch
      %182 = sbr.rel (0) target = $region89
    $region88: #{tpu_custom_call.1} parent=1 // pred_region
      %184 = dma.done [#allocation7], 16
    $region89: #{tpu_custom_call.1} parent=1 // pred_fallthru
      _
    // Predicated region
    $region90: #{tpu_custom_call.1} parent=1 // pred_check
      _
    $region91: #{tpu_custom_call.1} parent=1 // pred_check_branch
      %186 = sbr.rel (0) target = $region93
    $region92: #{tpu_custom_call.1} parent=1 // pred_region
      %188 = dma.done [#allocation10], 192
    $region93: #{tpu_custom_call.1} parent=1 // pred_fallthru
      _
    // Predicated region
    $region94: #{tpu_custom_call.1} parent=1 // pred_check
      _
    $region95: #{tpu_custom_call.1} parent=1 // pred_check_branch
      %190 = sbr.rel (0) target = $region97
    $region96: #{tpu_custom_call.1} parent=1 // pred_region
      %192 = dma.done [#allocation10], 3072
    $region97: #{tpu_custom_call.1} parent=1 // pred_fallthru
      _
    // Predicated region
    $region98: #{tpu_custom_call.1} parent=1 // pred_check
      _
    $region99: #{tpu_custom_call.1} parent=1 // pred_check_branch
      %194 = sbr.rel (0) target = $region101
    $region100: #{tpu_custom_call.1} parent=1 // pred_region
      %196 = dma.done [#allocation13], 3072
    $region101: #{tpu_custom_call.1} parent=1 // pred_fallthru
      _
    // Predicated region
    $region102: #{tpu_custom_call.1} parent=1 // pred_check
      _
    $region103: #{tpu_custom_call.1} parent=1 // pred_check_branch
      %198 = sbr.rel (0) target = $region105
    $region104: #{tpu_custom_call.1} parent=1 // pred_region
      %200 = dma.done [#allocation13], 6144
    $region105: #{tpu_custom_call.1} parent=1 // pred_fallthru
      _
    // Predicated region
    $region106: #{tpu_custom_call.1} parent=1 // pred_check
      _
    $region107: #{tpu_custom_call.1} parent=1 // pred_check_branch
      %202 = sbr.rel (0) target = $region109
    $region108: #{tpu_custom_call.1} parent=1 // pred_region
      %204 = dma.done [#allocation16], 32
    $region109: #{tpu_custom_call.1} parent=1 // pred_fallthru
      _
    // Predicated region
    $region110: #{tpu_custom_call.1} parent=1 // pred_check
      _
    $region111: #{tpu_custom_call.1} parent=1 // pred_check_branch
      %206 = sbr.rel (0) target = $region113
    $region112: #{tpu_custom_call.1} parent=1 // pred_region
      %208 = dma.done [#allocation16], 4096
    $region113: #{tpu_custom_call.1} parent=1 // pred_fallthru
      _
    // Predicated region
    $region114: #{tpu_custom_call.1} parent=1 // pred_check
      _
    $region115: #{tpu_custom_call.1} parent=1 // pred_check_branch
      %210 = sbr.rel (0) target = $region117
    $region116: #{tpu_custom_call.1} parent=1 // pred_region
      %212 = dma.done [#allocation19], 2048
    $region117: #{tpu_custom_call.1} parent=1 // pred_fallthru
      _
    %v214 = vld [vmem:[%s1] sm:$0xff]
    %v215 = vld [vmem:[%s1 + $0x8] sm:$0xff]
    %v216 = vld [vmem:[%s1 + $0x10] sm:$0xff]
    %v217 = vld [vmem:[%s1 + $0x18] sm:$0xff]
    %v218 = vld [vmem:[%s1 + $0x20] sm:$0xff]
    %v219 = vld [vmem:[%s1 + $0x28] sm:$0xff]
    %v220 = vld [vmem:[%s1 + $0x30] sm:$0xff]
    %v221 = vld [vmem:[%s1 + $0x38] sm:$0xff]
    %v222 = vld [vmem:[%s1 + $0x40] sm:$0xff]
    %v223 = vld [vmem:[%s1 + $0x48] sm:$0xff]
    %v224 = vld [vmem:[%s1 + $0x50] sm:$0xff]
    %v225 = vld [vmem:[%s1 + $0x58] sm:$0xff]
    %v226 = vld [vmem:[%s1 + $0x60] sm:$0xff]
    %v227 = vld [vmem:[%s1 + $0x68] sm:$0xff]
    %v228 = vld [vmem:[%s1 + $0x70] sm:$0xff]
    %v229 = vld [vmem:[%s1 + $0x78] sm:$0xff]
    %v230 = vld [vmem:[#allocation6] sm:$0x1]
    %v231 = vld [vmem:[#allocation8] sm:$0x1]
    %v232 = vlaneseq
    %v233 = vand.u32 %v232, 127
    %234 = vset.pattern.permute.xlu0 0
    %235 = vperm.xlu0 %234, %v214
    %v236 = vpop.permute.xlu0 %235
    %237 = vset.pattern.permute.xlu0 0
    %238 = vperm.xlu0 %237, %v215
    %v239 = vpop.permute.xlu0 %238
    %240 = vset.pattern.permute.xlu0 0
    %241 = vperm.xlu0 %240, %v216
    %v242 = vpop.permute.xlu0 %241
    %243 = vset.pattern.permute.xlu0 0
    %244 = vperm.xlu0 %243, %v217
    %v245 = vpop.permute.xlu0 %244
    %246 = vset.pattern.permute.xlu0 0
    %247 = vperm.xlu0 %246, %v218
    %v248 = vpop.permute.xlu0 %247
    %249 = vset.pattern.permute.xlu0 0
    %250 = vperm.xlu0 %249, %v219
    %v251 = vpop.permute.xlu0 %250
    %252 = vset.pattern.permute.xlu0 0
    %253 = vperm.xlu0 %252, %v220
    %v254 = vpop.permute.xlu0 %253
    %255 = vset.pattern.permute.xlu0 0
    %256 = vperm.xlu0 %255, %v221
    %v257 = vpop.permute.xlu0 %256
    %258 = vset.pattern.permute.xlu0 0
    %259 = vperm.xlu0 %258, %v222
    %v260 = vpop.permute.xlu0 %259
    %261 = vset.pattern.permute.xlu0 0
    %262 = vperm.xlu0 %261, %v223
    %v263 = vpop.permute.xlu0 %262
    %264 = vset.pattern.permute.xlu0 0
    %265 = vperm.xlu0 %264, %v224
    %v266 = vpop.permute.xlu0 %265
    %267 = vset.pattern.permute.xlu0 0
    %268 = vperm.xlu0 %267, %v225
    %v269 = vpop.permute.xlu0 %268
    %270 = vset.pattern.permute.xlu0 0
    %271 = vperm.xlu0 %270, %v226
    %v272 = vpop.permute.xlu0 %271
    %273 = vset.pattern.permute.xlu0 0
    %274 = vperm.xlu0 %273, %v227
    %v275 = vpop.permute.xlu0 %274
    %276 = vset.pattern.permute.xlu0 0
    %277 = vperm.xlu0 %276, %v228
    %v278 = vpop.permute.xlu0 %277
    %279 = vset.pattern.permute.xlu0 0
    %280 = vperm.xlu0 %279, %v229
    %v281 = vpop.permute.xlu0 %280
    %vm282 = vcmp.eq.s32.totalorder %v233, %v236
    %vm283 = vcmp.eq.s32.totalorder %v233, %v239
    %vm284 = vcmp.eq.s32.totalorder %v233, %v242
    %vm285 = vcmp.eq.s32.totalorder %v233, %v245
    %vm286 = vcmp.eq.s32.totalorder %v233, %v248
    %vm287 = vcmp.eq.s32.totalorder %v233, %v251
    %vm288 = vcmp.eq.s32.totalorder %v233, %v254
    %vm289 = vcmp.eq.s32.totalorder %v233, %v257
    %vm290 = vcmp.eq.s32.totalorder %v233, %v260
    %vm291 = vcmp.eq.s32.totalorder %v233, %v263
    %vm292 = vcmp.eq.s32.totalorder %v233, %v266
    %vm293 = vcmp.eq.s32.totalorder %v233, %v269
    %vm294 = vcmp.eq.s32.totalorder %v233, %v272
    %vm295 = vcmp.eq.s32.totalorder %v233, %v275
    %vm296 = vcmp.eq.s32.totalorder %v233, %v278
    %vm297 = vcmp.eq.s32.totalorder %v233, %v281
    %v298 = vsel %vm282, 1, 0
    %v299 = vsel %vm283, 1, 0
    %v300 = vsel %vm284, 1, 0
    %v301 = vsel %vm285, 1, 0
    %v302 = vsel %vm286, 1, 0
    %v303 = vsel %vm287, 1, 0
    %v304 = vsel %vm288, 1, 0
    %v305 = vsel %vm289, 1, 0
    %v306 = vsel %vm290, 1, 0
    %v307 = vsel %vm291, 1, 0
    %v308 = vsel %vm292, 1, 0
    %v309 = vsel %vm293, 1, 0
    %v310 = vsel %vm294, 1, 0
    %v311 = vsel %vm295, 1, 0
    %v312 = vsel %vm296, 1, 0
    %v313 = vsel %vm297, 1, 0
    %v314 = vcvt.s32.f32 %v298
    %v315 = vcvt.s32.f32 %v299
    %v316 = vcvt.s32.f32 %v300
    %v317 = vcvt.s32.f32 %v301
    %v318 = vcvt.s32.f32 %v302
    %v319 = vcvt.s32.f32 %v303
    %v320 = vcvt.s32.f32 %v304
    %v321 = vcvt.s32.f32 %v305
    %v322 = vcvt.s32.f32 %v306
    %v323 = vcvt.s32.f32 %v307
    %v324 = vcvt.s32.f32 %v308
    %v325 = vcvt.s32.f32 %v309
    %v326 = vcvt.s32.f32 %v310
    %v327 = vcvt.s32.f32 %v311
    %v328 = vcvt.s32.f32 %v312
    %v329 = vcvt.s32.f32 %v313
    %v330 = vpack.c.bf16 %v315, %v314
    %v331 = vpack.c.bf16 %v317, %v316
    %v332 = vpack.c.bf16 %v319, %v318
    %v333 = vpack.c.bf16 %v321, %v320
    %v334 = vpack.c.bf16 %v323, %v322
    %v335 = vpack.c.bf16 %v325, %v324
    %v336 = vpack.c.bf16 %v327, %v326
    %v337 = vpack.c.bf16 %v329, %v328
    %v338 = vlaneseq
    %v339 = vshrl.u32 %v338, 7
    %v340 = vadd.s32 %v339, 8
    %v341 = vperm.slane %v230, 0
    %vm342 = vcmp.eq.s32.totalorder %v339, %v341
    %vm343 = vcmp.eq.s32.totalorder %v340, %v341
    %v344 = vsel %vm342, 1, 0
    %v345 = vsel %vm343, 1, 0
    %v346 = vcvt.s32.f32 %v344
    %v347 = vcvt.s32.f32 %v345
    %v348 = vpack.c.bf16 %v347, %v346
    %v349 = vperm.slane %v231, 0
    %vm350 = vcmp.eq.s32.totalorder %v339, %v349
    %v351 = vsel %vm350, 1, 0
    %v352 = vcvt.s32.f32 %v351
    %v353 = vpack.c.bf16 %v352, %v352
    %v354 = vld [vmem:[%s4] sm:$0xff]
    %v355 = vld [vmem:[%s4 + $0x8] sm:$0xff]
    %v356 = vld [vmem:[%s4 + $0x10] sm:$0xff]
    %v357 = vld [vmem:[%s4 + $0x18] sm:$0xff]
    %v358 = vld [vmem:[%s4 + $0x20] sm:$0xff]
    %v359 = vld [vmem:[%s4 + $0x28] sm:$0xff]
    %v360 = vld [vmem:[%s4 + $0x30] sm:$0xff]
    %v361 = vld [vmem:[%s4 + $0x38] sm:$0xff]
    %v362 = vld [vmem:[%s4 + $0x40] sm:$0xff]
    %v363 = vld [vmem:[%s4 + $0x48] sm:$0xff]
    %v364 = vld [vmem:[%s4 + $0x50] sm:$0xff]
    %v365 = vld [vmem:[%s4 + $0x58] sm:$0xff]
    %v366 = vld [vmem:[%s4 + $0x60] sm:$0xff]
    %v367 = vld [vmem:[%s4 + $0x68] sm:$0xff]
    %v368 = vld [vmem:[%s4 + $0x70] sm:$0xff]
    %v369 = vld [vmem:[%s4 + $0x78] sm:$0xff]
    %371 = vset.pattern.permute.xlu0 0
    %372 = vperm.xlu0 %371, %v354
    %v373 = vpop.permute.xlu0 %372
    %376 = vset.pattern.permute.xlu0 0
    %377 = vperm.xlu0 %376, %v355
    %v378 = vpop.permute.xlu0 %377
    %381 = vset.pattern.permute.xlu0 0
    %382 = vperm.xlu0 %381, %v356
    %v383 = vpop.permute.xlu0 %382
    %386 = vset.pattern.permute.xlu0 0
    %387 = vperm.xlu0 %386, %v357
    %v388 = vpop.permute.xlu0 %387
    %391 = vset.pattern.permute.xlu0 0
    %392 = vperm.xlu0 %391, %v358
    %v393 = vpop.permute.xlu0 %392
    %396 = vset.pattern.permute.xlu0 0
    %397 = vperm.xlu0 %396, %v359
    %v398 = vpop.permute.xlu0 %397
    %401 = vset.pattern.permute.xlu0 0
    %402 = vperm.xlu0 %401, %v360
    %v403 = vpop.permute.xlu0 %402
    %406 = vset.pattern.permute.xlu0 0
    %407 = vperm.xlu0 %406, %v361
    %v408 = vpop.permute.xlu0 %407
    %411 = vset.pattern.permute.xlu0 0
    %412 = vperm.xlu0 %411, %v362
    %v413 = vpop.permute.xlu0 %412
    %416 = vset.pattern.permute.xlu0 0
    %417 = vperm.xlu0 %416, %v363
    %v418 = vpop.permute.xlu0 %417
    %421 = vset.pattern.permute.xlu0 0
    %422 = vperm.xlu0 %421, %v364
    %v423 = vpop.permute.xlu0 %422
    %426 = vset.pattern.permute.xlu0 0
    %427 = vperm.xlu0 %426, %v365
    %v428 = vpop.permute.xlu0 %427
    %431 = vset.pattern.permute.xlu0 0
    %432 = vperm.xlu0 %431, %v366
    %v433 = vpop.permute.xlu0 %432
    %436 = vset.pattern.permute.xlu0 0
    %437 = vperm.xlu0 %436, %v367
    %v438 = vpop.permute.xlu0 %437
    %441 = vset.pattern.permute.xlu0 0
    %442 = vperm.xlu0 %441, %v368
    %v443 = vpop.permute.xlu0 %442
    %446 = vset.pattern.permute.xlu0 0
    %447 = vperm.xlu0 %446, %v369
    %v448 = vpop.permute.xlu0 %447
    %450 = vset.pattern.permute.xlu0 1
    %451 = vperm.xlu0 %450, %v354
    %v452 = vpop.permute.xlu0 %451
    %454 = vset.pattern.permute.xlu0 1
    %455 = vperm.xlu0 %454, %v355
    %v456 = vpop.permute.xlu0 %455
    %458 = vset.pattern.permute.xlu0 1
    %459 = vperm.xlu0 %458, %v356
    %v460 = vpop.permute.xlu0 %459
    %462 = vset.pattern.permute.xlu0 1
    %463 = vperm.xlu0 %462, %v357
    %v464 = vpop.permute.xlu0 %463
    %466 = vset.pattern.permute.xlu0 1
    %467 = vperm.xlu0 %466, %v358
    %v468 = vpop.permute.xlu0 %467
    %470 = vset.pattern.permute.xlu0 1
    %471 = vperm.xlu0 %470, %v359
    %v472 = vpop.permute.xlu0 %471
    %474 = vset.pattern.permute.xlu0 1
    %475 = vperm.xlu0 %474, %v360
    %v476 = vpop.permute.xlu0 %475
    %478 = vset.pattern.permute.xlu0 1
    %479 = vperm.xlu0 %478, %v361
    %v480 = vpop.permute.xlu0 %479
    %482 = vset.pattern.permute.xlu0 1
    %483 = vperm.xlu0 %482, %v362
    %v484 = vpop.permute.xlu0 %483
    %486 = vset.pattern.permute.xlu0 1
    %487 = vperm.xlu0 %486, %v363
    %v488 = vpop.permute.xlu0 %487
    %490 = vset.pattern.permute.xlu0 1
    %491 = vperm.xlu0 %490, %v364
    %v492 = vpop.permute.xlu0 %491
    %494 = vset.pattern.permute.xlu0 1
    %495 = vperm.xlu0 %494, %v365
    %v496 = vpop.permute.xlu0 %495
    %498 = vset.pattern.permute.xlu0 1
    %499 = vperm.xlu0 %498, %v366
    %v500 = vpop.permute.xlu0 %499
    %502 = vset.pattern.permute.xlu0 1
    %503 = vperm.xlu0 %502, %v367
    %v504 = vpop.permute.xlu0 %503
    %506 = vset.pattern.permute.xlu0 1
    %507 = vperm.xlu0 %506, %v368
    %v508 = vpop.permute.xlu0 %507
    %510 = vset.pattern.permute.xlu0 1
    %511 = vperm.xlu0 %510, %v369
    %v512 = vpop.permute.xlu0 %511
    %514 = vset.pattern.permute.xlu0 2
    %515 = vperm.xlu0 %514, %v354
    %v516 = vpop.permute.xlu0 %515
    %518 = vset.pattern.permute.xlu0 2
    %519 = vperm.xlu0 %518, %v355
    %v520 = vpop.permute.xlu0 %519
    %522 = vset.pattern.permute.xlu0 2
    %523 = vperm.xlu0 %522, %v356
    %v524 = vpop.permute.xlu0 %523
    %526 = vset.pattern.permute.xlu0 2
    %527 = vperm.xlu0 %526, %v357
    %v528 = vpop.permute.xlu0 %527
    %530 = vset.pattern.permute.xlu0 2
    %531 = vperm.xlu0 %530, %v358
    %v532 = vpop.permute.xlu0 %531
    %534 = vset.pattern.permute.xlu0 2
    %535 = vperm.xlu0 %534, %v359
    %v536 = vpop.permute.xlu0 %535
    %538 = vset.pattern.permute.xlu0 2
    %539 = vperm.xlu0 %538, %v360
    %v540 = vpop.permute.xlu0 %539
    %542 = vset.pattern.permute.xlu0 2
    %543 = vperm.xlu0 %542, %v361
    %v544 = vpop.permute.xlu0 %543
    %546 = vset.pattern.permute.xlu0 2
    %547 = vperm.xlu0 %546, %v362
    %v548 = vpop.permute.xlu0 %547
    %550 = vset.pattern.permute.xlu0 2
    %551 = vperm.xlu0 %550, %v363
    %v552 = vpop.permute.xlu0 %551
    %554 = vset.pattern.permute.xlu0 2
    %555 = vperm.xlu0 %554, %v364
    %v556 = vpop.permute.xlu0 %555
    %558 = vset.pattern.permute.xlu0 2
    %559 = vperm.xlu0 %558, %v365
    %v560 = vpop.permute.xlu0 %559
    %562 = vset.pattern.permute.xlu0 2
    %563 = vperm.xlu0 %562, %v366
    %v564 = vpop.permute.xlu0 %563
    %566 = vset.pattern.permute.xlu0 2
    %567 = vperm.xlu0 %566, %v367
    %v568 = vpop.permute.xlu0 %567
    %570 = vset.pattern.permute.xlu0 2
    %571 = vperm.xlu0 %570, %v368
    %v572 = vpop.permute.xlu0 %571
    %574 = vset.pattern.permute.xlu0 2
    %575 = vperm.xlu0 %574, %v369
    %v576 = vpop.permute.xlu0 %575
    %v578 = vld [vmem:[#allocation3] sm:$0xf]
    %v579 = vld [vmem:[#allocation3 + $0x4] sm:$0xf]
    %v580 = vld [vmem:[#allocation9] sm:$0x7]
    %v581 = vperm.slane %v580, 0
    %v582 = vmul.f32 %v373, %v581
    %v583 = vmul.f32 %v378, %v581
    %v584 = vmul.f32 %v383, %v581
    %v585 = vmul.f32 %v388, %v581
    %v586 = vmul.f32 %v393, %v581
    %v587 = vmul.f32 %v398, %v581
    %v588 = vmul.f32 %v403, %v581
    %v589 = vmul.f32 %v408, %v581
    %v590 = vmul.f32 %v413, %v581
    %v591 = vmul.f32 %v418, %v581
    %v592 = vmul.f32 %v423, %v581
    %v593 = vmul.f32 %v428, %v581
    %v594 = vmul.f32 %v433, %v581
    %v595 = vmul.f32 %v438, %v581
    %v596 = vmul.f32 %v443, %v581
    %v597 = vmul.f32 %v448, %v581
    %v598 = vperm.slane %v580, 1
    %v599 = vmul.f32 %v452, %v598
    %v600 = vmul.f32 %v456, %v598
    %v601 = vmul.f32 %v460, %v598
    %v602 = vmul.f32 %v464, %v598
    %v603 = vmul.f32 %v468, %v598
    %v604 = vmul.f32 %v472, %v598
    %v605 = vmul.f32 %v476, %v598
    %v606 = vmul.f32 %v480, %v598
    %v607 = vmul.f32 %v484, %v598
    %v608 = vmul.f32 %v488, %v598
    %v609 = vmul.f32 %v492, %v598
    %v610 = vmul.f32 %v496, %v598
    %v611 = vmul.f32 %v500, %v598
    %v612 = vmul.f32 %v504, %v598
    %v613 = vmul.f32 %v508, %v598
    %v614 = vmul.f32 %v512, %v598
    %v615 = vadd.f32 %v582, %v599
    %v616 = vadd.f32 %v583, %v600
    %v617 = vadd.f32 %v584, %v601
    %v618 = vadd.f32 %v585, %v602
    %v619 = vadd.f32 %v586, %v603
    %v620 = vadd.f32 %v587, %v604
    %v621 = vadd.f32 %v588, %v605
    %v622 = vadd.f32 %v589, %v606
    %v623 = vadd.f32 %v590, %v607
    %v624 = vadd.f32 %v591, %v608
    %v625 = vadd.f32 %v592, %v609
    %v626 = vadd.f32 %v593, %v610
    %v627 = vadd.f32 %v594, %v611
    %v628 = vadd.f32 %v595, %v612
    %v629 = vadd.f32 %v596, %v613
    %v630 = vadd.f32 %v597, %v614
    %v631 = vperm.slane %v580, 2
    %v632 = vmul.f32 %v516, %v631
    %v633 = vmul.f32 %v520, %v631
    %v634 = vmul.f32 %v524, %v631
    %v635 = vmul.f32 %v528, %v631
    %v636 = vmul.f32 %v532, %v631
    %v637 = vmul.f32 %v536, %v631
    %v638 = vmul.f32 %v540, %v631
    %v639 = vmul.f32 %v544, %v631
    %v640 = vmul.f32 %v548, %v631
    %v641 = vmul.f32 %v552, %v631
    %v642 = vmul.f32 %v556, %v631
    %v643 = vmul.f32 %v560, %v631
    %v644 = vmul.f32 %v564, %v631
    %v645 = vmul.f32 %v568, %v631
    %v646 = vmul.f32 %v572, %v631
    %v647 = vmul.f32 %v576, %v631
    %v648 = vadd.f32 %v615, %v632
    %v649 = vadd.f32 %v616, %v633
    %v650 = vadd.f32 %v617, %v634
    %v651 = vadd.f32 %v618, %v635
    %v652 = vadd.f32 %v619, %v636
    %v653 = vadd.f32 %v620, %v637
    %v654 = vadd.f32 %v621, %v638
    %v655 = vadd.f32 %v622, %v639
    %v656 = vadd.f32 %v623, %v640
    %v657 = vadd.f32 %v624, %v641
    %v658 = vadd.f32 %v625, %v642
    %v659 = vadd.f32 %v626, %v643
    %v660 = vadd.f32 %v627, %v644
    %v661 = vadd.f32 %v628, %v645
    %v662 = vadd.f32 %v629, %v646
    %v663 = vadd.f32 %v630, %v647
    %v664 = vld [vmem:[%s6] sm:$0x1]
    %v666 = vperm.slane %v664, 0
    %v668 = vadd.f32 %v648, %v666
    %v669 = vadd.f32 %v649, %v666
    %v670 = vadd.f32 %v650, %v666
    %v671 = vadd.f32 %v651, %v666
    %v672 = vadd.f32 %v652, %v666
    %v673 = vadd.f32 %v653, %v666
    %v674 = vadd.f32 %v654, %v666
    %v675 = vadd.f32 %v655, %v666
    %v676 = vadd.f32 %v656, %v666
    %v677 = vadd.f32 %v657, %v666
    %v678 = vadd.f32 %v658, %v666
    %v679 = vadd.f32 %v659, %v666
    %v680 = vadd.f32 %v660, %v666
    %v681 = vadd.f32 %v661, %v666
    %v682 = vadd.f32 %v662, %v666
    %v683 = vadd.f32 %v663, %v666
    %v686 = vunpack.c.l.b16 %v578
    %v687 = vunpack.c.l.b16 %v579
    %v688 = vpack.c.b16 %v687, %v686
    %vm690 = vcmask 130048
    %v692 = vsel %vm690, %v330, 0
    %v695 = vsel %vm690, %v331, 0
    %v698 = vsel %vm690, %v332, 0
    %v701 = vsel %vm690, %v333, 0
    %v704 = vsel %vm690, %v334, 0
    %v707 = vsel %vm690, %v335, 0
    %v710 = vsel %vm690, %v336, 0
    %v713 = vsel %vm690, %v337, 0
    %715 = vmatpush.bf16.msra.mxu0 0
    %716 = vmatpush.bf16.msra.mxu0 0
    %717 = vmatpush.bf16.msra.mxu0 0
    %718 = vmatpush.bf16.msra.mxu0 0
    %719 = vmatpush.bf16.msra.mxu0 0
    %720 = vmatpush.bf16.msra.mxu0 0
    %721 = vmatpush.bf16.msra.mxu0 0
    %722 = vmatpush.bf16.msra.mxu0 %v688
    %723 = vmatmul.bf16.gmra.mxu0 %v692
    %v724 = vpop.f32.mrf.mxu0
    %v725 = vadd.f32 %v668, %v724
    %v726 = vpop.f32.mrf.mxu0
    %v727 = vadd.f32 %v669, %v726
    %728 = vmatmul.bf16.gmra.mxu0 %v695
    %v729 = vpop.f32.mrf.mxu0
    %v730 = vadd.f32 %v670, %v729
    %v731 = vpop.f32.mrf.mxu0
    %v732 = vadd.f32 %v671, %v731
    %733 = vmatmul.bf16.gmra.mxu0 %v698
    %v734 = vpop.f32.mrf.mxu0
    %v735 = vadd.f32 %v672, %v734
    %v736 = vpop.f32.mrf.mxu0
    %v737 = vadd.f32 %v673, %v736
    %738 = vmatmul.bf16.gmra.mxu0 %v701
    %v739 = vpop.f32.mrf.mxu0
    %v740 = vadd.f32 %v674, %v739
    %v741 = vpop.f32.mrf.mxu0
    %v742 = vadd.f32 %v675, %v741
    %743 = vmatmul.bf16.gmra.mxu0 %v704
    %v744 = vpop.f32.mrf.mxu0
    %v745 = vadd.f32 %v676, %v744
    %v746 = vpop.f32.mrf.mxu0
    %v747 = vadd.f32 %v677, %v746
    %748 = vmatmul.bf16.gmra.mxu0 %v707
    %v749 = vpop.f32.mrf.mxu0
    %v750 = vadd.f32 %v678, %v749
    %v751 = vpop.f32.mrf.mxu0
    %v752 = vadd.f32 %v679, %v751
    %753 = vmatmul.bf16.gmra.mxu0 %v710
    %v754 = vpop.f32.mrf.mxu0
    %v755 = vadd.f32 %v680, %v754
    %v756 = vpop.f32.mrf.mxu0
    %v757 = vadd.f32 %v681, %v756
    %758 = vmatmul.bf16.gmra.mxu0 %v713
    %v759 = vpop.f32.mrf.mxu0
    %v760 = vadd.f32 %v682, %v759
    %v761 = vpop.f32.mrf.mxu0
    %v762 = vadd.f32 %v683, %v761
    %763 = vdwg.mxu0
    %v764 = vmax.f32 %v725, 0.0
    %v765 = vmax.f32 %v727, 0.0
    %v766 = vmax.f32 %v730, 0.0
    %v767 = vmax.f32 %v732, 0.0
    %v768 = vmax.f32 %v735, 0.0
    %v769 = vmax.f32 %v737, 0.0
    %v770 = vmax.f32 %v740, 0.0
    %v771 = vmax.f32 %v742, 0.0
    %v772 = vmax.f32 %v745, 0.0
    %v773 = vmax.f32 %v747, 0.0
    %v774 = vmax.f32 %v750, 0.0
    %v775 = vmax.f32 %v752, 0.0
    %v776 = vmax.f32 %v755, 0.0
    %v777 = vmax.f32 %v757, 0.0
    %v778 = vmax.f32 %v760, 0.0
    %v779 = vmax.f32 %v762, 0.0
    %v780 = vpack.c.bf16 %v765, %v764
    %v781 = vpack.c.bf16 %v767, %v766
    %v782 = vpack.c.bf16 %v769, %v768
    %v783 = vpack.c.bf16 %v771, %v770
    %v784 = vpack.c.bf16 %v773, %v772
    %v785 = vpack.c.bf16 %v775, %v774
    %v786 = vpack.c.bf16 %v777, %v776
    %v787 = vpack.c.bf16 %v779, %v778
    %v788 = vunpack.c.l.bf16 %v578
    %v789 = vunpack.c.l.bf16 %v579
    %790 = vmatpush.bf16.msra.mxu0 %v787
    %791 = vmatpush.bf16.msra.mxu0 %v786
    %792 = vmatpush.bf16.msra.mxu0 %v785
    %793 = vmatpush.bf16.msra.mxu0 %v784
    %794 = vmatpush.bf16.msra.mxu0 %v783
    %795 = vmatpush.bf16.msra.mxu0 %v782
    %796 = vmatpush.bf16.msra.mxu0 %v781
    %797 = vmatpush.bf16.msra.mxu0 %v780
    %798 = vmatmul.bf16.gmra.mxu0 %v348
    %v799 = vpop.f32.mrf.mxu0
    %v800 = vadd.f32 %v788, %v799
    %v801 = vpop.f32.mrf.mxu0
    %v802 = vadd.f32 %v789, %v801
    %803 = vdwg.mxu0
    %v804 = vpack.c.bf16 %v802, %v800
    %v805 = vld [vmem:[#allocation11] sm:$0xf]
    %v806 = vld [vmem:[#allocation11 + $0x4] sm:$0xf]
    %v807 = vld [vmem:[#allocation11 + $0x8] sm:$0xf]
    %v808 = vld [vmem:[#allocation11 + $0xc] sm:$0xf]
    %v809 = vld [vmem:[#allocation11 + $0x10] sm:$0xf]
    %v810 = vld [vmem:[#allocation11 + $0x14] sm:$0xf]
    %v811 = vld [vmem:[#allocation11 + $0x18] sm:$0xf]
    %v812 = vld [vmem:[#allocation11 + $0x1c] sm:$0xf]
    %v813 = vld [vmem:[#allocation11 + $0x20] sm:$0xf]
    %v814 = vld [vmem:[#allocation11 + $0x24] sm:$0xf]
    %v815 = vld [vmem:[#allocation11 + $0x28] sm:$0xf]
    %v816 = vld [vmem:[#allocation11 + $0x2c] sm:$0xf]
    %v817 = vld [vmem:[#allocation11 + $0x30] sm:$0xf]
    %v818 = vld [vmem:[#allocation11 + $0x34] sm:$0xf]
    %v819 = vld [vmem:[#allocation11 + $0x38] sm:$0xf]
    %v820 = vld [vmem:[#allocation11 + $0x3c] sm:$0xf]
    %v821 = vld [vmem:[%s8] sm:$0x1]
    %v823 = vperm.slane %v821, 0
    %v841 = vunpack.c.l.b16 %v805
    %v842 = vunpack.c.l.b16 %v806
    %v843 = vunpack.c.l.b16 %v807
    %v844 = vunpack.c.l.b16 %v808
    %v845 = vunpack.c.l.b16 %v809
    %v846 = vunpack.c.l.b16 %v810
    %v847 = vunpack.c.l.b16 %v811
    %v848 = vunpack.c.l.b16 %v812
    %v849 = vunpack.c.l.b16 %v813
    %v850 = vunpack.c.l.b16 %v814
    %v851 = vunpack.c.l.b16 %v815
    %v852 = vunpack.c.l.b16 %v816
    %v853 = vunpack.c.l.b16 %v817
    %v854 = vunpack.c.l.b16 %v818
    %v855 = vunpack.c.l.b16 %v819
    %v856 = vunpack.c.l.b16 %v820
    %v857 = vpack.c.b16 %v842, %v841
    %v858 = vpack.c.b16 %v844, %v843
    %v859 = vpack.c.b16 %v846, %v845
    %v860 = vpack.c.b16 %v848, %v847
    %v861 = vpack.c.b16 %v850, %v849
    %v862 = vpack.c.b16 %v852, %v851
    %v863 = vpack.c.b16 %v854, %v853
    %v864 = vpack.c.b16 %v856, %v855
    %873 = vmatpush.bf16.msra.mxu0 %v864
    %874 = vmatpush.bf16.msra.mxu0 %v863
    %875 = vmatpush.bf16.msra.mxu0 %v862
    %876 = vmatpush.bf16.msra.mxu0 %v861
    %877 = vmatpush.bf16.msra.mxu0 %v860
    %878 = vmatpush.bf16.msra.mxu0 %v859
    %879 = vmatpush.bf16.msra.mxu0 %v858
    %880 = vmatpush.bf16.msra.mxu0 %v857
    %881 = vmatmul.bf16.gmra.mxu0 %v804
    %v882 = vpop.f32.mrf.mxu0
    %v883 = vadd.f32 %v823, %v882
    %v884 = vpop.f32.mrf.mxu0
    %v885 = vadd.f32 %v823, %v884
    %886 = vdwg.mxu0
    %vm887 = vcmp.gt.f32.partialorder %v883, 0.0
    %vm888 = vcmp.gt.f32.partialorder %v885, 0.0
    %v889 = vmul.f32 %v883, 0.2
    %v890 = vmul.f32 %v885, 0.2
    %v891 = vsel %vm887, %v883, %v889
    %v892 = vsel %vm888, %v885, %v890
    %v893 = vpack.c.bf16 %v892, %v891
    %v894 = vld [vmem:[#allocation12] sm:$0xf]
    %v895 = vld [vmem:[#allocation12 + $0x4] sm:$0xf]
    %v896 = vld [vmem:[#allocation12 + $0x8] sm:$0xf]
    %v897 = vld [vmem:[#allocation12 + $0xc] sm:$0xf]
    %v898 = vld [vmem:[#allocation12 + $0x10] sm:$0xf]
    %v899 = vld [vmem:[#allocation12 + $0x14] sm:$0xf]
    %v900 = vld [vmem:[#allocation12 + $0x18] sm:$0xf]
    %v901 = vld [vmem:[#allocation12 + $0x1c] sm:$0xf]
    %v902 = vld [vmem:[#allocation12 + $0x20] sm:$0xf]
    %v903 = vld [vmem:[#allocation12 + $0x24] sm:$0xf]
    %v904 = vld [vmem:[#allocation12 + $0x28] sm:$0xf]
    %v905 = vld [vmem:[#allocation12 + $0x2c] sm:$0xf]
    %v906 = vld [vmem:[#allocation12 + $0x30] sm:$0xf]
    %v907 = vld [vmem:[#allocation12 + $0x34] sm:$0xf]
    %v908 = vld [vmem:[#allocation12 + $0x38] sm:$0xf]
    %v909 = vld [vmem:[#allocation12 + $0x3c] sm:$0xf]
    %v910 = vld [vmem:[%s10] sm:$0x1]
    %v912 = vperm.slane %v910, 0
    %v930 = vunpack.c.l.b16 %v894
    %v931 = vunpack.c.l.b16 %v895
    %v932 = vunpack.c.l.b16 %v896
    %v933 = vunpack.c.l.b16 %v897
    %v934 = vunpack.c.l.b16 %v898
    %v935 = vunpack.c.l.b16 %v899
    %v936 = vunpack.c.l.b16 %v900
    %v937 = vunpack.c.l.b16 %v901
    %v938 = vunpack.c.l.b16 %v902
    %v939 = vunpack.c.l.b16 %v903
    %v940 = vunpack.c.l.b16 %v904
    %v941 = vunpack.c.l.b16 %v905
    %v942 = vunpack.c.l.b16 %v906
    %v943 = vunpack.c.l.b16 %v907
    %v944 = vunpack.c.l.b16 %v908
    %v945 = vunpack.c.l.b16 %v909
    %v946 = vpack.c.b16 %v931, %v930
    %v947 = vpack.c.b16 %v933, %v932
    %v948 = vpack.c.b16 %v935, %v934
    %v949 = vpack.c.b16 %v937, %v936
    %v950 = vpack.c.b16 %v939, %v938
    %v951 = vpack.c.b16 %v941, %v940
    %v952 = vpack.c.b16 %v943, %v942
    %v953 = vpack.c.b16 %v945, %v944
    %962 = vmatpush.bf16.msra.mxu0 %v953
    %963 = vmatpush.bf16.msra.mxu0 %v952
    %964 = vmatpush.bf16.msra.mxu0 %v951
    %965 = vmatpush.bf16.msra.mxu0 %v950
    %966 = vmatpush.bf16.msra.mxu0 %v949
    %967 = vmatpush.bf16.msra.mxu0 %v948
    %968 = vmatpush.bf16.msra.mxu0 %v947
    %969 = vmatpush.bf16.msra.mxu0 %v946
    %970 = vmatmul.bf16.gmra.mxu0 %v893
    %v971 = vpop.f32.mrf.mxu0
    %v972 = vadd.f32 %v912, %v971
    %v973 = vpop.f32.mrf.mxu0
    %v974 = vadd.f32 %v912, %v973
    %975 = vdwg.mxu0
    %vm976 = vcmp.gt.f32.partialorder %v972, 0.0
    %vm977 = vcmp.gt.f32.partialorder %v974, 0.0
    %v978 = vmul.f32 %v972, 0.2
    %v979 = vmul.f32 %v974, 0.2
    %v980 = vsel %vm976, %v972, %v978
    %v981 = vsel %vm977, %v974, %v979
    %v982 = vpack.c.bf16 %v980, %v980
    %v983 = vpack.c.bf16 %v981, %v981
    %984 = vst [vmem:[#allocation2] sm:$0xf] %v982
    %985 = vst [vmem:[#allocation2 + $0xc] sm:$0xf] %v983
    %s986 = scalar_lea.vmem [#allocation9], 4
    %v987 = vld [vmem:[%s986] sm:$0x7]
    %v988 = vperm.slane %v987, 0
    %v989 = vmul.f32 %v373, %v988
    %v990 = vmul.f32 %v378, %v988
    %v991 = vmul.f32 %v383, %v988
    %v992 = vmul.f32 %v388, %v988
    %v993 = vmul.f32 %v393, %v988
    %v994 = vmul.f32 %v398, %v988
    %v995 = vmul.f32 %v403, %v988
    %v996 = vmul.f32 %v408, %v988
    %v997 = vmul.f32 %v413, %v988
    %v998 = vmul.f32 %v418, %v988
    %v999 = vmul.f32 %v423, %v988
    %v1000 = vmul.f32 %v428, %v988
    %v1001 = vmul.f32 %v433, %v988
    %v1002 = vmul.f32 %v438, %v988
    %v1003 = vmul.f32 %v443, %v988
    %v1004 = vmul.f32 %v448, %v988
    %v1005 = vperm.slane %v987, 1
    %v1006 = vmul.f32 %v452, %v1005
    %v1007 = vmul.f32 %v456, %v1005
    %v1008 = vmul.f32 %v460, %v1005
    %v1009 = vmul.f32 %v464, %v1005
    %v1010 = vmul.f32 %v468, %v1005
    %v1011 = vmul.f32 %v472, %v1005
    %v1012 = vmul.f32 %v476, %v1005
    %v1013 = vmul.f32 %v480, %v1005
    %v1014 = vmul.f32 %v484, %v1005
    %v1015 = vmul.f32 %v488, %v1005
    %v1016 = vmul.f32 %v492, %v1005
    %v1017 = vmul.f32 %v496, %v1005
    %v1018 = vmul.f32 %v500, %v1005
    %v1019 = vmul.f32 %v504, %v1005
    %v1020 = vmul.f32 %v508, %v1005
    %v1021 = vmul.f32 %v512, %v1005
    %v1022 = vadd.f32 %v989, %v1006
    %v1023 = vadd.f32 %v990, %v1007
    %v1024 = vadd.f32 %v991, %v1008
    %v1025 = vadd.f32 %v992, %v1009
    %v1026 = vadd.f32 %v993, %v1010
    %v1027 = vadd.f32 %v994, %v1011
    %v1028 = vadd.f32 %v995, %v1012
    %v1029 = vadd.f32 %v996, %v1013
    %v1030 = vadd.f32 %v997, %v1014
    %v1031 = vadd.f32 %v998, %v1015
    %v1032 = vadd.f32 %v999, %v1016
    %v1033 = vadd.f32 %v1000, %v1017
    %v1034 = vadd.f32 %v1001, %v1018
    %v1035 = vadd.f32 %v1002, %v1019
    %v1036 = vadd.f32 %v1003, %v1020
    %v1037 = vadd.f32 %v1004, %v1021
    %v1038 = vperm.slane %v987, 2
    %v1039 = vmul.f32 %v516, %v1038
    %v1040 = vmul.f32 %v520, %v1038
    %v1041 = vmul.f32 %v524, %v1038
    %v1042 = vmul.f32 %v528, %v1038
    %v1043 = vmul.f32 %v532, %v1038
    %v1044 = vmul.f32 %v536, %v1038
    %v1045 = vmul.f32 %v540, %v1038
    %v1046 = vmul.f32 %v544, %v1038
    %v1047 = vmul.f32 %v548, %v1038
    %v1048 = vmul.f32 %v552, %v1038
    %v1049 = vmul.f32 %v556, %v1038
    %v1050 = vmul.f32 %v560, %v1038
    %v1051 = vmul.f32 %v564, %v1038
    %v1052 = vmul.f32 %v568, %v1038
    %v1053 = vmul.f32 %v572, %v1038
    %v1054 = vmul.f32 %v576, %v1038
    %v1055 = vadd.f32 %v1022, %v1039
    %v1056 = vadd.f32 %v1023, %v1040
    %v1057 = vadd.f32 %v1024, %v1041
    %v1058 = vadd.f32 %v1025, %v1042
    %v1059 = vadd.f32 %v1026, %v1043
    %v1060 = vadd.f32 %v1027, %v1044
    %v1061 = vadd.f32 %v1028, %v1045
    %v1062 = vadd.f32 %v1029, %v1046
    %v1063 = vadd.f32 %v1030, %v1047
    %v1064 = vadd.f32 %v1031, %v1048
    %v1065 = vadd.f32 %v1032, %v1049
    %v1066 = vadd.f32 %v1033, %v1050
    %v1067 = vadd.f32 %v1034, %v1051
    %v1068 = vadd.f32 %v1035, %v1052
    %v1069 = vadd.f32 %v1036, %v1053
    %v1070 = vadd.f32 %v1037, %v1054
    %s1071 = scalar_lea.vmem %s6, 1
    %v1072 = vld [vmem:[%s1071] sm:$0x1]
    %v1074 = vperm.slane %v1072, 0
    %v1076 = vadd.f32 %v1055, %v1074
    %v1077 = vadd.f32 %v1056, %v1074
    %v1078 = vadd.f32 %v1057, %v1074
    %v1079 = vadd.f32 %v1058, %v1074
    %v1080 = vadd.f32 %v1059, %v1074
    %v1081 = vadd.f32 %v1060, %v1074
    %v1082 = vadd.f32 %v1061, %v1074
    %v1083 = vadd.f32 %v1062, %v1074
    %v1084 = vadd.f32 %v1063, %v1074
    %v1085 = vadd.f32 %v1064, %v1074
    %v1086 = vadd.f32 %v1065, %v1074
    %v1087 = vadd.f32 %v1066, %v1074
    %v1088 = vadd.f32 %v1067, %v1074
    %v1089 = vadd.f32 %v1068, %v1074
    %v1090 = vadd.f32 %v1069, %v1074
    %v1091 = vadd.f32 %v1070, %v1074
    %v1094 = vunpack.c.l.b16 %v982
    %v1095 = vunpack.c.l.b16 %v983
    %v1096 = vpack.c.b16 %v1095, %v1094
    %1098 = vmatpush.bf16.msra.mxu0 0
    %1099 = vmatpush.bf16.msra.mxu0 0
    %1100 = vmatpush.bf16.msra.mxu0 0
    %1101 = vmatpush.bf16.msra.mxu0 0
    %1102 = vmatpush.bf16.msra.mxu0 0
    %1103 = vmatpush.bf16.msra.mxu0 0
    %1104 = vmatpush.bf16.msra.mxu0 0
    %1105 = vmatpush.bf16.msra.mxu0 %v1096
    %1106 = vmatmul.bf16.gmra.mxu0 %v692
    %v1107 = vpop.f32.mrf.mxu0
    %v1108 = vadd.f32 %v1076, %v1107
    %v1109 = vpop.f32.mrf.mxu0
    %v1110 = vadd.f32 %v1077, %v1109
    %1111 = vmatmul.bf16.gmra.mxu0 %v695
    %v1112 = vpop.f32.mrf.mxu0
    %v1113 = vadd.f32 %v1078, %v1112
    %v1114 = vpop.f32.mrf.mxu0
    %v1115 = vadd.f32 %v1079, %v1114
    %1116 = vmatmul.bf16.gmra.mxu0 %v698
    %v1117 = vpop.f32.mrf.mxu0
    %v1118 = vadd.f32 %v1080, %v1117
    %v1119 = vpop.f32.mrf.mxu0
    %v1120 = vadd.f32 %v1081, %v1119
    %1121 = vmatmul.bf16.gmra.mxu0 %v701
    %v1122 = vpop.f32.mrf.mxu0
    %v1123 = vadd.f32 %v1082, %v1122
    %v1124 = vpop.f32.mrf.mxu0
    %v1125 = vadd.f32 %v1083, %v1124
    %1126 = vmatmul.bf16.gmra.mxu0 %v704
    %v1127 = vpop.f32.mrf.mxu0
    %v1128 = vadd.f32 %v1084, %v1127
    %v1129 = vpop.f32.mrf.mxu0
    %v1130 = vadd.f32 %v1085, %v1129
    %1131 = vmatmul.bf16.gmra.mxu0 %v707
    %v1132 = vpop.f32.mrf.mxu0
    %v1133 = vadd.f32 %v1086, %v1132
    %v1134 = vpop.f32.mrf.mxu0
    %v1135 = vadd.f32 %v1087, %v1134
    %1136 = vmatmul.bf16.gmra.mxu0 %v710
    %v1137 = vpop.f32.mrf.mxu0
    %v1138 = vadd.f32 %v1088, %v1137
    %v1139 = vpop.f32.mrf.mxu0
    %v1140 = vadd.f32 %v1089, %v1139
    %1141 = vmatmul.bf16.gmra.mxu0 %v713
    %v1142 = vpop.f32.mrf.mxu0
    %v1143 = vadd.f32 %v1090, %v1142
    %v1144 = vpop.f32.mrf.mxu0
    %v1145 = vadd.f32 %v1091, %v1144
    %1146 = vdwg.mxu0
    %v1147 = vmax.f32 %v1108, 0.0
    %v1148 = vmax.f32 %v1110, 0.0
    %v1149 = vmax.f32 %v1113, 0.0
    %v1150 = vmax.f32 %v1115, 0.0
    %v1151 = vmax.f32 %v1118, 0.0
    %v1152 = vmax.f32 %v1120, 0.0
    %v1153 = vmax.f32 %v1123, 0.0
    %v1154 = vmax.f32 %v1125, 0.0
    %v1155 = vmax.f32 %v1128, 0.0
    %v1156 = vmax.f32 %v1130, 0.0
    %v1157 = vmax.f32 %v1133, 0.0
    %v1158 = vmax.f32 %v1135, 0.0
    %v1159 = vmax.f32 %v1138, 0.0
    %v1160 = vmax.f32 %v1140, 0.0
    %v1161 = vmax.f32 %v1143, 0.0
    %v1162 = vmax.f32 %v1145, 0.0
    %v1163 = vpack.c.bf16 %v1148, %v1147
    %v1164 = vpack.c.bf16 %v1150, %v1149
    %v1165 = vpack.c.bf16 %v1152, %v1151
    %v1166 = vpack.c.bf16 %v1154, %v1153
    %v1167 = vpack.c.bf16 %v1156, %v1155
    %v1168 = vpack.c.bf16 %v1158, %v1157
    %v1169 = vpack.c.bf16 %v1160, %v1159
    %v1170 = vpack.c.bf16 %v1162, %v1161
    %v1171 = vunpack.c.l.bf16 %v982
    %v1172 = vunpack.c.l.bf16 %v983
    %1173 = vmatpush.bf16.msra.mxu0 %v1170
    %1174 = vmatpush.bf16.msra.mxu0 %v1169
    %1175 = vmatpush.bf16.msra.mxu0 %v1168
    %1176 = vmatpush.bf16.msra.mxu0 %v1167
    %1177 = vmatpush.bf16.msra.mxu0 %v1166
    %1178 = vmatpush.bf16.msra.mxu0 %v1165
    %1179 = vmatpush.bf16.msra.mxu0 %v1164
    %1180 = vmatpush.bf16.msra.mxu0 %v1163
    %1181 = vmatmul.bf16.gmra.mxu0 %v348
    %v1182 = vpop.f32.mrf.mxu0
    %v1183 = vadd.f32 %v1171, %v1182
    %v1184 = vpop.f32.mrf.mxu0
    %v1185 = vadd.f32 %v1172, %v1184
    %1186 = vdwg.mxu0
    %v1187 = vpack.c.bf16 %v1185, %v1183
    %s1188 = scalar_lea.vmem [#allocation11], 64
    %v1189 = vld [vmem:[%s1188] sm:$0xf]
    %v1190 = vld [vmem:[%s1188 + $0x4] sm:$0xf]
    %v1191 = vld [vmem:[%s1188 + $0x8] sm:$0xf]
    %v1192 = vld [vmem:[%s1188 + $0xc] sm:$0xf]
    %v1193 = vld [vmem:[%s1188 + $0x10] sm:$0xf]
    %v1194 = vld [vmem:[%s1188 + $0x14] sm:$0xf]
    %v1195 = vld [vmem:[%s1188 + $0x18] sm:$0xf]
    %v1196 = vld [vmem:[%s1188 + $0x1c] sm:$0xf]
    %v1197 = vld [vmem:[%s1188 + $0x20] sm:$0xf]
    %v1198 = vld [vmem:[%s1188 + $0x24] sm:$0xf]
    %v1199 = vld [vmem:[%s1188 + $0x28] sm:$0xf]
    %v1200 = vld [vmem:[%s1188 + $0x2c] sm:$0xf]
    %v1201 = vld [vmem:[%s1188 + $0x30] sm:$0xf]
    %v1202 = vld [vmem:[%s1188 + $0x34] sm:$0xf]
    %v1203 = vld [vmem:[%s1188 + $0x38] sm:$0xf]
    %v1204 = vld [vmem:[%s1188 + $0x3c] sm:$0xf]
    %s1205 = scalar_lea.vmem %s8, 1
    %v1206 = vld [vmem:[%s1205] sm:$0x1]
    %v1208 = vperm.slane %v1206, 0
    %v1226 = vunpack.c.l.b16 %v1189
    %v1227 = vunpack.c.l.b16 %v1190
    %v1228 = vunpack.c.l.b16 %v1191
    %v1229 = vunpack.c.l.b16 %v1192
    %v1230 = vunpack.c.l.b16 %v1193
    %v1231 = vunpack.c.l.b16 %v1194
    %v1232 = vunpack.c.l.b16 %v1195
    %v1233 = vunpack.c.l.b16 %v1196
    %v1234 = vunpack.c.l.b16 %v1197
    %v1235 = vunpack.c.l.b16 %v1198
    %v1236 = vunpack.c.l.b16 %v1199
    %v1237 = vunpack.c.l.b16 %v1200
    %v1238 = vunpack.c.l.b16 %v1201
    %v1239 = vunpack.c.l.b16 %v1202
    %v1240 = vunpack.c.l.b16 %v1203
    %v1241 = vunpack.c.l.b16 %v1204
    %v1242 = vpack.c.b16 %v1227, %v1226
    %v1243 = vpack.c.b16 %v1229, %v1228
    %v1244 = vpack.c.b16 %v1231, %v1230
    %v1245 = vpack.c.b16 %v1233, %v1232
    %v1246 = vpack.c.b16 %v1235, %v1234
    %v1247 = vpack.c.b16 %v1237, %v1236
    %v1248 = vpack.c.b16 %v1239, %v1238
    %v1249 = vpack.c.b16 %v1241, %v1240
    %1258 = vmatpush.bf16.msra.mxu0 %v1249
    %1259 = vmatpush.bf16.msra.mxu0 %v1248
    %1260 = vmatpush.bf16.msra.mxu0 %v1247
    %1261 = vmatpush.bf16.msra.mxu0 %v1246
    %1262 = vmatpush.bf16.msra.mxu0 %v1245
    %1263 = vmatpush.bf16.msra.mxu0 %v1244
    %1264 = vmatpush.bf16.msra.mxu0 %v1243
    %1265 = vmatpush.bf16.msra.mxu0 %v1242
    %1266 = vmatmul.bf16.gmra.mxu0 %v1187
    %v1267 = vpop.f32.mrf.mxu0
    %v1268 = vadd.f32 %v1208, %v1267
    %v1269 = vpop.f32.mrf.mxu0
    %v1270 = vadd.f32 %v1208, %v1269
    %1271 = vdwg.mxu0
    %vm1272 = vcmp.gt.f32.partialorder %v1268, 0.0
    %vm1273 = vcmp.gt.f32.partialorder %v1270, 0.0
    %v1274 = vmul.f32 %v1268, 0.2
    %v1275 = vmul.f32 %v1270, 0.2
    %v1276 = vsel %vm1272, %v1268, %v1274
    %v1277 = vsel %vm1273, %v1270, %v1275
    %v1278 = vpack.c.bf16 %v1277, %v1276
    %s1279 = scalar_lea.vmem [#allocation12], 64
    %v1280 = vld [vmem:[%s1279] sm:$0xf]
    %v1281 = vld [vmem:[%s1279 + $0x4] sm:$0xf]
    %v1282 = vld [vmem:[%s1279 + $0x8] sm:$0xf]
    %v1283 = vld [vmem:[%s1279 + $0xc] sm:$0xf]
    %v1284 = vld [vmem:[%s1279 + $0x10] sm:$0xf]
    %v1285 = vld [vmem:[%s1279 + $0x14] sm:$0xf]
    %v1286 = vld [vmem:[%s1279 + $0x18] sm:$0xf]
    %v1287 = vld [vmem:[%s1279 + $0x1c] sm:$0xf]
    %v1288 = vld [vmem:[%s1279 + $0x20] sm:$0xf]
    %v1289 = vld [vmem:[%s1279 + $0x24] sm:$0xf]
    %v1290 = vld [vmem:[%s1279 + $0x28] sm:$0xf]
    %v1291 = vld [vmem:[%s1279 + $0x2c] sm:$0xf]
    %v1292 = vld [vmem:[%s1279 + $0x30] sm:$0xf]
    %v1293 = vld [vmem:[%s1279 + $0x34] sm:$0xf]
    %v1294 = vld [vmem:[%s1279 + $0x38] sm:$0xf]
    %v1295 = vld [vmem:[%s1279 + $0x3c] sm:$0xf]
    %s1296 = scalar_lea.vmem %s10, 1
    %v1297 = vld [vmem:[%s1296] sm:$0x1]
    %v1299 = vperm.slane %v1297, 0
    %v1317 = vunpack.c.l.b16 %v1280
    %v1318 = vunpack.c.l.b16 %v1281
    %v1319 = vunpack.c.l.b16 %v1282
    %v1320 = vunpack.c.l.b16 %v1283
    %v1321 = vunpack.c.l.b16 %v1284
    %v1322 = vunpack.c.l.b16 %v1285
    %v1323 = vunpack.c.l.b16 %v1286
    %v1324 = vunpack.c.l.b16 %v1287
    %v1325 = vunpack.c.l.b16 %v1288
    %v1326 = vunpack.c.l.b16 %v1289
    %v1327 = vunpack.c.l.b16 %v1290
    %v1328 = vunpack.c.l.b16 %v1291
    %v1329 = vunpack.c.l.b16 %v1292
    %v1330 = vunpack.c.l.b16 %v1293
    %v1331 = vunpack.c.l.b16 %v1294
    %v1332 = vunpack.c.l.b16 %v1295
    %v1333 = vpack.c.b16 %v1318, %v1317
    %v1334 = vpack.c.b16 %v1320, %v1319
    %v1335 = vpack.c.b16 %v1322, %v1321
    %v1336 = vpack.c.b16 %v1324, %v1323
    %v1337 = vpack.c.b16 %v1326, %v1325
    %v1338 = vpack.c.b16 %v1328, %v1327
    %v1339 = vpack.c.b16 %v1330, %v1329
    %v1340 = vpack.c.b16 %v1332, %v1331
    %1349 = vmatpush.bf16.msra.mxu0 %v1340
    %1350 = vmatpush.bf16.msra.mxu0 %v1339
    %1351 = vmatpush.bf16.msra.mxu0 %v1338
    %1352 = vmatpush.bf16.msra.mxu0 %v1337
    %1353 = vmatpush.bf16.msra.mxu0 %v1336
    %1354 = vmatpush.bf16.msra.mxu0 %v1335
    %1355 = vmatpush.bf16.msra.mxu0 %v1334
    %1356 = vmatpush.bf16.msra.mxu0 %v1333
    %1357 = vmatmul.bf16.gmra.mxu0 %v1278
    %v1358 = vpop.f32.mrf.mxu0
    %v1359 = vadd.f32 %v1299, %v1358
    %v1360 = vpop.f32.mrf.mxu0
    %v1361 = vadd.f32 %v1299, %v1360
    %1362 = vdwg.mxu0
    %vm1363 = vcmp.gt.f32.partialorder %v1359, 0.0
    %vm1364 = vcmp.gt.f32.partialorder %v1361, 0.0
    %v1365 = vmul.f32 %v1359, 0.2
    %v1366 = vmul.f32 %v1361, 0.2
    %v1367 = vsel %vm1363, %v1359, %v1365
    %v1368 = vsel %vm1364, %v1361, %v1366
    %v1369 = vpack.c.bf16 %v1367, %v1367
    %v1370 = vpack.c.bf16 %v1368, %v1368
    %1371 = vst [vmem:[#allocation2 + $0x4] sm:$0xf] %v1369
    %1372 = vst [vmem:[#allocation2 + $0x10] sm:$0xf] %v1370
    %s1373 = scalar_lea.vmem [#allocation9], 8
    %v1374 = vld [vmem:[%s1373] sm:$0x7]
    %v1375 = vperm.slane %v1374, 0
    %v1376 = vmul.f32 %v373, %v1375
    %v1377 = vmul.f32 %v378, %v1375
    %v1378 = vmul.f32 %v383, %v1375
    %v1379 = vmul.f32 %v388, %v1375
    %v1380 = vmul.f32 %v393, %v1375
    %v1381 = vmul.f32 %v398, %v1375
    %v1382 = vmul.f32 %v403, %v1375
    %v1383 = vmul.f32 %v408, %v1375
    %v1384 = vmul.f32 %v413, %v1375
    %v1385 = vmul.f32 %v418, %v1375
    %v1386 = vmul.f32 %v423, %v1375
    %v1387 = vmul.f32 %v428, %v1375
    %v1388 = vmul.f32 %v433, %v1375
    %v1389 = vmul.f32 %v438, %v1375
    %v1390 = vmul.f32 %v443, %v1375
    %v1391 = vmul.f32 %v448, %v1375
    %v1392 = vperm.slane %v1374, 1
    %v1393 = vmul.f32 %v452, %v1392
    %v1394 = vmul.f32 %v456, %v1392
    %v1395 = vmul.f32 %v460, %v1392
    %v1396 = vmul.f32 %v464, %v1392
    %v1397 = vmul.f32 %v468, %v1392
    %v1398 = vmul.f32 %v472, %v1392
    %v1399 = vmul.f32 %v476, %v1392
    %v1400 = vmul.f32 %v480, %v1392
    %v1401 = vmul.f32 %v484, %v1392
    %v1402 = vmul.f32 %v488, %v1392
    %v1403 = vmul.f32 %v492, %v1392
    %v1404 = vmul.f32 %v496, %v1392
    %v1405 = vmul.f32 %v500, %v1392
    %v1406 = vmul.f32 %v504, %v1392
    %v1407 = vmul.f32 %v508, %v1392
    %v1408 = vmul.f32 %v512, %v1392
    %v1409 = vadd.f32 %v1376, %v1393
    %v1410 = vadd.f32 %v1377, %v1394
    %v1411 = vadd.f32 %v1378, %v1395
    %v1412 = vadd.f32 %v1379, %v1396
    %v1413 = vadd.f32 %v1380, %v1397
    %v1414 = vadd.f32 %v1381, %v1398
    %v1415 = vadd.f32 %v1382, %v1399
    %v1416 = vadd.f32 %v1383, %v1400
    %v1417 = vadd.f32 %v1384, %v1401
    %v1418 = vadd.f32 %v1385, %v1402
    %v1419 = vadd.f32 %v1386, %v1403
    %v1420 = vadd.f32 %v1387, %v1404
    %v1421 = vadd.f32 %v1388, %v1405
    %v1422 = vadd.f32 %v1389, %v1406
    %v1423 = vadd.f32 %v1390, %v1407
    %v1424 = vadd.f32 %v1391, %v1408
    %v1425 = vperm.slane %v1374, 2
    %v1426 = vmul.f32 %v516, %v1425
    %v1427 = vmul.f32 %v520, %v1425
    %v1428 = vmul.f32 %v524, %v1425
    %v1429 = vmul.f32 %v528, %v1425
    %v1430 = vmul.f32 %v532, %v1425
    %v1431 = vmul.f32 %v536, %v1425
    %v1432 = vmul.f32 %v540, %v1425
    %v1433 = vmul.f32 %v544, %v1425
    %v1434 = vmul.f32 %v548, %v1425
    %v1435 = vmul.f32 %v552, %v1425
    %v1436 = vmul.f32 %v556, %v1425
    %v1437 = vmul.f32 %v560, %v1425
    %v1438 = vmul.f32 %v564, %v1425
    %v1439 = vmul.f32 %v568, %v1425
    %v1440 = vmul.f32 %v572, %v1425
    %v1441 = vmul.f32 %v576, %v1425
    %v1442 = vadd.f32 %v1409, %v1426
    %v1443 = vadd.f32 %v1410, %v1427
    %v1444 = vadd.f32 %v1411, %v1428
    %v1445 = vadd.f32 %v1412, %v1429
    %v1446 = vadd.f32 %v1413, %v1430
    %v1447 = vadd.f32 %v1414, %v1431
    %v1448 = vadd.f32 %v1415, %v1432
    %v1449 = vadd.f32 %v1416, %v1433
    %v1450 = vadd.f32 %v1417, %v1434
    %v1451 = vadd.f32 %v1418, %v1435
    %v1452 = vadd.f32 %v1419, %v1436
    %v1453 = vadd.f32 %v1420, %v1437
    %v1454 = vadd.f32 %v1421, %v1438
    %v1455 = vadd.f32 %v1422, %v1439
    %v1456 = vadd.f32 %v1423, %v1440
    %v1457 = vadd.f32 %v1424, %v1441
    %s1458 = scalar_lea.vmem %s6, 2
    %v1459 = vld [vmem:[%s1458] sm:$0x1]
    %v1461 = vperm.slane %v1459, 0
    %v1463 = vadd.f32 %v1442, %v1461
    %v1464 = vadd.f32 %v1443, %v1461
    %v1465 = vadd.f32 %v1444, %v1461
    %v1466 = vadd.f32 %v1445, %v1461
    %v1467 = vadd.f32 %v1446, %v1461
    %v1468 = vadd.f32 %v1447, %v1461
    %v1469 = vadd.f32 %v1448, %v1461
    %v1470 = vadd.f32 %v1449, %v1461
    %v1471 = vadd.f32 %v1450, %v1461
    %v1472 = vadd.f32 %v1451, %v1461
    %v1473 = vadd.f32 %v1452, %v1461
    %v1474 = vadd.f32 %v1453, %v1461
    %v1475 = vadd.f32 %v1454, %v1461
    %v1476 = vadd.f32 %v1455, %v1461
    %v1477 = vadd.f32 %v1456, %v1461
    %v1478 = vadd.f32 %v1457, %v1461
    %v1481 = vunpack.c.l.b16 %v1369
    %v1482 = vunpack.c.l.b16 %v1370
    %v1483 = vpack.c.b16 %v1482, %v1481
    %1485 = vmatpush.bf16.msra.mxu0 0
    %1486 = vmatpush.bf16.msra.mxu0 0
    %1487 = vmatpush.bf16.msra.mxu0 0
    %1488 = vmatpush.bf16.msra.mxu0 0
    %1489 = vmatpush.bf16.msra.mxu0 0
    %1490 = vmatpush.bf16.msra.mxu0 0
    %1491 = vmatpush.bf16.msra.mxu0 0
    %1492 = vmatpush.bf16.msra.mxu0 %v1483
    %1493 = vmatmul.bf16.gmra.mxu0 %v692
    %v1494 = vpop.f32.mrf.mxu0
    %v1495 = vadd.f32 %v1463, %v1494
    %v1496 = vpop.f32.mrf.mxu0
    %v1497 = vadd.f32 %v1464, %v1496
    %1498 = vmatmul.bf16.gmra.mxu0 %v695
    %v1499 = vpop.f32.mrf.mxu0
    %v1500 = vadd.f32 %v1465, %v1499
    %v1501 = vpop.f32.mrf.mxu0
    %v1502 = vadd.f32 %v1466, %v1501
    %1503 = vmatmul.bf16.gmra.mxu0 %v698
    %v1504 = vpop.f32.mrf.mxu0
    %v1505 = vadd.f32 %v1467, %v1504
    %v1506 = vpop.f32.mrf.mxu0
    %v1507 = vadd.f32 %v1468, %v1506
    %1508 = vmatmul.bf16.gmra.mxu0 %v701
    %v1509 = vpop.f32.mrf.mxu0
    %v1510 = vadd.f32 %v1469, %v1509
    %v1511 = vpop.f32.mrf.mxu0
    %v1512 = vadd.f32 %v1470, %v1511
    %1513 = vmatmul.bf16.gmra.mxu0 %v704
    %v1514 = vpop.f32.mrf.mxu0
    %v1515 = vadd.f32 %v1471, %v1514
    %v1516 = vpop.f32.mrf.mxu0
    %v1517 = vadd.f32 %v1472, %v1516
    %1518 = vmatmul.bf16.gmra.mxu0 %v707
    %v1519 = vpop.f32.mrf.mxu0
    %v1520 = vadd.f32 %v1473, %v1519
    %v1521 = vpop.f32.mrf.mxu0
    %v1522 = vadd.f32 %v1474, %v1521
    %1523 = vmatmul.bf16.gmra.mxu0 %v710
    %v1524 = vpop.f32.mrf.mxu0
    %v1525 = vadd.f32 %v1475, %v1524
    %v1526 = vpop.f32.mrf.mxu0
    %v1527 = vadd.f32 %v1476, %v1526
    %1528 = vmatmul.bf16.gmra.mxu0 %v713
    %v1529 = vpop.f32.mrf.mxu0
    %v1530 = vadd.f32 %v1477, %v1529
    %v1531 = vpop.f32.mrf.mxu0
    %v1532 = vadd.f32 %v1478, %v1531
    %1533 = vdwg.mxu0
    %v1534 = vmax.f32 %v1495, 0.0
    %v1535 = vmax.f32 %v1497, 0.0
    %v1536 = vmax.f32 %v1500, 0.0
    %v1537 = vmax.f32 %v1502, 0.0
    %v1538 = vmax.f32 %v1505, 0.0
    %v1539 = vmax.f32 %v1507, 0.0
    %v1540 = vmax.f32 %v1510, 0.0
    %v1541 = vmax.f32 %v1512, 0.0
    %v1542 = vmax.f32 %v1515, 0.0
    %v1543 = vmax.f32 %v1517, 0.0
    %v1544 = vmax.f32 %v1520, 0.0
    %v1545 = vmax.f32 %v1522, 0.0
    %v1546 = vmax.f32 %v1525, 0.0
    %v1547 = vmax.f32 %v1527, 0.0
    %v1548 = vmax.f32 %v1530, 0.0
    %v1549 = vmax.f32 %v1532, 0.0
    %v1550 = vpack.c.bf16 %v1535, %v1534
    %v1551 = vpack.c.bf16 %v1537, %v1536
    %v1552 = vpack.c.bf16 %v1539, %v1538
    %v1553 = vpack.c.bf16 %v1541, %v1540
    %v1554 = vpack.c.bf16 %v1543, %v1542
    %v1555 = vpack.c.bf16 %v1545, %v1544
    %v1556 = vpack.c.bf16 %v1547, %v1546
    %v1557 = vpack.c.bf16 %v1549, %v1548
    %v1558 = vunpack.c.l.bf16 %v1369
    %v1559 = vunpack.c.l.bf16 %v1370
    %1560 = vmatpush.bf16.msra.mxu0 %v1557
    %1561 = vmatpush.bf16.msra.mxu0 %v1556
    %1562 = vmatpush.bf16.msra.mxu0 %v1555
    %1563 = vmatpush.bf16.msra.mxu0 %v1554
    %1564 = vmatpush.bf16.msra.mxu0 %v1553
    %1565 = vmatpush.bf16.msra.mxu0 %v1552
    %1566 = vmatpush.bf16.msra.mxu0 %v1551
    %1567 = vmatpush.bf16.msra.mxu0 %v1550
    %1568 = vmatmul.bf16.gmra.mxu0 %v348
    %v1569 = vpop.f32.mrf.mxu0
    %v1570 = vadd.f32 %v1558, %v1569
    %v1571 = vpop.f32.mrf.mxu0
    %v1572 = vadd.f32 %v1559, %v1571
    %1573 = vdwg.mxu0
    %v1574 = vpack.c.bf16 %v1572, %v1570
    %s1575 = scalar_lea.vmem [#allocation11], 128
    %v1576 = vld [vmem:[%s1575] sm:$0xf]
    %v1577 = vld [vmem:[%s1575 + $0x4] sm:$0xf]
    %v1578 = vld [vmem:[%s1575 + $0x8] sm:$0xf]
    %v1579 = vld [vmem:[%s1575 + $0xc] sm:$0xf]
    %v1580 = vld [vmem:[%s1575 + $0x10] sm:$0xf]
    %v1581 = vld [vmem:[%s1575 + $0x14] sm:$0xf]
    %v1582 = vld [vmem:[%s1575 + $0x18] sm:$0xf]
    %v1583 = vld [vmem:[%s1575 + $0x1c] sm:$0xf]
    %v1584 = vld [vmem:[%s1575 + $0x20] sm:$0xf]
    %v1585 = vld [vmem:[%s1575 + $0x24] sm:$0xf]
    %v1586 = vld [vmem:[%s1575 + $0x28] sm:$0xf]
    %v1587 = vld [vmem:[%s1575 + $0x2c] sm:$0xf]
    %v1588 = vld [vmem:[%s1575 + $0x30] sm:$0xf]
    %v1589 = vld [vmem:[%s1575 + $0x34] sm:$0xf]
    %v1590 = vld [vmem:[%s1575 + $0x38] sm:$0xf]
    %v1591 = vld [vmem:[%s1575 + $0x3c] sm:$0xf]
    %s1592 = scalar_lea.vmem %s8, 2
    %v1593 = vld [vmem:[%s1592] sm:$0x1]
    %v1595 = vperm.slane %v1593, 0
    %v1613 = vunpack.c.l.b16 %v1576
    %v1614 = vunpack.c.l.b16 %v1577
    %v1615 = vunpack.c.l.b16 %v1578
    %v1616 = vunpack.c.l.b16 %v1579
    %v1617 = vunpack.c.l.b16 %v1580
    %v1618 = vunpack.c.l.b16 %v1581
    %v1619 = vunpack.c.l.b16 %v1582
    %v1620 = vunpack.c.l.b16 %v1583
    %v1621 = vunpack.c.l.b16 %v1584
    %v1622 = vunpack.c.l.b16 %v1585
    %v1623 = vunpack.c.l.b16 %v1586
    %v1624 = vunpack.c.l.b16 %v1587
    %v1625 = vunpack.c.l.b16 %v1588
    %v1626 = vunpack.c.l.b16 %v1589
    %v1627 = vunpack.c.l.b16 %v1590
    %v1628 = vunpack.c.l.b16 %v1591
    %v1629 = vpack.c.b16 %v1614, %v1613
    %v1630 = vpack.c.b16 %v1616, %v1615
    %v1631 = vpack.c.b16 %v1618, %v1617
    %v1632 = vpack.c.b16 %v1620, %v1619
    %v1633 = vpack.c.b16 %v1622, %v1621
    %v1634 = vpack.c.b16 %v1624, %v1623
    %v1635 = vpack.c.b16 %v1626, %v1625
    %v1636 = vpack.c.b16 %v1628, %v1627
    %1645 = vmatpush.bf16.msra.mxu0 %v1636
    %1646 = vmatpush.bf16.msra.mxu0 %v1635
    %1647 = vmatpush.bf16.msra.mxu0 %v1634
    %1648 = vmatpush.bf16.msra.mxu0 %v1633
    %1649 = vmatpush.bf16.msra.mxu0 %v1632
    %1650 = vmatpush.bf16.msra.mxu0 %v1631
    %1651 = vmatpush.bf16.msra.mxu0 %v1630
    %1652 = vmatpush.bf16.msra.mxu0 %v1629
    %1653 = vmatmul.bf16.gmra.mxu0 %v1574
    %v1654 = vpop.f32.mrf.mxu0
    %v1655 = vadd.f32 %v1595, %v1654
    %v1656 = vpop.f32.mrf.mxu0
    %v1657 = vadd.f32 %v1595, %v1656
    %1658 = vdwg.mxu0
    %vm1659 = vcmp.gt.f32.partialorder %v1655, 0.0
    %vm1660 = vcmp.gt.f32.partialorder %v1657, 0.0
    %v1661 = vmul.f32 %v1655, 0.2
    %v1662 = vmul.f32 %v1657, 0.2
    %v1663 = vsel %vm1659, %v1655, %v1661
    %v1664 = vsel %vm1660, %v1657, %v1662
    %v1665 = vpack.c.bf16 %v1664, %v1663
    %s1666 = scalar_lea.vmem [#allocation12], 128
    %v1667 = vld [vmem:[%s1666] sm:$0xf]
    %v1668 = vld [vmem:[%s1666 + $0x4] sm:$0xf]
    %v1669 = vld [vmem:[%s1666 + $0x8] sm:$0xf]
    %v1670 = vld [vmem:[%s1666 + $0xc] sm:$0xf]
    %v1671 = vld [vmem:[%s1666 + $0x10] sm:$0xf]
    %v1672 = vld [vmem:[%s1666 + $0x14] sm:$0xf]
    %v1673 = vld [vmem:[%s1666 + $0x18] sm:$0xf]
    %v1674 = vld [vmem:[%s1666 + $0x1c] sm:$0xf]
    %v1675 = vld [vmem:[%s1666 + $0x20] sm:$0xf]
    %v1676 = vld [vmem:[%s1666 + $0x24] sm:$0xf]
    %v1677 = vld [vmem:[%s1666 + $0x28] sm:$0xf]
    %v1678 = vld [vmem:[%s1666 + $0x2c] sm:$0xf]
    %v1679 = vld [vmem:[%s1666 + $0x30] sm:$0xf]
    %v1680 = vld [vmem:[%s1666 + $0x34] sm:$0xf]
    %v1681 = vld [vmem:[%s1666 + $0x38] sm:$0xf]
    %v1682 = vld [vmem:[%s1666 + $0x3c] sm:$0xf]
    %s1683 = scalar_lea.vmem %s10, 2
    %v1684 = vld [vmem:[%s1683] sm:$0x1]
    %v1686 = vperm.slane %v1684, 0
    %v1704 = vunpack.c.l.b16 %v1667
    %v1705 = vunpack.c.l.b16 %v1668
    %v1706 = vunpack.c.l.b16 %v1669
    %v1707 = vunpack.c.l.b16 %v1670
    %v1708 = vunpack.c.l.b16 %v1671
    %v1709 = vunpack.c.l.b16 %v1672
    %v1710 = vunpack.c.l.b16 %v1673
    %v1711 = vunpack.c.l.b16 %v1674
    %v1712 = vunpack.c.l.b16 %v1675
    %v1713 = vunpack.c.l.b16 %v1676
    %v1714 = vunpack.c.l.b16 %v1677
    %v1715 = vunpack.c.l.b16 %v1678
    %v1716 = vunpack.c.l.b16 %v1679
    %v1717 = vunpack.c.l.b16 %v1680
    %v1718 = vunpack.c.l.b16 %v1681
    %v1719 = vunpack.c.l.b16 %v1682
    %v1720 = vpack.c.b16 %v1705, %v1704
    %v1721 = vpack.c.b16 %v1707, %v1706
    %v1722 = vpack.c.b16 %v1709, %v1708
    %v1723 = vpack.c.b16 %v1711, %v1710
    %v1724 = vpack.c.b16 %v1713, %v1712
    %v1725 = vpack.c.b16 %v1715, %v1714
    %v1726 = vpack.c.b16 %v1717, %v1716
    %v1727 = vpack.c.b16 %v1719, %v1718
    %1736 = vmatpush.bf16.msra.mxu0 %v1727
    %1737 = vmatpush.bf16.msra.mxu0 %v1726
    %1738 = vmatpush.bf16.msra.mxu0 %v1725
    %1739 = vmatpush.bf16.msra.mxu0 %v1724
    %1740 = vmatpush.bf16.msra.mxu0 %v1723
    %1741 = vmatpush.bf16.msra.mxu0 %v1722
    %1742 = vmatpush.bf16.msra.mxu0 %v1721
    %1743 = vmatpush.bf16.msra.mxu0 %v1720
    %1744 = vmatmul.bf16.gmra.mxu0 %v1665
    %v1745 = vpop.f32.mrf.mxu0
    %v1746 = vadd.f32 %v1686, %v1745
    %v1747 = vpop.f32.mrf.mxu0
    %v1748 = vadd.f32 %v1686, %v1747
    %1749 = vdwg.mxu0
    %vm1750 = vcmp.gt.f32.partialorder %v1746, 0.0
    %vm1751 = vcmp.gt.f32.partialorder %v1748, 0.0
    %v1752 = vmul.f32 %v1746, 0.2
    %v1753 = vmul.f32 %v1748, 0.2
    %v1754 = vsel %vm1750, %v1746, %v1752
    %v1755 = vsel %vm1751, %v1748, %v1753
    %v1756 = vpack.c.bf16 %v1754, %v1754
    %v1757 = vpack.c.bf16 %v1755, %v1755
    %1758 = vst [vmem:[#allocation2 + $0x8] sm:$0xf] %v1756
    %1759 = vst [vmem:[#allocation2 + $0x14] sm:$0xf] %v1757
    %v1760 = vld [vmem:[#allocation2] sm:$0xff]
    %v1761 = vld [vmem:[#allocation2 + $0x8] sm:$0xf]
    %v1762 = vld [vmem:[#allocation2 + $0xc] sm:$0xff]
    %v1763 = vld [vmem:[#allocation2 + $0x14] sm:$0xf]
    %v1768 = vunpack.c.l.b16 %v1760
    %v1769 = vunpack.c.h.b16 %v1760
    %v1770 = vunpack.c.l.b16 %v1761
    %v1771 = vunpack.c.l.b16 %v1762
    %v1772 = vunpack.c.h.b16 %v1762
    %v1773 = vunpack.c.l.b16 %v1763
    %v1774 = vpack.c.b16 %v1771, %v1768
    %v1775 = vpack.c.b16 %v1772, %v1769
    %v1776 = vpack.c.b16 %v1773, %v1770
    %v1781 = vsel %vm690, %v353, 0
    %1783 = vmatpush.bf16.msra.mxu0 0
    %1784 = vmatpush.bf16.msra.mxu0 0
    %1785 = vmatpush.bf16.msra.mxu0 0
    %1786 = vmatpush.bf16.msra.mxu0 0
    %1787 = vmatpush.bf16.msra.mxu0 0
    %1788 = vmatpush.bf16.msra.mxu0 0
    %1789 = vmatpush.bf16.msra.mxu0 0
    %1790 = vmatpush.bf16.msra.mxu0 %v1774
    %1791 = vmatmul.bf16.gmra.mxu0 %v1781
    %v1792 = vpop.f32.mrf.mxu0
    %v1793 = vadd.f32 0.0, %v1792
    %v1794 = vpop.f32.mrf.mxu0
    %1795 = vdwg.mxu0
    %1796 = vmatpush.bf16.msra.mxu0 0
    %1797 = vmatpush.bf16.msra.mxu0 0
    %1798 = vmatpush.bf16.msra.mxu0 0
    %1799 = vmatpush.bf16.msra.mxu0 0
    %1800 = vmatpush.bf16.msra.mxu0 0
    %1801 = vmatpush.bf16.msra.mxu0 0
    %1802 = vmatpush.bf16.msra.mxu0 0
    %1803 = vmatpush.bf16.msra.mxu0 %v1775
    %1804 = vmatmul.bf16.gmra.mxu0 %v1781
    %v1805 = vpop.f32.mrf.mxu0
    %v1806 = vadd.f32 0.0, %v1805
    %v1807 = vpop.f32.mrf.mxu0
    %1808 = vdwg.mxu0
    %1809 = vmatpush.bf16.msra.mxu0 0
    %1810 = vmatpush.bf16.msra.mxu0 0
    %1811 = vmatpush.bf16.msra.mxu0 0
    %1812 = vmatpush.bf16.msra.mxu0 0
    %1813 = vmatpush.bf16.msra.mxu0 0
    %1814 = vmatpush.bf16.msra.mxu0 0
    %1815 = vmatpush.bf16.msra.mxu0 0
    %1816 = vmatpush.bf16.msra.mxu0 %v1776
    %1817 = vmatmul.bf16.gmra.mxu0 %v1781
    %v1818 = vpop.f32.mrf.mxu0
    %v1819 = vadd.f32 0.0, %v1818
    %v1820 = vpop.f32.mrf.mxu0
    %1821 = vdwg.mxu0
    %v1822 = vpack.c.bf16 %v1793, %v1793
    %v1823 = vpack.c.bf16 %v1806, %v1806
    %v1824 = vpack.c.bf16 %v1819, %v1819
    %v1825 = vld [vmem:[#allocation14] sm:$0xff]
    %v1826 = vld [vmem:[#allocation14 + $0x8] sm:$0xff]
    %v1827 = vld [vmem:[#allocation14 + $0x10] sm:$0xff]
    %v1828 = vld [vmem:[#allocation14 + $0x18] sm:$0xff]
    %v1829 = vld [vmem:[#allocation14 + $0x20] sm:$0xff]
    %v1830 = vld [vmem:[#allocation14 + $0x28] sm:$0xff]
    %v1831 = vld [vmem:[#allocation14 + $0x30] sm:$0xff]
    %v1832 = vld [vmem:[#allocation14 + $0x38] sm:$0xff]
    %v1833 = vld [vmem:[#allocation14 + $0x40] sm:$0xff]
    %v1834 = vld [vmem:[#allocation14 + $0x48] sm:$0xff]
    %v1835 = vld [vmem:[#allocation14 + $0x50] sm:$0xff]
    %v1836 = vld [vmem:[#allocation14 + $0x58] sm:$0xff]
    %v1837 = vld [vmem:[#allocation14 + $0x60] sm:$0xff]
    %v1838 = vld [vmem:[#allocation14 + $0x68] sm:$0xff]
    %v1839 = vld [vmem:[#allocation14 + $0x70] sm:$0xff]
    %v1840 = vld [vmem:[#allocation14 + $0x78] sm:$0xff]
    %v1841 = vld [vmem:[#allocation14 + $0x80] sm:$0xff]
    %v1842 = vld [vmem:[#allocation14 + $0x88] sm:$0xff]
    %v1843 = vld [vmem:[#allocation14 + $0x90] sm:$0xff]
    %v1844 = vld [vmem:[#allocation14 + $0x98] sm:$0xff]
    %v1845 = vld [vmem:[#allocation14 + $0xa0] sm:$0xff]
    %v1846 = vld [vmem:[#allocation14 + $0xa8] sm:$0xff]
    %v1847 = vld [vmem:[#allocation14 + $0xb0] sm:$0xff]
    %v1848 = vld [vmem:[#allocation14 + $0xb8] sm:$0xff]
    %v1849 = vld [vmem:[#allocation14 + $0xc0] sm:$0xff]
    %v1850 = vld [vmem:[#allocation14 + $0xc8] sm:$0xff]
    %v1851 = vld [vmem:[#allocation14 + $0xd0] sm:$0xff]
    %v1852 = vld [vmem:[#allocation14 + $0xd8] sm:$0xff]
    %v1853 = vld [vmem:[#allocation14 + $0xe0] sm:$0xff]
    %v1854 = vld [vmem:[#allocation14 + $0xe8] sm:$0xff]
    %v1855 = vld [vmem:[#allocation14 + $0xf0] sm:$0xff]
    %v1856 = vld [vmem:[#allocation14 + $0xf8] sm:$0xff]
    %v1857 = vld [vmem:[#allocation14 + $0x100] sm:$0xff]
    %v1858 = vld [vmem:[#allocation14 + $0x108] sm:$0xff]
    %v1859 = vld [vmem:[#allocation14 + $0x110] sm:$0xff]
    %v1860 = vld [vmem:[#allocation14 + $0x118] sm:$0xff]
    %v1861 = vld [vmem:[#allocation14 + $0x120] sm:$0xff]
    %v1862 = vld [vmem:[#allocation14 + $0x128] sm:$0xff]
    %v1863 = vld [vmem:[#allocation14 + $0x130] sm:$0xff]
    %v1864 = vld [vmem:[#allocation14 + $0x138] sm:$0xff]
    %v1865 = vld [vmem:[#allocation14 + $0x140] sm:$0xff]
    %v1866 = vld [vmem:[#allocation14 + $0x148] sm:$0xff]
    %v1867 = vld [vmem:[#allocation14 + $0x150] sm:$0xff]
    %v1868 = vld [vmem:[#allocation14 + $0x158] sm:$0xff]
    %v1869 = vld [vmem:[#allocation14 + $0x160] sm:$0xff]
    %v1870 = vld [vmem:[#allocation14 + $0x168] sm:$0xff]
    %v1871 = vld [vmem:[#allocation14 + $0x170] sm:$0xff]
    %v1872 = vld [vmem:[#allocation14 + $0x178] sm:$0xff]
    %v1873 = vld [vmem:[%s12] sm:$0x3]
    %v1875 = vperm.slane %v1873, 0
    %v1876 = vperm.slane %v1873, 1
    %v1927 = vunpack.c.l.b16 %v1825
    %v1928 = vunpack.c.h.b16 %v1825
    %v1929 = vunpack.c.l.b16 %v1826
    %v1930 = vunpack.c.h.b16 %v1826
    %v1931 = vunpack.c.l.b16 %v1827
    %v1932 = vunpack.c.h.b16 %v1827
    %v1933 = vunpack.c.l.b16 %v1828
    %v1934 = vunpack.c.h.b16 %v1828
    %v1935 = vunpack.c.l.b16 %v1829
    %v1936 = vunpack.c.h.b16 %v1829
    %v1937 = vunpack.c.l.b16 %v1830
    %v1938 = vunpack.c.h.b16 %v1830
    %v1939 = vunpack.c.l.b16 %v1831
    %v1940 = vunpack.c.h.b16 %v1831
    %v1941 = vunpack.c.l.b16 %v1832
    %v1942 = vunpack.c.h.b16 %v1832
    %v1943 = vunpack.c.l.b16 %v1833
    %v1944 = vunpack.c.h.b16 %v1833
    %v1945 = vunpack.c.l.b16 %v1834
    %v1946 = vunpack.c.h.b16 %v1834
    %v1947 = vunpack.c.l.b16 %v1835
    %v1948 = vunpack.c.h.b16 %v1835
    %v1949 = vunpack.c.l.b16 %v1836
    %v1950 = vunpack.c.h.b16 %v1836
    %v1951 = vunpack.c.l.b16 %v1837
    %v1952 = vunpack.c.h.b16 %v1837
    %v1953 = vunpack.c.l.b16 %v1838
    %v1954 = vunpack.c.h.b16 %v1838
    %v1955 = vunpack.c.l.b16 %v1839
    %v1956 = vunpack.c.h.b16 %v1839
    %v1957 = vunpack.c.l.b16 %v1840
    %v1958 = vunpack.c.h.b16 %v1840
    %v1959 = vunpack.c.l.b16 %v1841
    %v1960 = vunpack.c.h.b16 %v1841
    %v1961 = vunpack.c.l.b16 %v1842
    %v1962 = vunpack.c.h.b16 %v1842
    %v1963 = vunpack.c.l.b16 %v1843
    %v1964 = vunpack.c.h.b16 %v1843
    %v1965 = vunpack.c.l.b16 %v1844
    %v1966 = vunpack.c.h.b16 %v1844
    %v1967 = vunpack.c.l.b16 %v1845
    %v1968 = vunpack.c.h.b16 %v1845
    %v1969 = vunpack.c.l.b16 %v1846
    %v1970 = vunpack.c.h.b16 %v1846
    %v1971 = vunpack.c.l.b16 %v1847
    %v1972 = vunpack.c.h.b16 %v1847
    %v1973 = vunpack.c.l.b16 %v1848
    %v1974 = vunpack.c.h.b16 %v1848
    %v1975 = vunpack.c.l.b16 %v1849
    %v1976 = vunpack.c.h.b16 %v1849
    %v1977 = vunpack.c.l.b16 %v1850
    %v1978 = vunpack.c.h.b16 %v1850
    %v1979 = vunpack.c.l.b16 %v1851
    %v1980 = vunpack.c.h.b16 %v1851
    %v1981 = vunpack.c.l.b16 %v1852
    %v1982 = vunpack.c.h.b16 %v1852
    %v1983 = vunpack.c.l.b16 %v1853
    %v1984 = vunpack.c.h.b16 %v1853
    %v1985 = vunpack.c.l.b16 %v1854
    %v1986 = vunpack.c.h.b16 %v1854
    %v1987 = vunpack.c.l.b16 %v1855
    %v1988 = vunpack.c.h.b16 %v1855
    %v1989 = vunpack.c.l.b16 %v1856
    %v1990 = vunpack.c.h.b16 %v1856
    %v1991 = vunpack.c.l.b16 %v1857
    %v1992 = vunpack.c.h.b16 %v1857
    %v1993 = vunpack.c.l.b16 %v1858
    %v1994 = vunpack.c.h.b16 %v1858
    %v1995 = vunpack.c.l.b16 %v1859
    %v1996 = vunpack.c.h.b16 %v1859
    %v1997 = vunpack.c.l.b16 %v1860
    %v1998 = vunpack.c.h.b16 %v1860
    %v1999 = vunpack.c.l.b16 %v1861
    %v2000 = vunpack.c.h.b16 %v1861
    %v2001 = vunpack.c.l.b16 %v1862
    %v2002 = vunpack.c.h.b16 %v1862
    %v2003 = vunpack.c.l.b16 %v1863
    %v2004 = vunpack.c.h.b16 %v1863
    %v2005 = vunpack.c.l.b16 %v1864
    %v2006 = vunpack.c.h.b16 %v1864
    %v2007 = vunpack.c.l.b16 %v1865
    %v2008 = vunpack.c.h.b16 %v1865
    %v2009 = vunpack.c.l.b16 %v1866
    %v2010 = vunpack.c.h.b16 %v1866
    %v2011 = vunpack.c.l.b16 %v1867
    %v2012 = vunpack.c.h.b16 %v1867
    %v2013 = vunpack.c.l.b16 %v1868
    %v2014 = vunpack.c.h.b16 %v1868
    %v2015 = vunpack.c.l.b16 %v1869
    %v2016 = vunpack.c.h.b16 %v1869
    %v2017 = vunpack.c.l.b16 %v1870
    %v2018 = vunpack.c.h.b16 %v1870
    %v2019 = vunpack.c.l.b16 %v1871
    %v2020 = vunpack.c.h.b16 %v1871
    %v2021 = vunpack.c.l.b16 %v1872
    %v2022 = vunpack.c.h.b16 %v1872
    %v2023 = vpack.c.b16 %v1929, %v1927
    %v2024 = vpack.c.b16 %v1930, %v1928
    %v2025 = vpack.c.b16 %v1933, %v1931
    %v2026 = vpack.c.b16 %v1934, %v1932
    %v2027 = vpack.c.b16 %v1937, %v1935
    %v2028 = vpack.c.b16 %v1938, %v1936
    %v2029 = vpack.c.b16 %v1941, %v1939
    %v2030 = vpack.c.b16 %v1942, %v1940
    %v2031 = vpack.c.b16 %v1945, %v1943
    %v2032 = vpack.c.b16 %v1946, %v1944
    %v2033 = vpack.c.b16 %v1949, %v1947
    %v2034 = vpack.c.b16 %v1950, %v1948
    %v2035 = vpack.c.b16 %v1953, %v1951
    %v2036 = vpack.c.b16 %v1954, %v1952
    %v2037 = vpack.c.b16 %v1957, %v1955
    %v2038 = vpack.c.b16 %v1958, %v1956
    %v2039 = vpack.c.b16 %v1961, %v1959
    %v2040 = vpack.c.b16 %v1962, %v1960
    %v2041 = vpack.c.b16 %v1965, %v1963
    %v2042 = vpack.c.b16 %v1966, %v1964
    %v2043 = vpack.c.b16 %v1969, %v1967
    %v2044 = vpack.c.b16 %v1970, %v1968
    %v2045 = vpack.c.b16 %v1973, %v1971
    %v2046 = vpack.c.b16 %v1974, %v1972
    %v2047 = vpack.c.b16 %v1977, %v1975
    %v2048 = vpack.c.b16 %v1978, %v1976
    %v2049 = vpack.c.b16 %v1981, %v1979
    %v2050 = vpack.c.b16 %v1982, %v1980
    %v2051 = vpack.c.b16 %v1985, %v1983
    %v2052 = vpack.c.b16 %v1986, %v1984
    %v2053 = vpack.c.b16 %v1989, %v1987
    %v2054 = vpack.c.b16 %v1990, %v1988
    %v2055 = vpack.c.b16 %v1993, %v1991
    %v2056 = vpack.c.b16 %v1994, %v1992
    %v2057 = vpack.c.b16 %v1997, %v1995
    %v2058 = vpack.c.b16 %v1998, %v1996
    %v2059 = vpack.c.b16 %v2001, %v1999
    %v2060 = vpack.c.b16 %v2002, %v2000
    %v2061 = vpack.c.b16 %v2005, %v2003
    %v2062 = vpack.c.b16 %v2006, %v2004
    %v2063 = vpack.c.b16 %v2009, %v2007
    %v2064 = vpack.c.b16 %v2010, %v2008
    %v2065 = vpack.c.b16 %v2013, %v2011
    %v2066 = vpack.c.b16 %v2014, %v2012
    %v2067 = vpack.c.b16 %v2017, %v2015
    %v2068 = vpack.c.b16 %v2018, %v2016
    %v2069 = vpack.c.b16 %v2021, %v2019
    %v2070 = vpack.c.b16 %v2022, %v2020
    %2119 = vmatpush.bf16.msra.mxu0 %v2037
    %2120 = vmatpush.bf16.msra.mxu0 %v2035
    %2121 = vmatpush.bf16.msra.mxu0 %v2033
    %2122 = vmatpush.bf16.msra.mxu0 %v2031
    %2123 = vmatpush.bf16.msra.mxu0 %v2029
    %2124 = vmatpush.bf16.msra.mxu0 %v2027
    %2125 = vmatpush.bf16.msra.mxu0 %v2025
    %2126 = vmatpush.bf16.msra.mxu0 %v2023
    %2127 = vmatmul.bf16.gmra.mxu0 %v1822
    %v2128 = vpop.f32.mrf.mxu0
    %v2129 = vadd.f32 %v1875, %v2128
    %v2130 = vpop.f32.mrf.mxu0
    %2131 = vdwg.mxu0
    %2132 = vmatpush.bf16.msra.mxu0 %v2053
    %2133 = vmatpush.bf16.msra.mxu0 %v2051
    %2134 = vmatpush.bf16.msra.mxu0 %v2049
    %2135 = vmatpush.bf16.msra.mxu0 %v2047
    %2136 = vmatpush.bf16.msra.mxu0 %v2045
    %2137 = vmatpush.bf16.msra.mxu0 %v2043
    %2138 = vmatpush.bf16.msra.mxu0 %v2041
    %2139 = vmatpush.bf16.msra.mxu0 %v2039
    %2140 = vmatmul.bf16.gmra.mxu0 %v1823
    %v2141 = vpop.f32.mrf.mxu0
    %v2142 = vadd.f32 %v2129, %v2141
    %v2143 = vpop.f32.mrf.mxu0
    %2144 = vdwg.mxu0
    %2145 = vmatpush.bf16.msra.mxu0 %v2069
    %2146 = vmatpush.bf16.msra.mxu0 %v2067
    %2147 = vmatpush.bf16.msra.mxu0 %v2065
    %2148 = vmatpush.bf16.msra.mxu0 %v2063
    %2149 = vmatpush.bf16.msra.mxu0 %v2061
    %2150 = vmatpush.bf16.msra.mxu0 %v2059
    %2151 = vmatpush.bf16.msra.mxu0 %v2057
    %2152 = vmatpush.bf16.msra.mxu0 %v2055
    %2153 = vmatmul.bf16.gmra.mxu0 %v1824
    %v2154 = vpop.f32.mrf.mxu0
    %v2155 = vadd.f32 %v2142, %v2154
    %v2156 = vpop.f32.mrf.mxu0
    %2157 = vdwg.mxu0
    %2158 = vmatpush.bf16.msra.mxu0 %v2038
    %2159 = vmatpush.bf16.msra.mxu0 %v2036
    %2160 = vmatpush.bf16.msra.mxu0 %v2034
    %2161 = vmatpush.bf16.msra.mxu0 %v2032
    %2162 = vmatpush.bf16.msra.mxu0 %v2030
    %2163 = vmatpush.bf16.msra.mxu0 %v2028
    %2164 = vmatpush.bf16.msra.mxu0 %v2026
    %2165 = vmatpush.bf16.msra.mxu0 %v2024
    %2166 = vmatmul.bf16.gmra.mxu0 %v1822
    %v2167 = vpop.f32.mrf.mxu0
    %v2168 = vadd.f32 %v1876, %v2167
    %v2169 = vpop.f32.mrf.mxu0
    %2170 = vdwg.mxu0
    %2171 = vmatpush.bf16.msra.mxu0 %v2054
    %2172 = vmatpush.bf16.msra.mxu0 %v2052
    %2173 = vmatpush.bf16.msra.mxu0 %v2050
    %2174 = vmatpush.bf16.msra.mxu0 %v2048
    %2175 = vmatpush.bf16.msra.mxu0 %v2046
    %2176 = vmatpush.bf16.msra.mxu0 %v2044
    %2177 = vmatpush.bf16.msra.mxu0 %v2042
    %2178 = vmatpush.bf16.msra.mxu0 %v2040
    %2179 = vmatmul.bf16.gmra.mxu0 %v1823
    %v2180 = vpop.f32.mrf.mxu0
    %v2181 = vadd.f32 %v2168, %v2180
    %v2182 = vpop.f32.mrf.mxu0
    %2183 = vdwg.mxu0
    %2184 = vmatpush.bf16.msra.mxu0 %v2070
    %2185 = vmatpush.bf16.msra.mxu0 %v2068
    %2186 = vmatpush.bf16.msra.mxu0 %v2066
    %2187 = vmatpush.bf16.msra.mxu0 %v2064
    %2188 = vmatpush.bf16.msra.mxu0 %v2062
    %2189 = vmatpush.bf16.msra.mxu0 %v2060
    %2190 = vmatpush.bf16.msra.mxu0 %v2058
    %2191 = vmatpush.bf16.msra.mxu0 %v2056
    %2192 = vmatmul.bf16.gmra.mxu0 %v1824
    %v2193 = vpop.f32.mrf.mxu0
    %v2194 = vadd.f32 %v2181, %v2193
    %v2195 = vpop.f32.mrf.mxu0
    %2196 = vdwg.mxu0
    %vm2197 = vcmp.gt.f32.partialorder %v2155, 0.0
    %vm2198 = vcmp.gt.f32.partialorder %v2194, 0.0
    %v2199 = vmul.f32 %v2155, 0.2
    %v2200 = vmul.f32 %v2194, 0.2
    %v2201 = vsel %vm2197, %v2155, %v2199
    %v2202 = vsel %vm2198, %v2194, %v2200
    %vm2203 = vcmp.gt.f32.partialorder %v2201, 0.0
    %vm2204 = vcmp.gt.f32.partialorder %v2202, 0.0
    %v2205 = vmul.f32 %v2201, 0.2
    %v2206 = vmul.f32 %v2202, 0.2
    %v2207 = vsel %vm2203, %v2201, %v2205
    %v2208 = vsel %vm2204, %v2202, %v2206
    %v2209 = vpack.c.bf16 %v2207, %v2207
    %v2210 = vpack.c.bf16 %v2208, %v2208
    %v2211 = vld [vmem:[%s13] sm:$0xff]
    %v2212 = vld [vmem:[%s13 + $0x8] sm:$0xff]
    %v2213 = vld [vmem:[%s13 + $0x10] sm:$0xff]
    %v2214 = vld [vmem:[%s13 + $0x18] sm:$0xff]
    %v2215 = vld [vmem:[%s13 + $0x20] sm:$0xff]
    %v2216 = vld [vmem:[%s13 + $0x28] sm:$0xff]
    %v2217 = vld [vmem:[%s13 + $0x30] sm:$0xff]
    %v2218 = vld [vmem:[%s13 + $0x38] sm:$0xff]
    %v2219 = vld [vmem:[%s13 + $0x40] sm:$0xff]
    %v2220 = vld [vmem:[%s13 + $0x48] sm:$0xff]
    %v2221 = vld [vmem:[%s13 + $0x50] sm:$0xff]
    %v2222 = vld [vmem:[%s13 + $0x58] sm:$0xff]
    %v2223 = vld [vmem:[%s13 + $0x60] sm:$0xff]
    %v2224 = vld [vmem:[%s13 + $0x68] sm:$0xff]
    %v2225 = vld [vmem:[%s13 + $0x70] sm:$0xff]
    %v2226 = vld [vmem:[%s13 + $0x78] sm:$0xff]
    %v2227 = vld [vmem:[%s13 + $0x80] sm:$0xff]
    %v2228 = vld [vmem:[%s13 + $0x88] sm:$0xff]
    %v2229 = vld [vmem:[%s13 + $0x90] sm:$0xff]
    %v2230 = vld [vmem:[%s13 + $0x98] sm:$0xff]
    %v2231 = vld [vmem:[%s13 + $0xa0] sm:$0xff]
    %v2232 = vld [vmem:[%s13 + $0xa8] sm:$0xff]
    %v2233 = vld [vmem:[%s13 + $0xb0] sm:$0xff]
    %v2234 = vld [vmem:[%s13 + $0xb8] sm:$0xff]
    %v2235 = vld [vmem:[%s13 + $0xc0] sm:$0xff]
    %v2236 = vld [vmem:[%s13 + $0xc8] sm:$0xff]
    %v2237 = vld [vmem:[%s13 + $0xd0] sm:$0xff]
    %v2238 = vld [vmem:[%s13 + $0xd8] sm:$0xff]
    %v2239 = vld [vmem:[%s13 + $0xe0] sm:$0xff]
    %v2240 = vld [vmem:[%s13 + $0xe8] sm:$0xff]
    %v2241 = vld [vmem:[%s13 + $0xf0] sm:$0xff]
    %v2242 = vld [vmem:[%s13 + $0xf8] sm:$0xff]
    %v2243 = vld [vmem:[#allocation15] sm:$0x3]
    %v2245 = vperm.slane %v2243, 0
    %v2246 = vperm.slane %v2243, 1
    %v2281 = vunpack.c.l.b16 %v2211
    %v2282 = vunpack.c.h.b16 %v2211
    %v2283 = vunpack.c.l.b16 %v2212
    %v2284 = vunpack.c.h.b16 %v2212
    %v2285 = vunpack.c.l.b16 %v2213
    %v2286 = vunpack.c.h.b16 %v2213
    %v2287 = vunpack.c.l.b16 %v2214
    %v2288 = vunpack.c.h.b16 %v2214
    %v2289 = vunpack.c.l.b16 %v2215
    %v2290 = vunpack.c.h.b16 %v2215
    %v2291 = vunpack.c.l.b16 %v2216
    %v2292 = vunpack.c.h.b16 %v2216
    %v2293 = vunpack.c.l.b16 %v2217
    %v2294 = vunpack.c.h.b16 %v2217
    %v2295 = vunpack.c.l.b16 %v2218
    %v2296 = vunpack.c.h.b16 %v2218
    %v2297 = vunpack.c.l.b16 %v2219
    %v2298 = vunpack.c.h.b16 %v2219
    %v2299 = vunpack.c.l.b16 %v2220
    %v2300 = vunpack.c.h.b16 %v2220
    %v2301 = vunpack.c.l.b16 %v2221
    %v2302 = vunpack.c.h.b16 %v2221
    %v2303 = vunpack.c.l.b16 %v2222
    %v2304 = vunpack.c.h.b16 %v2222
    %v2305 = vunpack.c.l.b16 %v2223
    %v2306 = vunpack.c.h.b16 %v2223
    %v2307 = vunpack.c.l.b16 %v2224
    %v2308 = vunpack.c.h.b16 %v2224
    %v2309 = vunpack.c.l.b16 %v2225
    %v2310 = vunpack.c.h.b16 %v2225
    %v2311 = vunpack.c.l.b16 %v2226
    %v2312 = vunpack.c.h.b16 %v2226
    %v2313 = vunpack.c.l.b16 %v2227
    %v2314 = vunpack.c.h.b16 %v2227
    %v2315 = vunpack.c.l.b16 %v2228
    %v2316 = vunpack.c.h.b16 %v2228
    %v2317 = vunpack.c.l.b16 %v2229
    %v2318 = vunpack.c.h.b16 %v2229
    %v2319 = vunpack.c.l.b16 %v2230
    %v2320 = vunpack.c.h.b16 %v2230
    %v2321 = vunpack.c.l.b16 %v2231
    %v2322 = vunpack.c.h.b16 %v2231
    %v2323 = vunpack.c.l.b16 %v2232
    %v2324 = vunpack.c.h.b16 %v2232
    %v2325 = vunpack.c.l.b16 %v2233
    %v2326 = vunpack.c.h.b16 %v2233
    %v2327 = vunpack.c.l.b16 %v2234
    %v2328 = vunpack.c.h.b16 %v2234
    %v2329 = vunpack.c.l.b16 %v2235
    %v2330 = vunpack.c.h.b16 %v2235
    %v2331 = vunpack.c.l.b16 %v2236
    %v2332 = vunpack.c.h.b16 %v2236
    %v2333 = vunpack.c.l.b16 %v2237
    %v2334 = vunpack.c.h.b16 %v2237
    %v2335 = vunpack.c.l.b16 %v2238
    %v2336 = vunpack.c.h.b16 %v2238
    %v2337 = vunpack.c.l.b16 %v2239
    %v2338 = vunpack.c.h.b16 %v2239
    %v2339 = vunpack.c.l.b16 %v2240
    %v2340 = vunpack.c.h.b16 %v2240
    %v2341 = vunpack.c.l.b16 %v2241
    %v2342 = vunpack.c.h.b16 %v2241
    %v2343 = vunpack.c.l.b16 %v2242
    %v2344 = vunpack.c.h.b16 %v2242
    %v2345 = vpack.c.b16 %v2283, %v2281
    %v2346 = vpack.c.b16 %v2284, %v2282
    %v2347 = vpack.c.b16 %v2287, %v2285
    %v2348 = vpack.c.b16 %v2288, %v2286
    %v2349 = vpack.c.b16 %v2291, %v2289
    %v2350 = vpack.c.b16 %v2292, %v2290
    %v2351 = vpack.c.b16 %v2295, %v2293
    %v2352 = vpack.c.b16 %v2296, %v2294
    %v2353 = vpack.c.b16 %v2299, %v2297
    %v2354 = vpack.c.b16 %v2300, %v2298
    %v2355 = vpack.c.b16 %v2303, %v2301
    %v2356 = vpack.c.b16 %v2304, %v2302
    %v2357 = vpack.c.b16 %v2307, %v2305
    %v2358 = vpack.c.b16 %v2308, %v2306
    %v2359 = vpack.c.b16 %v2311, %v2309
    %v2360 = vpack.c.b16 %v2312, %v2310
    %v2361 = vpack.c.b16 %v2315, %v2313
    %v2362 = vpack.c.b16 %v2316, %v2314
    %v2363 = vpack.c.b16 %v2319, %v2317
    %v2364 = vpack.c.b16 %v2320, %v2318
    %v2365 = vpack.c.b16 %v2323, %v2321
    %v2366 = vpack.c.b16 %v2324, %v2322
    %v2367 = vpack.c.b16 %v2327, %v2325
    %v2368 = vpack.c.b16 %v2328, %v2326
    %v2369 = vpack.c.b16 %v2331, %v2329
    %v2370 = vpack.c.b16 %v2332, %v2330
    %v2371 = vpack.c.b16 %v2335, %v2333
    %v2372 = vpack.c.b16 %v2336, %v2334
    %v2373 = vpack.c.b16 %v2339, %v2337
    %v2374 = vpack.c.b16 %v2340, %v2338
    %v2375 = vpack.c.b16 %v2343, %v2341
    %v2376 = vpack.c.b16 %v2344, %v2342
    %2409 = vmatpush.bf16.msra.mxu0 %v2359
    %2410 = vmatpush.bf16.msra.mxu0 %v2357
    %2411 = vmatpush.bf16.msra.mxu0 %v2355
    %2412 = vmatpush.bf16.msra.mxu0 %v2353
    %2413 = vmatpush.bf16.msra.mxu0 %v2351
    %2414 = vmatpush.bf16.msra.mxu0 %v2349
    %2415 = vmatpush.bf16.msra.mxu0 %v2347
    %2416 = vmatpush.bf16.msra.mxu0 %v2345
    %2417 = vmatmul.bf16.gmra.mxu0 %v2209
    %v2418 = vpop.f32.mrf.mxu0
    %v2419 = vadd.f32 %v2245, %v2418
    %v2420 = vpop.f32.mrf.mxu0
    %2421 = vdwg.mxu0
    %2422 = vmatpush.bf16.msra.mxu0 %v2375
    %2423 = vmatpush.bf16.msra.mxu0 %v2373
    %2424 = vmatpush.bf16.msra.mxu0 %v2371
    %2425 = vmatpush.bf16.msra.mxu0 %v2369
    %2426 = vmatpush.bf16.msra.mxu0 %v2367
    %2427 = vmatpush.bf16.msra.mxu0 %v2365
    %2428 = vmatpush.bf16.msra.mxu0 %v2363
    %2429 = vmatpush.bf16.msra.mxu0 %v2361
    %2430 = vmatmul.bf16.gmra.mxu0 %v2210
    %v2431 = vpop.f32.mrf.mxu0
    %v2432 = vadd.f32 %v2419, %v2431
    %v2433 = vpop.f32.mrf.mxu0
    %2434 = vdwg.mxu0
    %2435 = vmatpush.bf16.msra.mxu0 %v2360
    %2436 = vmatpush.bf16.msra.mxu0 %v2358
    %2437 = vmatpush.bf16.msra.mxu0 %v2356
    %2438 = vmatpush.bf16.msra.mxu0 %v2354
    %2439 = vmatpush.bf16.msra.mxu0 %v2352
    %2440 = vmatpush.bf16.msra.mxu0 %v2350
    %2441 = vmatpush.bf16.msra.mxu0 %v2348
    %2442 = vmatpush.bf16.msra.mxu0 %v2346
    %2443 = vmatmul.bf16.gmra.mxu0 %v2209
    %v2444 = vpop.f32.mrf.mxu0
    %v2445 = vadd.f32 %v2246, %v2444
    %v2446 = vpop.f32.mrf.mxu0
    %2447 = vdwg.mxu0
    %2448 = vmatpush.bf16.msra.mxu0 %v2376
    %2449 = vmatpush.bf16.msra.mxu0 %v2374
    %2450 = vmatpush.bf16.msra.mxu0 %v2372
    %2451 = vmatpush.bf16.msra.mxu0 %v2370
    %2452 = vmatpush.bf16.msra.mxu0 %v2368
    %2453 = vmatpush.bf16.msra.mxu0 %v2366
    %2454 = vmatpush.bf16.msra.mxu0 %v2364
    %2455 = vmatpush.bf16.msra.mxu0 %v2362
    %2456 = vmatmul.bf16.gmra.mxu0 %v2210
    %v2457 = vpop.f32.mrf.mxu0
    %v2458 = vadd.f32 %v2445, %v2457
    %v2459 = vpop.f32.mrf.mxu0
    %2460 = vdwg.mxu0
    %vm2461 = vcmp.gt.f32.partialorder %v2432, 0.0
    %vm2462 = vcmp.gt.f32.partialorder %v2458, 0.0
    %v2463 = vmul.f32 %v2432, 0.2
    %v2464 = vmul.f32 %v2458, 0.2
    %v2465 = vsel %vm2461, %v2432, %v2463
    %v2466 = vsel %vm2462, %v2458, %v2464
    %vm2467 = vcmp.gt.f32.partialorder %v2465, 0.0
    %vm2468 = vcmp.gt.f32.partialorder %v2466, 0.0
    %v2469 = vmul.f32 %v2465, 0.2
    %v2470 = vmul.f32 %v2466, 0.2
    %v2471 = vsel %vm2467, %v2465, %v2469
    %v2472 = vsel %vm2468, %v2466, %v2470
    %v2473 = vpack.c.bf16 %v2471, %v2471
    %v2474 = vpack.c.bf16 %v2472, %v2472
    %v2475 = vld [vmem:[#allocation17] sm:$0xff]
    %v2476 = vld [vmem:[#allocation17 + $0x8] sm:$0xff]
    %v2477 = vld [vmem:[#allocation17 + $0x10] sm:$0xff]
    %v2478 = vld [vmem:[#allocation17 + $0x18] sm:$0xff]
    %v2479 = vld [vmem:[#allocation17 + $0x20] sm:$0xff]
    %v2480 = vld [vmem:[#allocation17 + $0x28] sm:$0xff]
    %v2481 = vld [vmem:[#allocation17 + $0x30] sm:$0xff]
    %v2482 = vld [vmem:[#allocation17 + $0x38] sm:$0xff]
    %v2483 = vld [vmem:[#allocation17 + $0x40] sm:$0xff]
    %v2484 = vld [vmem:[#allocation17 + $0x48] sm:$0xff]
    %v2485 = vld [vmem:[#allocation17 + $0x50] sm:$0xff]
    %v2486 = vld [vmem:[#allocation17 + $0x58] sm:$0xff]
    %v2487 = vld [vmem:[#allocation17 + $0x60] sm:$0xff]
    %v2488 = vld [vmem:[#allocation17 + $0x68] sm:$0xff]
    %v2489 = vld [vmem:[#allocation17 + $0x70] sm:$0xff]
    %v2490 = vld [vmem:[#allocation17 + $0x78] sm:$0xff]
    %v2491 = vld [vmem:[#allocation17 + $0x80] sm:$0xff]
    %v2492 = vld [vmem:[#allocation17 + $0x88] sm:$0xff]
    %v2493 = vld [vmem:[#allocation17 + $0x90] sm:$0xff]
    %v2494 = vld [vmem:[#allocation17 + $0x98] sm:$0xff]
    %v2495 = vld [vmem:[#allocation17 + $0xa0] sm:$0xff]
    %v2496 = vld [vmem:[#allocation17 + $0xa8] sm:$0xff]
    %v2497 = vld [vmem:[#allocation17 + $0xb0] sm:$0xff]
    %v2498 = vld [vmem:[#allocation17 + $0xb8] sm:$0xff]
    %v2499 = vld [vmem:[#allocation17 + $0xc0] sm:$0xff]
    %v2500 = vld [vmem:[#allocation17 + $0xc8] sm:$0xff]
    %v2501 = vld [vmem:[#allocation17 + $0xd0] sm:$0xff]
    %v2502 = vld [vmem:[#allocation17 + $0xd8] sm:$0xff]
    %v2503 = vld [vmem:[#allocation17 + $0xe0] sm:$0xff]
    %v2504 = vld [vmem:[#allocation17 + $0xe8] sm:$0xff]
    %v2505 = vld [vmem:[#allocation17 + $0xf0] sm:$0xff]
    %v2506 = vld [vmem:[#allocation17 + $0xf8] sm:$0xff]
    %v2507 = vld [vmem:[%s16] sm:$0x3]
    %v2509 = vperm.slane %v2507, 0
    %v2510 = vperm.slane %v2507, 1
    %v2545 = vunpack.c.l.b16 %v2475
    %v2546 = vunpack.c.h.b16 %v2475
    %v2547 = vunpack.c.l.b16 %v2476
    %v2548 = vunpack.c.h.b16 %v2476
    %v2549 = vunpack.c.l.b16 %v2477
    %v2550 = vunpack.c.h.b16 %v2477
    %v2551 = vunpack.c.l.b16 %v2478
    %v2552 = vunpack.c.h.b16 %v2478
    %v2553 = vunpack.c.l.b16 %v2479
    %v2554 = vunpack.c.h.b16 %v2479
    %v2555 = vunpack.c.l.b16 %v2480
    %v2556 = vunpack.c.h.b16 %v2480
    %v2557 = vunpack.c.l.b16 %v2481
    %v2558 = vunpack.c.h.b16 %v2481
    %v2559 = vunpack.c.l.b16 %v2482
    %v2560 = vunpack.c.h.b16 %v2482
    %v2561 = vunpack.c.l.b16 %v2483
    %v2562 = vunpack.c.h.b16 %v2483
    %v2563 = vunpack.c.l.b16 %v2484
    %v2564 = vunpack.c.h.b16 %v2484
    %v2565 = vunpack.c.l.b16 %v2485
    %v2566 = vunpack.c.h.b16 %v2485
    %v2567 = vunpack.c.l.b16 %v2486
    %v2568 = vunpack.c.h.b16 %v2486
    %v2569 = vunpack.c.l.b16 %v2487
    %v2570 = vunpack.c.h.b16 %v2487
    %v2571 = vunpack.c.l.b16 %v2488
    %v2572 = vunpack.c.h.b16 %v2488
    %v2573 = vunpack.c.l.b16 %v2489
    %v2574 = vunpack.c.h.b16 %v2489
    %v2575 = vunpack.c.l.b16 %v2490
    %v2576 = vunpack.c.h.b16 %v2490
    %v2577 = vunpack.c.l.b16 %v2491
    %v2578 = vunpack.c.h.b16 %v2491
    %v2579 = vunpack.c.l.b16 %v2492
    %v2580 = vunpack.c.h.b16 %v2492
    %v2581 = vunpack.c.l.b16 %v2493
    %v2582 = vunpack.c.h.b16 %v2493
    %v2583 = vunpack.c.l.b16 %v2494
    %v2584 = vunpack.c.h.b16 %v2494
    %v2585 = vunpack.c.l.b16 %v2495
    %v2586 = vunpack.c.h.b16 %v2495
    %v2587 = vunpack.c.l.b16 %v2496
    %v2588 = vunpack.c.h.b16 %v2496
    %v2589 = vunpack.c.l.b16 %v2497
    %v2590 = vunpack.c.h.b16 %v2497
    %v2591 = vunpack.c.l.b16 %v2498
    %v2592 = vunpack.c.h.b16 %v2498
    %v2593 = vunpack.c.l.b16 %v2499
    %v2594 = vunpack.c.h.b16 %v2499
    %v2595 = vunpack.c.l.b16 %v2500
    %v2596 = vunpack.c.h.b16 %v2500
    %v2597 = vunpack.c.l.b16 %v2501
    %v2598 = vunpack.c.h.b16 %v2501
    %v2599 = vunpack.c.l.b16 %v2502
    %v2600 = vunpack.c.h.b16 %v2502
    %v2601 = vunpack.c.l.b16 %v2503
    %v2602 = vunpack.c.h.b16 %v2503
    %v2603 = vunpack.c.l.b16 %v2504
    %v2604 = vunpack.c.h.b16 %v2504
    %v2605 = vunpack.c.l.b16 %v2505
    %v2606 = vunpack.c.h.b16 %v2505
    %v2607 = vunpack.c.l.b16 %v2506
    %v2608 = vunpack.c.h.b16 %v2506
    %v2609 = vpack.c.b16 %v2547, %v2545
    %v2610 = vpack.c.b16 %v2548, %v2546
    %v2611 = vpack.c.b16 %v2551, %v2549
    %v2612 = vpack.c.b16 %v2552, %v2550
    %v2613 = vpack.c.b16 %v2555, %v2553
    %v2614 = vpack.c.b16 %v2556, %v2554
    %v2615 = vpack.c.b16 %v2559, %v2557
    %v2616 = vpack.c.b16 %v2560, %v2558
    %v2617 = vpack.c.b16 %v2563, %v2561
    %v2618 = vpack.c.b16 %v2564, %v2562
    %v2619 = vpack.c.b16 %v2567, %v2565
    %v2620 = vpack.c.b16 %v2568, %v2566
    %v2621 = vpack.c.b16 %v2571, %v2569
    %v2622 = vpack.c.b16 %v2572, %v2570
    %v2623 = vpack.c.b16 %v2575, %v2573
    %v2624 = vpack.c.b16 %v2576, %v2574
    %v2625 = vpack.c.b16 %v2579, %v2577
    %v2626 = vpack.c.b16 %v2580, %v2578
    %v2627 = vpack.c.b16 %v2583, %v2581
    %v2628 = vpack.c.b16 %v2584, %v2582
    %v2629 = vpack.c.b16 %v2587, %v2585
    %v2630 = vpack.c.b16 %v2588, %v2586
    %v2631 = vpack.c.b16 %v2591, %v2589
    %v2632 = vpack.c.b16 %v2592, %v2590
    %v2633 = vpack.c.b16 %v2595, %v2593
    %v2634 = vpack.c.b16 %v2596, %v2594
    %v2635 = vpack.c.b16 %v2599, %v2597
    %v2636 = vpack.c.b16 %v2600, %v2598
    %v2637 = vpack.c.b16 %v2603, %v2601
    %v2638 = vpack.c.b16 %v2604, %v2602
    %v2639 = vpack.c.b16 %v2607, %v2605
    %v2640 = vpack.c.b16 %v2608, %v2606
    %2673 = vmatpush.bf16.msra.mxu0 %v2623
    %2674 = vmatpush.bf16.msra.mxu0 %v2621
    %2675 = vmatpush.bf16.msra.mxu0 %v2619
    %2676 = vmatpush.bf16.msra.mxu0 %v2617
    %2677 = vmatpush.bf16.msra.mxu0 %v2615
    %2678 = vmatpush.bf16.msra.mxu0 %v2613
    %2679 = vmatpush.bf16.msra.mxu0 %v2611
    %2680 = vmatpush.bf16.msra.mxu0 %v2609
    %2681 = vmatmul.bf16.gmra.mxu0 %v2473
    %v2682 = vpop.f32.mrf.mxu0
    %v2683 = vadd.f32 %v2509, %v2682
    %v2684 = vpop.f32.mrf.mxu0
    %2685 = vdwg.mxu0
    %2686 = vmatpush.bf16.msra.mxu0 %v2639
    %2687 = vmatpush.bf16.msra.mxu0 %v2637
    %2688 = vmatpush.bf16.msra.mxu0 %v2635
    %2689 = vmatpush.bf16.msra.mxu0 %v2633
    %2690 = vmatpush.bf16.msra.mxu0 %v2631
    %2691 = vmatpush.bf16.msra.mxu0 %v2629
    %2692 = vmatpush.bf16.msra.mxu0 %v2627
    %2693 = vmatpush.bf16.msra.mxu0 %v2625
    %2694 = vmatmul.bf16.gmra.mxu0 %v2474
    %v2695 = vpop.f32.mrf.mxu0
    %v2696 = vadd.f32 %v2683, %v2695
    %v2697 = vpop.f32.mrf.mxu0
    %2698 = vdwg.mxu0
    %2699 = vmatpush.bf16.msra.mxu0 %v2624
    %2700 = vmatpush.bf16.msra.mxu0 %v2622
    %2701 = vmatpush.bf16.msra.mxu0 %v2620
    %2702 = vmatpush.bf16.msra.mxu0 %v2618
    %2703 = vmatpush.bf16.msra.mxu0 %v2616
    %2704 = vmatpush.bf16.msra.mxu0 %v2614
    %2705 = vmatpush.bf16.msra.mxu0 %v2612
    %2706 = vmatpush.bf16.msra.mxu0 %v2610
    %2707 = vmatmul.bf16.gmra.mxu0 %v2473
    %v2708 = vpop.f32.mrf.mxu0
    %v2709 = vadd.f32 %v2510, %v2708
    %v2710 = vpop.f32.mrf.mxu0
    %2711 = vdwg.mxu0
    %2712 = vmatpush.bf16.msra.mxu0 %v2640
    %2713 = vmatpush.bf16.msra.mxu0 %v2638
    %2714 = vmatpush.bf16.msra.mxu0 %v2636
    %2715 = vmatpush.bf16.msra.mxu0 %v2634
    %2716 = vmatpush.bf16.msra.mxu0 %v2632
    %2717 = vmatpush.bf16.msra.mxu0 %v2630
    %2718 = vmatpush.bf16.msra.mxu0 %v2628
    %2719 = vmatpush.bf16.msra.mxu0 %v2626
    %2720 = vmatmul.bf16.gmra.mxu0 %v2474
    %v2721 = vpop.f32.mrf.mxu0
    %v2722 = vadd.f32 %v2709, %v2721
    %v2723 = vpop.f32.mrf.mxu0
    %2724 = vdwg.mxu0
    %vm2725 = vcmp.gt.f32.partialorder %v2696, 0.0
    %vm2726 = vcmp.gt.f32.partialorder %v2722, 0.0
    %v2727 = vmul.f32 %v2696, 0.2
    %v2728 = vmul.f32 %v2722, 0.2
    %v2729 = vsel %vm2725, %v2696, %v2727
    %v2730 = vsel %vm2726, %v2722, %v2728
    %vm2731 = vcmp.gt.f32.partialorder %v2729, 0.0
    %vm2732 = vcmp.gt.f32.partialorder %v2730, 0.0
    %v2733 = vmul.f32 %v2729, 0.2
    %v2734 = vmul.f32 %v2730, 0.2
    %v2735 = vsel %vm2731, %v2729, %v2733
    %v2736 = vsel %vm2732, %v2730, %v2734
    %v2737 = vpack.c.bf16 %v2735, %v2735
    %v2738 = vpack.c.bf16 %v2736, %v2736
    %v2739 = vld [vmem:[#allocation18] sm:$0xf]
    %v2740 = vld [vmem:[#allocation18 + $0x4] sm:$0xf]
    %v2741 = vld [vmem:[#allocation18 + $0x8] sm:$0xf]
    %v2742 = vld [vmem:[#allocation18 + $0xc] sm:$0xf]
    %v2743 = vld [vmem:[#allocation18 + $0x10] sm:$0xf]
    %v2744 = vld [vmem:[#allocation18 + $0x14] sm:$0xf]
    %v2745 = vld [vmem:[#allocation18 + $0x18] sm:$0xf]
    %v2746 = vld [vmem:[#allocation18 + $0x1c] sm:$0xf]
    %v2747 = vld [vmem:[#allocation18 + $0x20] sm:$0xf]
    %v2748 = vld [vmem:[#allocation18 + $0x24] sm:$0xf]
    %v2749 = vld [vmem:[#allocation18 + $0x28] sm:$0xf]
    %v2750 = vld [vmem:[#allocation18 + $0x2c] sm:$0xf]
    %v2751 = vld [vmem:[#allocation18 + $0x30] sm:$0xf]
    %v2752 = vld [vmem:[#allocation18 + $0x34] sm:$0xf]
    %v2753 = vld [vmem:[#allocation18 + $0x38] sm:$0xf]
    %v2754 = vld [vmem:[#allocation18 + $0x3c] sm:$0xf]
    %v2755 = vld [vmem:[#allocation18 + $0x40] sm:$0xf]
    %v2756 = vld [vmem:[#allocation18 + $0x44] sm:$0xf]
    %v2757 = vld [vmem:[#allocation18 + $0x48] sm:$0xf]
    %v2758 = vld [vmem:[#allocation18 + $0x4c] sm:$0xf]
    %v2759 = vld [vmem:[#allocation18 + $0x50] sm:$0xf]
    %v2760 = vld [vmem:[#allocation18 + $0x54] sm:$0xf]
    %v2761 = vld [vmem:[#allocation18 + $0x58] sm:$0xf]
    %v2762 = vld [vmem:[#allocation18 + $0x5c] sm:$0xf]
    %v2763 = vld [vmem:[#allocation18 + $0x60] sm:$0xf]
    %v2764 = vld [vmem:[#allocation18 + $0x64] sm:$0xf]
    %v2765 = vld [vmem:[#allocation18 + $0x68] sm:$0xf]
    %v2766 = vld [vmem:[#allocation18 + $0x6c] sm:$0xf]
    %v2767 = vld [vmem:[#allocation18 + $0x70] sm:$0xf]
    %v2768 = vld [vmem:[#allocation18 + $0x74] sm:$0xf]
    %v2769 = vld [vmem:[#allocation18 + $0x78] sm:$0xf]
    %v2770 = vld [vmem:[#allocation18 + $0x7c] sm:$0xf]
    %v2771 = vld [vmem:[%s18] sm:$0x1]
    %v2773 = vperm.slane %v2771, 0
    %v2807 = vunpack.c.l.b16 %v2739
    %v2808 = vunpack.c.l.b16 %v2740
    %v2809 = vunpack.c.l.b16 %v2741
    %v2810 = vunpack.c.l.b16 %v2742
    %v2811 = vunpack.c.l.b16 %v2743
    %v2812 = vunpack.c.l.b16 %v2744
    %v2813 = vunpack.c.l.b16 %v2745
    %v2814 = vunpack.c.l.b16 %v2746
    %v2815 = vunpack.c.l.b16 %v2747
    %v2816 = vunpack.c.l.b16 %v2748
    %v2817 = vunpack.c.l.b16 %v2749
    %v2818 = vunpack.c.l.b16 %v2750
    %v2819 = vunpack.c.l.b16 %v2751
    %v2820 = vunpack.c.l.b16 %v2752
    %v2821 = vunpack.c.l.b16 %v2753
    %v2822 = vunpack.c.l.b16 %v2754
    %v2823 = vunpack.c.l.b16 %v2755
    %v2824 = vunpack.c.l.b16 %v2756
    %v2825 = vunpack.c.l.b16 %v2757
    %v2826 = vunpack.c.l.b16 %v2758
    %v2827 = vunpack.c.l.b16 %v2759
    %v2828 = vunpack.c.l.b16 %v2760
    %v2829 = vunpack.c.l.b16 %v2761
    %v2830 = vunpack.c.l.b16 %v2762
    %v2831 = vunpack.c.l.b16 %v2763
    %v2832 = vunpack.c.l.b16 %v2764
    %v2833 = vunpack.c.l.b16 %v2765
    %v2834 = vunpack.c.l.b16 %v2766
    %v2835 = vunpack.c.l.b16 %v2767
    %v2836 = vunpack.c.l.b16 %v2768
    %v2837 = vunpack.c.l.b16 %v2769
    %v2838 = vunpack.c.l.b16 %v2770
    %v2839 = vpack.c.b16 %v2808, %v2807
    %v2840 = vpack.c.b16 %v2810, %v2809
    %v2841 = vpack.c.b16 %v2812, %v2811
    %v2842 = vpack.c.b16 %v2814, %v2813
    %v2843 = vpack.c.b16 %v2816, %v2815
    %v2844 = vpack.c.b16 %v2818, %v2817
    %v2845 = vpack.c.b16 %v2820, %v2819
    %v2846 = vpack.c.b16 %v2822, %v2821
    %v2847 = vpack.c.b16 %v2824, %v2823
    %v2848 = vpack.c.b16 %v2826, %v2825
    %v2849 = vpack.c.b16 %v2828, %v2827
    %v2850 = vpack.c.b16 %v2830, %v2829
    %v2851 = vpack.c.b16 %v2832, %v2831
    %v2852 = vpack.c.b16 %v2834, %v2833
    %v2853 = vpack.c.b16 %v2836, %v2835
    %v2854 = vpack.c.b16 %v2838, %v2837
    %2871 = vmatpush.bf16.msra.mxu0 %v2846
    %2872 = vmatpush.bf16.msra.mxu0 %v2845
    %2873 = vmatpush.bf16.msra.mxu0 %v2844
    %2874 = vmatpush.bf16.msra.mxu0 %v2843
    %2875 = vmatpush.bf16.msra.mxu0 %v2842
    %2876 = vmatpush.bf16.msra.mxu0 %v2841
    %2877 = vmatpush.bf16.msra.mxu0 %v2840
    %2878 = vmatpush.bf16.msra.mxu0 %v2839
    %2879 = vmatmul.bf16.gmra.mxu0 %v2737
    %v2880 = vpop.f32.mrf.mxu0
    %v2881 = vadd.f32 %v2773, %v2880
    %v2882 = vpop.f32.mrf.mxu0
    %2883 = vdwg.mxu0
    %2884 = vmatpush.bf16.msra.mxu0 %v2854
    %2885 = vmatpush.bf16.msra.mxu0 %v2853
    %2886 = vmatpush.bf16.msra.mxu0 %v2852
    %2887 = vmatpush.bf16.msra.mxu0 %v2851
    %2888 = vmatpush.bf16.msra.mxu0 %v2850
    %2889 = vmatpush.bf16.msra.mxu0 %v2849
    %2890 = vmatpush.bf16.msra.mxu0 %v2848
    %2891 = vmatpush.bf16.msra.mxu0 %v2847
    %2892 = vmatmul.bf16.gmra.mxu0 %v2738
    %v2893 = vpop.f32.mrf.mxu0
    %v2894 = vadd.f32 %v2881, %v2893
    %v2895 = vpop.f32.mrf.mxu0
    %2896 = vdwg.mxu0
    %2897 = vst [vmem:[#allocation20] sm:$0x3] %v2894
    // Predicated region
    $region118: #{tpu_custom_call.1} parent=1 // pred_check
      _
    $region119: #{tpu_custom_call.1} parent=1 // pred_check_branch
      %2899 = sbr.rel (0) target = $region121
    $region120: #{tpu_custom_call.1} parent=1 // pred_region
      %2901 = vsyncadd [#allocation5], 0
      %s2903 = sshll.u32 [#allocation20], 4
      %s2904 = int_to_ptr.vmem [resolvable:$true] %s2903
      %s2905 = sshll.u32 %s19, 4
      %s2906 = int_to_ptr.hbm [resolvable:$true] %s2905
      %2908 = dma.vmem_to_hbm [thread:$0]  %s2904, 32, %s2906, [#allocation5]
    $region121: #{tpu_custom_call.1} parent=1 // pred_fallthru
      _
    // Predicated region
    $region122: #{tpu_custom_call.1} parent=1 // pred_check
      _
    $region123: #{tpu_custom_call.1} parent=1 // pred_check_branch
      %2910 = sbr.rel (0) target = $region125
    $region124: #{tpu_custom_call.1} parent=1 // pred_region
      %2912 = dma.done [#allocation5], 32
    $region125: #{tpu_custom_call.1} parent=1 // pred_fallthru
      _
    %2913 = vsyncpa [#allocation4], 1
    %2914 = vsyncpa [#allocation7], 1
    %2915 = vsyncpa [#allocation10], 1
    %2916 = vsyncpa [#allocation13], 1
    %2917 = vsyncpa [#allocation16], 1
    %2918 = vsyncpa [#allocation19], 1
    %2919 = vsyncpa [#allocation5], 1

</llo_original>
